<compile_context>
chip_gen: v7x
topology: tpu7x:2x2x1
jax: 0.10.0
libtpu: 0.0.40
codegen_flags: <defaults>
</compile_context>

<pallas_src>
import functools

import jax
import jax.numpy as jnp
import numpy as np
from jax.experimental import pallas as pl
from jax.experimental.pallas import tpu as pltpu

_FC_PAD = 128  # lane-dense width of the classifier / final HBM store
_WEIGHT_ORDER = ("w1", "b1", "w2", "b2", "w3", "b3",
                 "wl1", "bl1", "wl2", "bl2", "wl3", "bl3")


# ---------------------------------------------------------------------------
# Fused kernel: the whole RGBDCNN forward for TB images, entirely in VMEM.
#
# Layout conventions (all batch-stacked, image index is the minor M factor):
#   x_ref   : (H*TB, W*C)       rows = pos*TB + b, pos = (h%4)*(H/4) + h//4
#   a1_scr  : (OH1*TB, OW1*OC1) rows = (r%2)*(OH1/2)*TB + (r//2)*TB + b
#   a2_scr  : (OH2*TB, OW2*OC2) rows = r*TB + b   (natural order)
#   a3      : (OH3*TB, OW3*OC3) rows = r*TB + b
# With these layouts every vertical conv tap is a contiguous slice.
# ---------------------------------------------------------------------------
def _rgbd_fused_kernel(x_ref, w1, b1, w2, b2, w3, b3,
                       wl1, bl1, wl2, bl2, wl3, bl3,
                       o_ref, a1_scr, a2_scr,
                       *, tb, h, oh1, oh2, oh3, kh1, kh2, kh3):
    half1 = oh1 // 2          # rows per parity class of conv1's output
    rpc = h // 4              # input rows per (row mod 4) residue class

    def mm(a, b):             # plain 2-D MXU dot, f32 accumulation
        return jnp.dot(a, b, preferred_element_type=jnp.float32)

    # ---- conv1 (5x5, stride 2) + tanh: even / odd output-row halves --------
    # Even output rows r=2q need input rows 4q+i, odd rows need 4q+2+i; in the
    # residue-class row layout both are contiguous (half1*TB)-row slices.
    for par in range(2):
        acc = None
        for i in range(kh1):                       # unrolled vertical taps
            j = i + 2 * par                        # input row offset of tap
            start = ((j % 4) * rpc + j // 4) * tb
            rows = x_ref[pl.ds(start, half1 * tb), :]
            term = mm(rows, w1[i])
            acc = term if acc is None else acc + term
        a1_scr[pl.ds(par * half1 * tb, half1 * tb), :] = jnp.tanh(acc + b1[...])

    # ---- conv2 (5x5, stride 2) + tanh --------------------------------------
    # conv1 rows i+2r live in parity class i%2 at within-class position i//2+r
    # -> each tap is again a contiguous (OH2*TB)-row slice of a1_scr.
    acc = None
    for i in range(kh2):
        start = ((i % 2) * half1 + i // 2) * tb
        rows = a1_scr[pl.ds(start, oh2 * tb), :]
        term = mm(rows, w2[i])
        acc = term if acc is None else acc + term
    a2_scr[...] = jnp.tanh(acc + b2[...])

    # ---- conv3 (3x3, stride 1) + tanh: taps are trivially contiguous -------
    acc = None
    for i in range(kh3):
        rows = a2_scr[pl.ds(i * tb, oh3 * tb), :]
        term = mm(rows, w3[i])
        acc = term if acc is None else acc + term
    a3 = jnp.tanh(acc + b3[...])                   # (OH3*TB, OW3*OC3)

    # ---- classifier (NCHW flatten folded into wl1 at pack time) ------------
    # fc1 = sum over the OH3 spatial rows of a (TB, K) @ (K, 128) dot (M=TB).
    acc = bl1[...]
    for r in range(oh3):
        acc = acc + mm(a3[r * tb:(r + 1) * tb, :], wl1[r])
    f = jnp.tanh(acc)
    # NOTE: ~5K tanh/image go through the single EUP slot; after the MXU fixes
    # this is the next unit to re-check on a bundle dump (see review).
    f = jnp.tanh(mm(f, wl2[...]) + bl2[...])
    f = jnp.tanh(mm(f, wl3[...]) + bl3[...])
    o_ref[...] = f                                 # lane-dense (TB, 128) store


# ---------------------------------------------------------------------------
# One-time weight packing (host-side numpy; nothing here runs per forward).
# ---------------------------------------------------------------------------
def _conv_out(n, k, s):
    return (n - k) // s + 1


def _pack_conv(w, b, stride, w_in):
    """w: (OC, Cin, KH, KW), b: (OC,) ->
       BigW: (KH, W_in*Cin, OW*OC)  with BigW[i, wi*Cin+c, ow*OC+o] = w[o,c,i,wi-ow*s]
       bias: (1, OW*OC)."""
    oc, cin, kh, kw = (int(d) for d in w.shape)
    ow = _conv_out(w_in, kw, stride)
    big = np.zeros((kh, w_in * cin, ow * oc), np.float32)
    for i in range(kh):
        for o_w in range(ow):
            for j in range(kw):
                wi = o_w * stride + j
                big[i, wi * cin:(wi + 1) * cin, o_w * oc:(o_w + 1) * oc] = w[:, :, i, j].T
    btile = np.tile(np.asarray(b, np.float32), ow).reshape(1, ow * oc)
    return big, btile, ow


def _pack_fc1(l1_w, l1_b, oh, ow, oc, n_pad=_FC_PAD):
    """Fold the NCHW flatten (index c*OH*OW + h*OW + w) into per-spatial-row
    blocks acting directly on the (r*TB+b, w*OC+c) activation layout."""
    n_out = l1_w.shape[0]
    wl1 = np.zeros((oh, ow * oc, n_pad), np.float32)
    for hh in range(oh):
        for ww in range(ow):
            for cc in range(oc):
                wl1[hh, ww * oc + cc, :n_out] = l1_w[:, cc * oh * ow + hh * ow + ww]
    bl1 = np.zeros((1, n_pad), np.float32)
    bl1[0, :n_out] = l1_b
    return wl1, bl1


def _pack_fc(w, b, n_pad=_FC_PAD):
    o, i = w.shape
    wp = np.zeros((n_pad, n_pad), np.float32)
    wp[:i, :o] = np.asarray(w, np.float32).T
    bp = np.zeros((1, n_pad), np.float32)
    bp[0, :o] = b
    return wp, bp


def pack_params(params, input_hw):
    p = {k: np.asarray(v, np.float32) for k, v in params.items()}
    h, w = input_hw
    kh1, kh2, kh3 = p["c1_w"].shape[2], p["c2_w"].shape[2], p["c3_w"].shape[2]

    w1, b1, ow1 = _pack_conv(p["c1_w"], p["c1_b"], 2, w)
    oh1 = _conv_out(h, kh1, 2)
    w2, b2, ow2 = _pack_conv(p["c2_w"], p["c2_b"], 2, ow1)
    oh2 = _conv_out(oh1, kh2, 2)
    w3, b3, ow3 = _pack_conv(p["c3_w"], p["c3_b"], 1, ow2)
    oh3 = _conv_out(oh2, kh3, 1)
    oc3 = p["c3_w"].shape[0]

    wl1, bl1 = _pack_fc1(p["l1_w"], p["l1_b"], oh3, ow3, oc3)
    wl2, bl2 = _pack_fc(p["l2_w"], p["l2_b"])
    wl3, bl3 = _pack_fc(p["l3_w"], p["l3_b"])

    # Preconditions of the pack-time row-permutation trick (hold for the
    # module's fixed architecture: 5/2, 5/2, 3/1 on 32x32 inputs).
    assert h % 4 == 0 and oh1 % 2 == 0
    assert (kh1 + 1) // 4 + oh1 // 2 <= h // 4
    assert (kh2 - 1) // 2 + oh2 <= oh1 // 2

    dims = dict(h=h, w=w, c=int(p["c1_w"].shape[1]),
                oh1=oh1, oh2=oh2, oh3=oh3, kh1=kh1, kh2=kh2, kh3=kh3,
                n1=w1.shape[2], n2=w2.shape[2], n3=w3.shape[2])
    packed = dict(w1=w1, b1=b1, w2=w2, b2=b2, w3=w3, b3=b3,
                  wl1=wl1, bl1=bl1, wl2=wl2, bl2=bl2, wl3=wl3, bl3=bl3)
    return {k: jnp.asarray(v) for k, v in packed.items()}, dims


# ---------------------------------------------------------------------------
# Forward factory (single pallas_call; grid over batch tiles, parallel so v7x
# can shard the batch-tile axis across its two TensorCores).
# ---------------------------------------------------------------------------
def _const_index_map(ndim):
    return lambda i: (0,) * ndim


def make_rgbd_forward(dims, *, dof, tb):
    h, c = dims["h"], dims["c"]
    wc = dims["w"] * c
    oh1, oh2, oh3 = dims["oh1"], dims["oh2"], dims["oh3"]
    n1, n2, n3 = dims["n1"], dims["n2"], dims["n3"]

    kernel = functools.partial(
        _rgbd_fused_kernel, tb=tb, h=h, oh1=oh1, oh2=oh2, oh3=oh3,
        kh1=dims["kh1"], kh2=dims["kh2"], kh3=dims["kh3"])

    # Per-image row permutation: sort input rows by (row mod 4, row div 4) so
    # every conv1 vertical-tap gather (even & odd output halves) is contiguous.
    rpc = h // 4
    row_perm = np.array([4 * (p % rpc) + p // rpc for p in range(h)], np.int32)

    @jax.jit
    def forward(rgbd, packed):
        B = rgbd.shape[0]
        assert B % tb == 0, f"batch {B} must be a multiple of the batch tile {tb}"
        g = B // tb

        # NCHW -> batch-stacked (H*TB, W*C) layout with the residue-class row
        # permutation folded in.  One tiny relayout; allow_input_fusion below
        # lets XLA fold it into the pallas call's input.
        x = jnp.transpose(rgbd, (0, 2, 3, 1)).reshape(B, h, wc).astype(jnp.float32)
        x = x[:, row_perm, :]
        x = x.reshape(g, tb, h, wc).transpose(0, 2, 1, 3).reshape(g, h * tb, wc)

        weights = [packed[k] for k in _WEIGHT_ORDER]
        in_specs = [pl.BlockSpec((None, h * tb, wc), lambda i: (i, 0, 0))]
        for arr in weights:
            # Constant index map -> DMA'd into VMEM once (~2 MiB total).
            in_specs.append(pl.BlockSpec(arr.shape, _const_index_map(arr.ndim)))

        # Advisory cost estimate (per-step useful work x number of steps).
        flops_step = tb * (dims["kh1"] * 2 * oh1 * wc * n1 +
                           dims["kh2"] * 2 * oh2 * n1 * n2 +
                           dims["kh3"] * 2 * oh3 * n2 * n3 +
                           oh3 * 2 * n3 * _FC_PAD +
                           2 * 2 * _FC_PAD * _FC_PAD)
        transc_step = tb * (oh1 * n1 + oh2 * n2 + oh3 * n3 + 3 * _FC_PAD)
        wbytes = sum(int(np.prod(a.shape)) * 4 for a in weights)
        cost = pl.CostEstimate(
            flops=int(g * flops_step),
            transcendentals=int(g * transc_step),
            bytes_accessed=int(wbytes + x.size * 4 + B * _FC_PAD * 4))

        out = pl.pallas_call(
            kernel,
            out_shape=jax.ShapeDtypeStruct((B, _FC_PAD), jnp.float32),
            grid=(g,),
            in_specs=in_specs,
            out_specs=pl.BlockSpec((tb, _FC_PAD), lambda i: (i, 0)),
            scratch_shapes=[
                pltpu.VMEM((oh1 * tb, n1), jnp.float32),   # stacked conv1 out
                pltpu.VMEM((oh2 * tb, n2), jnp.float32),   # stacked conv2 out
            ],
            compiler_params=pltpu.CompilerParams(
                dimension_semantics=("parallel",),          # v7x: 2 TCs share the grid
                # Explicit VMEM budget (valid on v5e/v6e/v7x): ~2 MiB weights x2
                # + (TB x 16 KB input) x2 + ~130 KB scratch << 32 MiB at TB=8.
                vmem_limit_bytes=32 * 1024 * 1024,
                allow_input_fusion=[True] + [False] * len(weights)),
            cost_estimate=cost,
        )(x, *weights)
        return out[:, :dof]

    return forward


# ---------------------------------------------------------------------------
# Pure-JAX reference (un-packed parameters, highest-precision f32 math).
# ---------------------------------------------------------------------------
def reference_forward(rgbd, params):
    prec = jax.lax.Precision.HIGHEST

    def conv(x, w, b, s):
        y = jax.lax.conv_general_dilated(
            x, w, (s, s), "VALID",
            dimension_numbers=("NCHW", "OIHW", "NCHW"), precision=prec)
        return jnp.tanh(y + b[None, :, None, None])

    B = rgbd.shape[0]
    out = conv(rgbd, params["c1_w"], params["c1_b"], 2)
    out = conv(out, params["c2_w"], params["c2_b"], 2)
    out = conv(out, params["c3_w"], params["c3_b"], 1)
    out = out.reshape(B, -1)
    out = jnp.tanh(jnp.dot(out, params["l1_w"].T, precision=prec) + params["l1_b"])
    out = jnp.tanh(jnp.dot(out, params["l2_w"].T, precision=prec) + params["l2_b"])
    out = jnp.tanh(jnp.dot(out, params["l3_w"].T, precision=prec) + params["l3_b"])
    return out


# ---------------------------------------------------------------------------
# Deterministic synthetic parameters (same shapes as the nn.Module;
# Linear layers: U(0, 0.1) weights / zero bias as in weights_init_uniform).
# ---------------------------------------------------------------------------
def init_params(key, dof, n_flat):
    ks = jax.random.split(key, 6)
    return {
        "c1_w": jax.random.uniform(ks[0], (16, 4, 5, 5), jnp.float32, -0.1, 0.1),
        "c1_b": jnp.zeros((16,), jnp.float32),
        "c2_w": jax.random.uniform(ks[1], (32, 16, 5, 5), jnp.float32, -0.05, 0.05),
        "c2_b": jnp.zeros((32,), jnp.float32),
        "c3_w": jax.random.uniform(ks[2], (64, 32, 3, 3), jnp.float32, -0.05, 0.05),
        "c3_b": jnp.zeros((64,), jnp.float32),
        "l1_w": jax.random.uniform(ks[3], (16, n_flat), jnp.float32, 0.0, 0.1),
        "l1_b": jnp.zeros((16,), jnp.float32),
        "l2_w": jax.random.uniform(ks[4], (8, 16), jnp.float32, 0.0, 0.1),
        "l2_b": jnp.zeros((8,), jnp.float32),
        "l3_w": jax.random.uniform(ks[5], (dof, 8), jnp.float32, 0.0, 0.1),
        "l3_b": jnp.zeros((dof,), jnp.float32),
    }


if __name__ == "__main__":
    # Shapes consistent with the module: input_shape=(4, 32, 32), dof=6.
    # batch=16 with a batch tile of 8 -> grid=(2,): batch-tiled, 8-row aligned
    # slices, and >=2 grid steps so both v7x TensorCores get work.
    batch, C, H, W, dof, tb = 16, 4, 32, 32, 6, 8

    hw3 = _conv_out(_conv_out(_conv_out(H, 5, 2), 5, 2), 3, 1)  # 32 -> 14 -> 5 -> 3
    n_flat = 64 * hw3 * hw3                                      # 576

    key = jax.random.PRNGKey(0)
    k_in, k_par = jax.random.split(key)
    rgbd = jax.random.normal(k_in, (batch, C, H, W), jnp.float32)
    params = init_params(k_par, dof, n_flat)

    packed, dims = pack_params(params, (H, W))        # one-time weight packing
    forward = make_rgbd_forward(dims, dof=dof, tb=tb)

    out = jax.block_until_ready(forward(rgbd, packed))
    ref = jax.block_until_ready(reference_forward(rgbd, params))

    assert out.shape == (batch, dof), out.shape
    np.testing.assert_allclose(np.asarray(out), np.asarray(ref),
                               rtol=1e-4, atol=2e-5)
    print("KERNEL_OK")
</pallas_src>

<mosaic_0001>
module attributes {stable_mosaic.version = 11 : i64} {
  func.func @_rgbd_fused_kernel(%arg0: i32, %arg1: memref<1x256x128xf32, #tpu.memory_space<vmem>>, %arg2: memref<5x128x224xf32, #tpu.memory_space<vmem>>, %arg3: memref<1x224xf32, #tpu.memory_space<vmem>>, %arg4: memref<5x224x160xf32, #tpu.memory_space<vmem>>, %arg5: memref<1x160xf32, #tpu.memory_space<vmem>>, %arg6: memref<3x160x192xf32, #tpu.memory_space<vmem>>, %arg7: memref<1x192xf32, #tpu.memory_space<vmem>>, %arg8: memref<3x192x128xf32, #tpu.memory_space<vmem>>, %arg9: memref<1x128xf32, #tpu.memory_space<vmem>>, %arg10: memref<128x128xf32, #tpu.memory_space<vmem>>, %arg11: memref<1x128xf32, #tpu.memory_space<vmem>>, %arg12: memref<128x128xf32, #tpu.memory_space<vmem>>, %arg13: memref<1x128xf32, #tpu.memory_space<vmem>>, %arg14: memref<8x128xf32, #tpu.memory_space<vmem>>, %arg15: memref<112x224xf32, #tpu.memory_space<vmem>>, %arg16: memref<40x160xf32, #tpu.memory_space<vmem>>) attributes {dimension_semantics = [#tpu.dimension_semantics<parallel>], iteration_bounds = array<i64: 2>, scalar_prefetch = 0 : i64, scratch_operands = 2 : i64, tpu.core_type = #tpu.core_type<tc>, window_params = [{transform_indices = @transform_0, window_bounds = array<i64: 1, 256, 128>}, {pipeline_mode = #tpu.pipeline_mode<synchronous>, transform_indices = @transform_1, window_bounds = array<i64: 5, 128, 224>}, {pipeline_mode = #tpu.pipeline_mode<synchronous>, transform_indices = @transform_2, window_bounds = array<i64: 1, 224>}, {pipeline_mode = #tpu.pipeline_mode<synchronous>, transform_indices = @transform_3, window_bounds = array<i64: 5, 224, 160>}, {pipeline_mode = #tpu.pipeline_mode<synchronous>, transform_indices = @transform_4, window_bounds = array<i64: 1, 160>}, {pipeline_mode = #tpu.pipeline_mode<synchronous>, transform_indices = @transform_5, window_bounds = array<i64: 3, 160, 192>}, {pipeline_mode = #tpu.pipeline_mode<synchronous>, transform_indices = @transform_6, window_bounds = array<i64: 1, 192>}, {pipeline_mode = #tpu.pipeline_mode<synchronous>, transform_indices = @transform_7, window_bounds = array<i64: 3, 192, 128>}, {pipeline_mode = #tpu.pipeline_mode<synchronous>, transform_indices = @transform_8, window_bounds = array<i64: 1, 128>}, {pipeline_mode = #tpu.pipeline_mode<synchronous>, transform_indices = @transform_9, window_bounds = array<i64: 128, 128>}, {pipeline_mode = #tpu.pipeline_mode<synchronous>, transform_indices = @transform_10, window_bounds = array<i64: 1, 128>}, {pipeline_mode = #tpu.pipeline_mode<synchronous>, transform_indices = @transform_11, window_bounds = array<i64: 128, 128>}, {pipeline_mode = #tpu.pipeline_mode<synchronous>, transform_indices = @transform_12, window_bounds = array<i64: 1, 128>}, {transform_indices = @transform_13, window_bounds = array<i64: 8, 128>}]} {
    %c0 = arith.constant 0 : index
    %c0_0 = arith.constant 0 : index
    %c0_1 = arith.constant 0 : index
    %0 = vector.load %arg1[%c0, %c0_0, %c0_1] : memref<1x256x128xf32, #tpu.memory_space<vmem>>, vector<1x56x128xf32>
    %1 = vector.shape_cast %0 : vector<1x56x128xf32> to vector<56x128xf32>
    %c0_2 = arith.constant 0 : index
    %c0_3 = arith.constant 0 : index
    %c0_4 = arith.constant 0 : index
    %2 = vector.load %arg2[%c0_2, %c0_3, %c0_4] : memref<5x128x224xf32, #tpu.memory_space<vmem>>, vector<1x128x224xf32>
    %3 = vector.shape_cast %2 : vector<1x128x224xf32> to vector<128x224xf32>
    %cst = arith.constant dense<0.000000e+00> : vector<56x224xf32>
    %4 = tpu.matmul %1, %3, %cst {dimension_numbers = #tpu.dot_dimension_numbers<[1], [0], [0], [1], [0, 0, 1, 1], [], []>} : vector<56x128xf32>, vector<128x224xf32>, vector<56x224xf32> -> vector<56x224xf32>
    %c0_5 = arith.constant 0 : index
    %c64 = arith.constant 64 : index
    %c0_6 = arith.constant 0 : index
    %5 = vector.load %arg1[%c0_5, %c64, %c0_6] : memref<1x256x128xf32, #tpu.memory_space<vmem>>, vector<1x56x128xf32>
    %6 = vector.shape_cast %5 : vector<1x56x128xf32> to vector<56x128xf32>
    %c1 = arith.constant 1 : index
    %c0_7 = arith.constant 0 : index
    %c0_8 = arith.constant 0 : index
    %7 = vector.load %arg2[%c1, %c0_7, %c0_8] : memref<5x128x224xf32, #tpu.memory_space<vmem>>, vector<1x128x224xf32>
    %8 = vector.shape_cast %7 : vector<1x128x224xf32> to vector<128x224xf32>
    %cst_9 = arith.constant dense<0.000000e+00> : vector<56x224xf32>
    %9 = tpu.matmul %6, %8, %cst_9 {dimension_numbers = #tpu.dot_dimension_numbers<[1], [0], [0], [1], [0, 0, 1, 1], [], []>} : vector<56x128xf32>, vector<128x224xf32>, vector<56x224xf32> -> vector<56x224xf32>
    %10 = arith.addf %4, %9 : vector<56x224xf32>
    %c0_10 = arith.constant 0 : index
    %c128 = arith.constant 128 : index
    %c0_11 = arith.constant 0 : index
    %11 = vector.load %arg1[%c0_10, %c128, %c0_11] : memref<1x256x128xf32, #tpu.memory_space<vmem>>, vector<1x56x128xf32>
    %12 = vector.shape_cast %11 : vector<1x56x128xf32> to vector<56x128xf32>
    %c2 = arith.constant 2 : index
    %c0_12 = arith.constant 0 : index
    %c0_13 = arith.constant 0 : index
    %13 = vector.load %arg2[%c2, %c0_12, %c0_13] : memref<5x128x224xf32, #tpu.memory_space<vmem>>, vector<1x128x224xf32>
    %14 = vector.shape_cast %13 : vector<1x128x224xf32> to vector<128x224xf32>
    %cst_14 = arith.constant dense<0.000000e+00> : vector<56x224xf32>
    %15 = tpu.matmul %12, %14, %cst_14 {dimension_numbers = #tpu.dot_dimension_numbers<[1], [0], [0], [1], [0, 0, 1, 1], [], []>} : vector<56x128xf32>, vector<128x224xf32>, vector<56x224xf32> -> vector<56x224xf32>
    %16 = arith.addf %10, %15 : vector<56x224xf32>
    %c0_15 = arith.constant 0 : index
    %c192 = arith.constant 192 : index
    %c0_16 = arith.constant 0 : index
    %17 = vector.load %arg1[%c0_15, %c192, %c0_16] : memref<1x256x128xf32, #tpu.memory_space<vmem>>, vector<1x56x128xf32>
    %18 = vector.shape_cast %17 : vector<1x56x128xf32> to vector<56x128xf32>
    %c3 = arith.constant 3 : index
    %c0_17 = arith.constant 0 : index
    %c0_18 = arith.constant 0 : index
    %19 = vector.load %arg2[%c3, %c0_17, %c0_18] : memref<5x128x224xf32, #tpu.memory_space<vmem>>, vector<1x128x224xf32>
    %20 = vector.shape_cast %19 : vector<1x128x224xf32> to vector<128x224xf32>
    %cst_19 = arith.constant dense<0.000000e+00> : vector<56x224xf32>
    %21 = tpu.matmul %18, %20, %cst_19 {dimension_numbers = #tpu.dot_dimension_numbers<[1], [0], [0], [1], [0, 0, 1, 1], [], []>} : vector<56x128xf32>, vector<128x224xf32>, vector<56x224xf32> -> vector<56x224xf32>
    %22 = arith.addf %16, %21 : vector<56x224xf32>
    %c0_20 = arith.constant 0 : index
    %c8 = arith.constant 8 : index
    %c0_21 = arith.constant 0 : index
    %23 = vector.load %arg1[%c0_20, %c8, %c0_21] : memref<1x256x128xf32, #tpu.memory_space<vmem>>, vector<1x56x128xf32>
    %24 = vector.shape_cast %23 : vector<1x56x128xf32> to vector<56x128xf32>
    %c4 = arith.constant 4 : index
    %c0_22 = arith.constant 0 : index
    %c0_23 = arith.constant 0 : index
    %25 = vector.load %arg2[%c4, %c0_22, %c0_23] : memref<5x128x224xf32, #tpu.memory_space<vmem>>, vector<1x128x224xf32>
    %26 = vector.shape_cast %25 : vector<1x128x224xf32> to vector<128x224xf32>
    %cst_24 = arith.constant dense<0.000000e+00> : vector<56x224xf32>
    %27 = tpu.matmul %24, %26, %cst_24 {dimension_numbers = #tpu.dot_dimension_numbers<[1], [0], [0], [1], [0, 0, 1, 1], [], []>} : vector<56x128xf32>, vector<128x224xf32>, vector<56x224xf32> -> vector<56x224xf32>
    %28 = arith.addf %22, %27 : vector<56x224xf32>
    %c0_25 = arith.constant 0 : index
    %c0_26 = arith.constant 0 : index
    %29 = vector.load %arg3[%c0_25, %c0_26] : memref<1x224xf32, #tpu.memory_space<vmem>>, vector<1x224xf32>
    %30 = vector.broadcast %29 : vector<1x224xf32> to vector<56x224xf32>
    %31 = arith.addf %28, %30 : vector<56x224xf32>
    %32 = math.tanh %31 : vector<56x224xf32>
    %c0_27 = arith.constant 0 : index
    %c0_28 = arith.constant 0 : index
    %33 = vector.load %arg15[%c0_27, %c0_28] : memref<112x224xf32, #tpu.memory_space<vmem>>, vector<56x224xf32>
    tpu.vector_store %arg15[%c0_27, %c0_28], %32 {strides = array<i32>} : memref<112x224xf32, #tpu.memory_space<vmem>>, vector<56x224xf32>,
    %c0_29 = arith.constant 0 : index
    %c128_30 = arith.constant 128 : index
    %c0_31 = arith.constant 0 : index
    %34 = vector.load %arg1[%c0_29, %c128_30, %c0_31] : memref<1x256x128xf32, #tpu.memory_space<vmem>>, vector<1x56x128xf32>
    %35 = vector.shape_cast %34 : vector<1x56x128xf32> to vector<56x128xf32>
    %c0_32 = arith.constant 0 : index
    %c0_33 = arith.constant 0 : index
    %c0_34 = arith.constant 0 : index
    %36 = vector.load %arg2[%c0_32, %c0_33, %c0_34] : memref<5x128x224xf32, #tpu.memory_space<vmem>>, vector<1x128x224xf32>
    %37 = vector.shape_cast %36 : vector<1x128x224xf32> to vector<128x224xf32>
    %cst_35 = arith.constant dense<0.000000e+00> : vector<56x224xf32>
    %38 = tpu.matmul %35, %37, %cst_35 {dimension_numbers = #tpu.dot_dimension_numbers<[1], [0], [0], [1], [0, 0, 1, 1], [], []>} : vector<56x128xf32>, vector<128x224xf32>, vector<56x224xf32> -> vector<56x224xf32>
    %c0_36 = arith.constant 0 : index
    %c192_37 = arith.constant 192 : index
    %c0_38 = arith.constant 0 : index
    %39 = vector.load %arg1[%c0_36, %c192_37, %c0_38] : memref<1x256x128xf32, #tpu.memory_space<vmem>>, vector<1x56x128xf32>
    %40 = vector.shape_cast %39 : vector<1x56x128xf32> to vector<56x128xf32>
    %c1_39 = arith.constant 1 : index
    %c0_40 = arith.constant 0 : index
    %c0_41 = arith.constant 0 : index
    %41 = vector.load %arg2[%c1_39, %c0_40, %c0_41] : memref<5x128x224xf32, #tpu.memory_space<vmem>>, vector<1x128x224xf32>
    %42 = vector.shape_cast %41 : vector<1x128x224xf32> to vector<128x224xf32>
    %cst_42 = arith.constant dense<0.000000e+00> : vector<56x224xf32>
    %43 = tpu.matmul %40, %42, %cst_42 {dimension_numbers = #tpu.dot_dimension_numbers<[1], [0], [0], [1], [0, 0, 1, 1], [], []>} : vector<56x128xf32>, vector<128x224xf32>, vector<56x224xf32> -> vector<56x224xf32>
    %44 = arith.addf %38, %43 : vector<56x224xf32>
    %c0_43 = arith.constant 0 : index
    %c8_44 = arith.constant 8 : index
    %c0_45 = arith.constant 0 : index
    %45 = vector.load %arg1[%c0_43, %c8_44, %c0_45] : memref<1x256x128xf32, #tpu.memory_space<vmem>>, vector<1x56x128xf32>
    %46 = vector.shape_cast %45 : vector<1x56x128xf32> to vector<56x128xf32>
    %c2_46 = arith.constant 2 : index
    %c0_47 = arith.constant 0 : index
    %c0_48 = arith.constant 0 : index
    %47 = vector.load %arg2[%c2_46, %c0_47, %c0_48] : memref<5x128x224xf32, #tpu.memory_space<vmem>>, vector<1x128x224xf32>
    %48 = vector.shape_cast %47 : vector<1x128x224xf32> to vector<128x224xf32>
    %cst_49 = arith.constant dense<0.000000e+00> : vector<56x224xf32>
    %49 = tpu.matmul %46, %48, %cst_49 {dimension_numbers = #tpu.dot_dimension_numbers<[1], [0], [0], [1], [0, 0, 1, 1], [], []>} : vector<56x128xf32>, vector<128x224xf32>, vector<56x224xf32> -> vector<56x224xf32>
    %50 = arith.addf %44, %49 : vector<56x224xf32>
    %c0_50 = arith.constant 0 : index
    %c72 = arith.constant 72 : index
    %c0_51 = arith.constant 0 : index
    %51 = vector.load %arg1[%c0_50, %c72, %c0_51] : memref<1x256x128xf32, #tpu.memory_space<vmem>>, vector<1x56x128xf32>
    %52 = vector.shape_cast %51 : vector<1x56x128xf32> to vector<56x128xf32>
    %c3_52 = arith.constant 3 : index
    %c0_53 = arith.constant 0 : index
    %c0_54 = arith.constant 0 : index
    %53 = vector.load %arg2[%c3_52, %c0_53, %c0_54] : memref<5x128x224xf32, #tpu.memory_space<vmem>>, vector<1x128x224xf32>
    %54 = vector.shape_cast %53 : vector<1x128x224xf32> to vector<128x224xf32>
    %cst_55 = arith.constant dense<0.000000e+00> : vector<56x224xf32>
    %55 = tpu.matmul %52, %54, %cst_55 {dimension_numbers = #tpu.dot_dimension_numbers<[1], [0], [0], [1], [0, 0, 1, 1], [], []>} : vector<56x128xf32>, vector<128x224xf32>, vector<56x224xf32> -> vector<56x224xf32>
    %56 = arith.addf %50, %55 : vector<56x224xf32>
    %c0_56 = arith.constant 0 : index
    %c136 = arith.constant 136 : index
    %c0_57 = arith.constant 0 : index
    %57 = vector.load %arg1[%c0_56, %c136, %c0_57] : memref<1x256x128xf32, #tpu.memory_space<vmem>>, vector<1x56x128xf32>
    %58 = vector.shape_cast %57 : vector<1x56x128xf32> to vector<56x128xf32>
    %c4_58 = arith.constant 4 : index
    %c0_59 = arith.constant 0 : index
    %c0_60 = arith.constant 0 : index
    %59 = vector.load %arg2[%c4_58, %c0_59, %c0_60] : memref<5x128x224xf32, #tpu.memory_space<vmem>>, vector<1x128x224xf32>
    %60 = vector.shape_cast %59 : vector<1x128x224xf32> to vector<128x224xf32>
    %cst_61 = arith.constant dense<0.000000e+00> : vector<56x224xf32>
    %61 = tpu.matmul %58, %60, %cst_61 {dimension_numbers = #tpu.dot_dimension_numbers<[1], [0], [0], [1], [0, 0, 1, 1], [], []>} : vector<56x128xf32>, vector<128x224xf32>, vector<56x224xf32> -> vector<56x224xf32>
    %62 = arith.addf %56, %61 : vector<56x224xf32>
    %c0_62 = arith.constant 0 : index
    %c0_63 = arith.constant 0 : index
    %63 = vector.load %arg3[%c0_62, %c0_63] : memref<1x224xf32, #tpu.memory_space<vmem>>, vector<1x224xf32>
    %64 = vector.broadcast %63 : vector<1x224xf32> to vector<56x224xf32>
    %65 = arith.addf %62, %64 : vector<56x224xf32>
    %66 = math.tanh %65 : vector<56x224xf32>
    %c56 = arith.constant 56 : index
    %c0_64 = arith.constant 0 : index
    %67 = vector.load %arg15[%c56, %c0_64] : memref<112x224xf32, #tpu.memory_space<vmem>>, vector<56x224xf32>
    tpu.vector_store %arg15[%c56, %c0_64], %66 {strides = array<i32>} : memref<112x224xf32, #tpu.memory_space<vmem>>, vector<56x224xf32>,
    %c0_65 = arith.constant 0 : index
    %c0_66 = arith.constant 0 : index
    %68 = vector.load %arg15[%c0_65, %c0_66] : memref<112x224xf32, #tpu.memory_space<vmem>>, vector<40x224xf32>
    %c0_67 = arith.constant 0 : index
    %c0_68 = arith.constant 0 : index
    %c0_69 = arith.constant 0 : index
    %69 = vector.load %arg4[%c0_67, %c0_68, %c0_69] : memref<5x224x160xf32, #tpu.memory_space<vmem>>, vector<1x224x160xf32>
    %70 = vector.shape_cast %69 : vector<1x224x160xf32> to vector<224x160xf32>
    %cst_70 = arith.constant dense<0.000000e+00> : vector<40x160xf32>
    %71 = tpu.matmul %68, %70, %cst_70 {dimension_numbers = #tpu.dot_dimension_numbers<[1], [0], [0], [1], [0, 0, 1, 1], [], []>} : vector<40x224xf32>, vector<224x160xf32>, vector<40x160xf32> -> vector<40x160xf32>
    %c56_71 = arith.constant 56 : index
    %c0_72 = arith.constant 0 : index
    %72 = vector.load %arg15[%c56_71, %c0_72] : memref<112x224xf32, #tpu.memory_space<vmem>>, vector<40x224xf32>
    %c1_73 = arith.constant 1 : index
    %c0_74 = arith.constant 0 : index
    %c0_75 = arith.constant 0 : index
    %73 = vector.load %arg4[%c1_73, %c0_74, %c0_75] : memref<5x224x160xf32, #tpu.memory_space<vmem>>, vector<1x224x160xf32>
    %74 = vector.shape_cast %73 : vector<1x224x160xf32> to vector<224x160xf32>
    %cst_76 = arith.constant dense<0.000000e+00> : vector<40x160xf32>
    %75 = tpu.matmul %72, %74, %cst_76 {dimension_numbers = #tpu.dot_dimension_numbers<[1], [0], [0], [1], [0, 0, 1, 1], [], []>} : vector<40x224xf32>, vector<224x160xf32>, vector<40x160xf32> -> vector<40x160xf32>
    %76 = arith.addf %71, %75 : vector<40x160xf32>
    %c8_77 = arith.constant 8 : index
    %c0_78 = arith.constant 0 : index
    %77 = vector.load %arg15[%c8_77, %c0_78] : memref<112x224xf32, #tpu.memory_space<vmem>>, vector<40x224xf32>
    %c2_79 = arith.constant 2 : index
    %c0_80 = arith.constant 0 : index
    %c0_81 = arith.constant 0 : index
    %78 = vector.load %arg4[%c2_79, %c0_80, %c0_81] : memref<5x224x160xf32, #tpu.memory_space<vmem>>, vector<1x224x160xf32>
    %79 = vector.shape_cast %78 : vector<1x224x160xf32> to vector<224x160xf32>
    %cst_82 = arith.constant dense<0.000000e+00> : vector<40x160xf32>
    %80 = tpu.matmul %77, %79, %cst_82 {dimension_numbers = #tpu.dot_dimension_numbers<[1], [0], [0], [1], [0, 0, 1, 1], [], []>} : vector<40x224xf32>, vector<224x160xf32>, vector<40x160xf32> -> vector<40x160xf32>
    %81 = arith.addf %76, %80 : vector<40x160xf32>
    %c64_83 = arith.constant 64 : index
    %c0_84 = arith.constant 0 : index
    %82 = vector.load %arg15[%c64_83, %c0_84] : memref<112x224xf32, #tpu.memory_space<vmem>>, vector<40x224xf32>
    %c3_85 = arith.constant 3 : index
    %c0_86 = arith.constant 0 : index
    %c0_87 = arith.constant 0 : index
    %83 = vector.load %arg4[%c3_85, %c0_86, %c0_87] : memref<5x224x160xf32, #tpu.memory_space<vmem>>, vector<1x224x160xf32>
    %84 = vector.shape_cast %83 : vector<1x224x160xf32> to vector<224x160xf32>
    %cst_88 = arith.constant dense<0.000000e+00> : vector<40x160xf32>
    %85 = tpu.matmul %82, %84, %cst_88 {dimension_numbers = #tpu.dot_dimension_numbers<[1], [0], [0], [1], [0, 0, 1, 1], [], []>} : vector<40x224xf32>, vector<224x160xf32>, vector<40x160xf32> -> vector<40x160xf32>
    %86 = arith.addf %81, %85 : vector<40x160xf32>
    %c16 = arith.constant 16 : index
    %c0_89 = arith.constant 0 : index
    %87 = vector.load %arg15[%c16, %c0_89] : memref<112x224xf32, #tpu.memory_space<vmem>>, vector<40x224xf32>
    %c4_90 = arith.constant 4 : index
    %c0_91 = arith.constant 0 : index
    %c0_92 = arith.constant 0 : index
    %88 = vector.load %arg4[%c4_90, %c0_91, %c0_92] : memref<5x224x160xf32, #tpu.memory_space<vmem>>, vector<1x224x160xf32>
    %89 = vector.shape_cast %88 : vector<1x224x160xf32> to vector<224x160xf32>
    %cst_93 = arith.constant dense<0.000000e+00> : vector<40x160xf32>
    %90 = tpu.matmul %87, %89, %cst_93 {dimension_numbers = #tpu.dot_dimension_numbers<[1], [0], [0], [1], [0, 0, 1, 1], [], []>} : vector<40x224xf32>, vector<224x160xf32>, vector<40x160xf32> -> vector<40x160xf32>
    %91 = arith.addf %86, %90 : vector<40x160xf32>
    %c0_94 = arith.constant 0 : index
    %c0_95 = arith.constant 0 : index
    %92 = vector.load %arg5[%c0_94, %c0_95] : memref<1x160xf32, #tpu.memory_space<vmem>>, vector<1x160xf32>
    %93 = vector.broadcast %92 : vector<1x160xf32> to vector<40x160xf32>
    %94 = arith.addf %91, %93 : vector<40x160xf32>
    %95 = math.tanh %94 : vector<40x160xf32>
    %c0_96 = arith.constant 0 : index
    %c0_97 = arith.constant 0 : index
    %96 = vector.load %arg16[%c0_96, %c0_97] : memref<40x160xf32, #tpu.memory_space<vmem>>, vector<40x160xf32>
    tpu.vector_store %arg16[%c0_96, %c0_97], %95 {strides = array<i32>} : memref<40x160xf32, #tpu.memory_space<vmem>>, vector<40x160xf32>,
    %c0_98 = arith.constant 0 : index
    %c0_99 = arith.constant 0 : index
    %97 = vector.load %arg16[%c0_98, %c0_99] : memref<40x160xf32, #tpu.memory_space<vmem>>, vector<24x160xf32>
    %c0_100 = arith.constant 0 : index
    %c0_101 = arith.constant 0 : index
    %c0_102 = arith.constant 0 : index
    %98 = vector.load %arg6[%c0_100, %c0_101, %c0_102] : memref<3x160x192xf32, #tpu.memory_space<vmem>>, vector<1x160x192xf32>
    %99 = vector.shape_cast %98 : vector<1x160x192xf32> to vector<160x192xf32>
    %cst_103 = arith.constant dense<0.000000e+00> : vector<24x192xf32>
    %100 = tpu.matmul %97, %99, %cst_103 {dimension_numbers = #tpu.dot_dimension_numbers<[1], [0], [0], [1], [0, 0, 1, 1], [], []>} : vector<24x160xf32>, vector<160x192xf32>, vector<24x192xf32> -> vector<24x192xf32>
    %c8_104 = arith.constant 8 : index
    %c0_105 = arith.constant 0 : index
    %101 = vector.load %arg16[%c8_104, %c0_105] : memref<40x160xf32, #tpu.memory_space<vmem>>, vector<24x160xf32>
    %c1_106 = arith.constant 1 : index
    %c0_107 = arith.constant 0 : index
    %c0_108 = arith.constant 0 : index
    %102 = vector.load %arg6[%c1_106, %c0_107, %c0_108] : memref<3x160x192xf32, #tpu.memory_space<vmem>>, vector<1x160x192xf32>
    %103 = vector.shape_cast %102 : vector<1x160x192xf32> to vector<160x192xf32>
    %cst_109 = arith.constant dense<0.000000e+00> : vector<24x192xf32>
    %104 = tpu.matmul %101, %103, %cst_109 {dimension_numbers = #tpu.dot_dimension_numbers<[1], [0], [0], [1], [0, 0, 1, 1], [], []>} : vector<24x160xf32>, vector<160x192xf32>, vector<24x192xf32> -> vector<24x192xf32>
    %105 = arith.addf %100, %104 : vector<24x192xf32>
    %c16_110 = arith.constant 16 : index
    %c0_111 = arith.constant 0 : index
    %106 = vector.load %arg16[%c16_110, %c0_111] : memref<40x160xf32, #tpu.memory_space<vmem>>, vector<24x160xf32>
    %c2_112 = arith.constant 2 : index
    %c0_113 = arith.constant 0 : index
    %c0_114 = arith.constant 0 : index
    %107 = vector.load %arg6[%c2_112, %c0_113, %c0_114] : memref<3x160x192xf32, #tpu.memory_space<vmem>>, vector<1x160x192xf32>
    %108 = vector.shape_cast %107 : vector<1x160x192xf32> to vector<160x192xf32>
    %cst_115 = arith.constant dense<0.000000e+00> : vector<24x192xf32>
    %109 = tpu.matmul %106, %108, %cst_115 {dimension_numbers = #tpu.dot_dimension_numbers<[1], [0], [0], [1], [0, 0, 1, 1], [], []>} : vector<24x160xf32>, vector<160x192xf32>, vector<24x192xf32> -> vector<24x192xf32>
    %110 = arith.addf %105, %109 : vector<24x192xf32>
    %c0_116 = arith.constant 0 : index
    %c0_117 = arith.constant 0 : index
    %111 = vector.load %arg7[%c0_116, %c0_117] : memref<1x192xf32, #tpu.memory_space<vmem>>, vector<1x192xf32>
    %112 = vector.broadcast %111 : vector<1x192xf32> to vector<24x192xf32>
    %113 = arith.addf %110, %112 : vector<24x192xf32>
    %114 = math.tanh %113 : vector<24x192xf32>
    %c0_118 = arith.constant 0 : index
    %c0_119 = arith.constant 0 : index
    %115 = vector.load %arg9[%c0_118, %c0_119] : memref<1x128xf32, #tpu.memory_space<vmem>>, vector<1x128xf32>
    %116 = vector.extract_strided_slice %114 {offsets = [0, 0], sizes = [8, 192], strides = [1, 1]} : vector<24x192xf32> to vector<8x192xf32>
    %c0_120 = arith.constant 0 : index
    %c0_121 = arith.constant 0 : index
    %c0_122 = arith.constant 0 : index
    %117 = vector.load %arg8[%c0_120, %c0_121, %c0_122] : memref<3x192x128xf32, #tpu.memory_space<vmem>>, vector<1x192x128xf32>
    %118 = vector.shape_cast %117 : vector<1x192x128xf32> to vector<192x128xf32>
    %cst_123 = arith.constant dense<0.000000e+00> : vector<8x128xf32>
    %119 = tpu.matmul %116, %118, %cst_123 {dimension_numbers = #tpu.dot_dimension_numbers<[1], [0], [0], [1], [0, 0, 1, 1], [], []>} : vector<8x192xf32>, vector<192x128xf32>, vector<8x128xf32> -> vector<8x128xf32>
    %120 = vector.broadcast %115 : vector<1x128xf32> to vector<8x128xf32>
    %121 = arith.addf %120, %119 : vector<8x128xf32>
    %122 = vector.extract_strided_slice %114 {offsets = [8, 0], sizes = [8, 192], strides = [1, 1]} : vector<24x192xf32> to vector<8x192xf32>
    %c1_124 = arith.constant 1 : index
    %c0_125 = arith.constant 0 : index
    %c0_126 = arith.constant 0 : index
    %123 = vector.load %arg8[%c1_124, %c0_125, %c0_126] : memref<3x192x128xf32, #tpu.memory_space<vmem>>, vector<1x192x128xf32>
    %124 = vector.shape_cast %123 : vector<1x192x128xf32> to vector<192x128xf32>
    %cst_127 = arith.constant dense<0.000000e+00> : vector<8x128xf32>
    %125 = tpu.matmul %122, %124, %cst_127 {dimension_numbers = #tpu.dot_dimension_numbers<[1], [0], [0], [1], [0, 0, 1, 1], [], []>} : vector<8x192xf32>, vector<192x128xf32>, vector<8x128xf32> -> vector<8x128xf32>
    %126 = arith.addf %121, %125 : vector<8x128xf32>
    %127 = vector.extract_strided_slice %114 {offsets = [16, 0], sizes = [8, 192], strides = [1, 1]} : vector<24x192xf32> to vector<8x192xf32>
    %c2_128 = arith.constant 2 : index
    %c0_129 = arith.constant 0 : index
    %c0_130 = arith.constant 0 : index
    %128 = vector.load %arg8[%c2_128, %c0_129, %c0_130] : memref<3x192x128xf32, #tpu.memory_space<vmem>>, vector<1x192x128xf32>
    %129 = vector.shape_cast %128 : vector<1x192x128xf32> to vector<192x128xf32>
    %cst_131 = arith.constant dense<0.000000e+00> : vector<8x128xf32>
    %130 = tpu.matmul %127, %129, %cst_131 {dimension_numbers = #tpu.dot_dimension_numbers<[1], [0], [0], [1], [0, 0, 1, 1], [], []>} : vector<8x192xf32>, vector<192x128xf32>, vector<8x128xf32> -> vector<8x128xf32>
    %131 = arith.addf %126, %130 : vector<8x128xf32>
    %132 = math.tanh %131 : vector<8x128xf32>
    %c0_132 = arith.constant 0 : index
    %c0_133 = arith.constant 0 : index
    %133 = vector.load %arg10[%c0_132, %c0_133] : memref<128x128xf32, #tpu.memory_space<vmem>>, vector<128x128xf32>
    %cst_134 = arith.constant dense<0.000000e+00> : vector<8x128xf32>
    %134 = tpu.matmul %132, %133, %cst_134 {dimension_numbers = #tpu.dot_dimension_numbers<[1], [0], [0], [1], [0, 0, 1, 1], [], []>} : vector<8x128xf32>, vector<128x128xf32>, vector<8x128xf32> -> vector<8x128xf32>
    %c0_135 = arith.constant 0 : index
    %c0_136 = arith.constant 0 : index
    %135 = vector.load %arg11[%c0_135, %c0_136] : memref<1x128xf32, #tpu.memory_space<vmem>>, vector<1x128xf32>
    %136 = vector.broadcast %135 : vector<1x128xf32> to vector<8x128xf32>
    %137 = arith.addf %134, %136 : vector<8x128xf32>
    %138 = math.tanh %137 : vector<8x128xf32>
    %c0_137 = arith.constant 0 : index
    %c0_138 = arith.constant 0 : index
    %139 = vector.load %arg12[%c0_137, %c0_138] : memref<128x128xf32, #tpu.memory_space<vmem>>, vector<128x128xf32>
    %cst_139 = arith.constant dense<0.000000e+00> : vector<8x128xf32>
    %140 = tpu.matmul %138, %139, %cst_139 {dimension_numbers = #tpu.dot_dimension_numbers<[1], [0], [0], [1], [0, 0, 1, 1], [], []>} : vector<8x128xf32>, vector<128x128xf32>, vector<8x128xf32> -> vector<8x128xf32>
    %c0_140 = arith.constant 0 : index
    %c0_141 = arith.constant 0 : index
    %141 = vector.load %arg13[%c0_140, %c0_141] : memref<1x128xf32, #tpu.memory_space<vmem>>, vector<1x128xf32>
    %142 = vector.broadcast %141 : vector<1x128xf32> to vector<8x128xf32>
    %143 = arith.addf %140, %142 : vector<8x128xf32>
    %144 = math.tanh %143 : vector<8x128xf32>
    %c0_142 = arith.constant 0 : index
    %c0_143 = arith.constant 0 : index
    %145 = vector.load %arg14[%c0_142, %c0_143] : memref<8x128xf32, #tpu.memory_space<vmem>>, vector<8x128xf32>
    tpu.vector_store %arg14[%c0_142, %c0_143], %144 {strides = array<i32>} : memref<8x128xf32, #tpu.memory_space<vmem>>, vector<8x128xf32>,
    return
  }
  func.func @transform_0(%arg0: i32) -> (i32, i32, i32) {
    %c0_i32 = arith.constant 0 : i32
    %c0_i32_0 = arith.constant 0 : i32
    %c0_i32_1 = arith.constant 0 : i32
    return %arg0, %c0_i32, %c0_i32_0 : i32, i32, i32
  }
  func.func @transform_1(%arg0: i32) -> (i32, i32, i32) {
    %c0_i32 = arith.constant 0 : i32
    %c0_i32_0 = arith.constant 0 : i32
    %c0_i32_1 = arith.constant 0 : i32
    %c0_i32_2 = arith.constant 0 : i32
    return %c0_i32, %c0_i32_0, %c0_i32_1 : i32, i32, i32
  }
  func.func @transform_2(%arg0: i32) -> (i32, i32) {
    %c0_i32 = arith.constant 0 : i32
    %c0_i32_0 = arith.constant 0 : i32
    %c0_i32_1 = arith.constant 0 : i32
    return %c0_i32, %c0_i32_0 : i32, i32
  }
  func.func @transform_3(%arg0: i32) -> (i32, i32, i32) {
    %c0_i32 = arith.constant 0 : i32
    %c0_i32_0 = arith.constant 0 : i32
    %c0_i32_1 = arith.constant 0 : i32
    %c0_i32_2 = arith.constant 0 : i32
    return %c0_i32, %c0_i32_0, %c0_i32_1 : i32, i32, i32
  }
  func.func @transform_4(%arg0: i32) -> (i32, i32) {
    %c0_i32 = arith.constant 0 : i32
    %c0_i32_0 = arith.constant 0 : i32
    %c0_i32_1 = arith.constant 0 : i32
    return %c0_i32, %c0_i32_0 : i32, i32
  }
  func.func @transform_5(%arg0: i32) -> (i32, i32, i32) {
    %c0_i32 = arith.constant 0 : i32
    %c0_i32_0 = arith.constant 0 : i32
    %c0_i32_1 = arith.constant 0 : i32
    %c0_i32_2 = arith.constant 0 : i32
    return %c0_i32, %c0_i32_0, %c0_i32_1 : i32, i32, i32
  }
  func.func @transform_6(%arg0: i32) -> (i32, i32) {
    %c0_i32 = arith.constant 0 : i32
    %c0_i32_0 = arith.constant 0 : i32
    %c0_i32_1 = arith.constant 0 : i32
    return %c0_i32, %c0_i32_0 : i32, i32
  }
  func.func @transform_7(%arg0: i32) -> (i32, i32, i32) {
    %c0_i32 = arith.constant 0 : i32
    %c0_i32_0 = arith.constant 0 : i32
    %c0_i32_1 = arith.constant 0 : i32
    %c0_i32_2 = arith.constant 0 : i32
    return %c0_i32, %c0_i32_0, %c0_i32_1 : i32, i32, i32
  }
  func.func @transform_8(%arg0: i32) -> (i32, i32) {
    %c0_i32 = arith.constant 0 : i32
    %c0_i32_0 = arith.constant 0 : i32
    %c0_i32_1 = arith.constant 0 : i32
    return %c0_i32, %c0_i32_0 : i32, i32
  }
  func.func @transform_9(%arg0: i32) -> (i32, i32) {
    %c0_i32 = arith.constant 0 : i32
    %c0_i32_0 = arith.constant 0 : i32
    %c0_i32_1 = arith.constant 0 : i32
    return %c0_i32, %c0_i32_0 : i32, i32
  }
  func.func @transform_10(%arg0: i32) -> (i32, i32) {
    %c0_i32 = arith.constant 0 : i32
    %c0_i32_0 = arith.constant 0 : i32
    %c0_i32_1 = arith.constant 0 : i32
    return %c0_i32, %c0_i32_0 : i32, i32
  }
  func.func @transform_11(%arg0: i32) -> (i32, i32) {
    %c0_i32 = arith.constant 0 : i32
    %c0_i32_0 = arith.constant 0 : i32
    %c0_i32_1 = arith.constant 0 : i32
    return %c0_i32, %c0_i32_0 : i32, i32
  }
  func.func @transform_12(%arg0: i32) -> (i32, i32) {
    %c0_i32 = arith.constant 0 : i32
    %c0_i32_0 = arith.constant 0 : i32
    %c0_i32_1 = arith.constant 0 : i32
    return %c0_i32, %c0_i32_0 : i32, i32
  }
  func.func @transform_13(%arg0: i32) -> (i32, i32) {
    %c0_i32 = arith.constant 0 : i32
    %c0_i32_0 = arith.constant 0 : i32
    return %arg0, %c0_i32 : i32, i32
  }
}

</mosaic_0001>

<llo_original>
// kernel: forward.2
$region0: #{forward.2}
  #allocation0 [shape = 'u32[]', space=smem, size = 0x4, offset = 0x4, fixed_abs, tag = 'smem constant byte address 0x4 - core index']
  #allocation1 [shape = 'u32[144,128]{1,0:T(1,128)}', space=vmem, size = 0x12000, scoped, tag = 'internal scratch']
  #allocation2 [shape = 'f32[112,224]{1,0:T(8,128)}', space=vmem, size = 0x1c000, scoped, tag = 'scratch operand']
  #allocation3 [shape = 'f32[40,160]{1,0:T(8,128)}', space=vmem, size = 0xa000, scoped, tag = 'scratch operand']
  %s0 = inlined_call_operand.vmem [shape: f32[5,128,224], index: 0, kind: input, shape index: {}]
  %s1 = inlined_call_operand.vmem [shape: f32[1,224], index: 1, kind: input, shape index: {}]
  %s2 = inlined_call_operand.vmem [shape: f32[5,224,160], index: 2, kind: input, shape index: {}]
  %s3 = inlined_call_operand.vmem [shape: f32[1,160], index: 3, kind: input, shape index: {}]
  %s4 = inlined_call_operand.vmem [shape: f32[3,160,192], index: 4, kind: input, shape index: {}]
  %s5 = inlined_call_operand.vmem [shape: f32[1,192], index: 5, kind: input, shape index: {}]
  %s6 = inlined_call_operand.vmem [shape: f32[3,192,128], index: 6, kind: input, shape index: {}]
  %s7 = inlined_call_operand.vmem [shape: f32[1,128], index: 7, kind: input, shape index: {}]
  %s8 = inlined_call_operand.vmem [shape: f32[128,128], index: 8, kind: input, shape index: {}]
  %s9 = inlined_call_operand.vmem [shape: f32[1,128], index: 9, kind: input, shape index: {}]
  %s10 = inlined_call_operand.vmem [shape: f32[128,128], index: 10, kind: input, shape index: {}]
  %s11 = inlined_call_operand.vmem [shape: f32[1,128], index: 11, kind: input, shape index: {}]
  %s12 = inlined_call_operand.vmem [shape: f32[2,32,8,128], index: 12, kind: input, shape index: {}]
  %s13 = inlined_call_operand.vmem [shape: f32[16,128], index: 13, kind: output, shape index: {}]
  %s14 = sld [smem:[#allocation0]]
  $region85: #{forward.2} parent=0
    _
  %s16 = ssub.s32 1, %s14
  %s17 = scalar_select 0, %s16, %s14
  loop: start=0, step=1, limit=4
  $region2: #{forward.2} parent=0 // loop_pre_header
    _
  $region3: #{forward.2} parent=0 // loop_header
    %s19 = sphi 0, %s23
    %p20 = scmp.ge.s32.totalorder %s19, 4
    %s29 = sphi 0, %s31
    %s32 = sphi 0, %s29
    %s33 = sphi 0, %s32
    %s49 = sphi 0, %s33
    %s53 = sphi 0, %s53
    %s55 = sphi 0, %s53
    %s56 = sphi 0, %s55
    %s70 = sphi 0, %s56
    %s74 = sphi 0, %s74
    %s76 = sphi 0, %s74
    %s77 = sphi 0, %s76
    %s91 = sphi 0, %s77
    %s95 = sphi 0, %s95
    %s97 = sphi 0, %s95
    %s98 = sphi 0, %s97
    %s112 = sphi 0, %s98
    %s116 = sphi 0, %s116
    %s118 = sphi 0, %s116
    %s119 = sphi 0, %s118
    %s133 = sphi 0, %s119
    %s137 = sphi 0, %s137
    %s139 = sphi 0, %s137
    %s140 = sphi 0, %s139
    %s154 = sphi 0, %s140
    %s158 = sphi 0, %s158
    %s160 = sphi 0, %s158
    %s161 = sphi 0, %s160
    %s175 = sphi 0, %s161
    %s179 = sphi 0, %s179
    %s181 = sphi 0, %s179
    %s182 = sphi 0, %s181
    %s196 = sphi 0, %s182
    %s200 = sphi 0, %s200
    %s202 = sphi 0, %s200
    %s203 = sphi 0, %s202
    %s217 = sphi 0, %s203
    %s221 = sphi 0, %s221
    %s223 = sphi 0, %s221
    %s224 = sphi 0, %s223
    %s238 = sphi 0, %s224
    %s242 = sphi 0, %s242
    %s244 = sphi 0, %s242
    %s245 = sphi 0, %s244
    %s259 = sphi 0, %s245
    %s263 = sphi 0, %s263
    %s265 = sphi 0, %s263
    %s266 = sphi 0, %s265
    %s280 = sphi 0, %s266
    %s284 = sphi 0, %s284
    %s286 = sphi 0, %s284
    %s287 = sphi 0, %s286
    %s301 = sphi 0, %s287
    %s307 = sphi 0, %s309
    %s310 = sphi 0, %s307
    %s311 = sphi 0, %s310
    %s327 = sphi 0, %s311
  $region4: #{forward.2} parent=0 // loop_header_branch
    %22 = sbr.rel (%p20) target = $region8
  $region5: #{forward.2} parent=0 // loop_body
    %s24 = ssub.s32 %s19, 1
    %s25 = ssub.s32 %s19, 2
    %s26 = sadd.s32 %s19, 1
    %s27 = ssub.s32 %s19, %s26
    %p28 = scmp.eq.s32.totalorder %s27, 0
    %s30 = sadd.s32 %s29, 1
    %s31 = scalar_select %p28, %s29, %s30
    %p34 = pneg %p28
    %p35 = scmp.eq.s32.totalorder %s19, 1
    %p36 = por %p34, %p35
    %p37 = scmp.ne.s32.totalorder %s29, %s32
    %p38 = scmp.eq.s32.totalorder %s19, 0
    %p39 = por %p37, %p38
    %p40 = scmp.ne.s32.totalorder %s29, %s32
    %p41 = scmp.eq.s32.totalorder %s24, 1
    %p42 = por %p40, %p41
    %p43 = scmp.ne.s32.totalorder %s32, %s33
    %p44 = scmp.eq.s32.totalorder %s24, 0
    %p45 = por %p43, %p44
    %p46 = scmp.ne.s32.totalorder %s32, %s33
    %p47 = scmp.eq.s32.totalorder %s25, 1
    %p48 = por %p46, %p47
    %p50 = scmp.ne.s32.totalorder %s33, %s49
    %p51 = scmp.eq.s32.totalorder %s25, 0
    %p52 = por %p50, %p51
    %s54 = sadd.s32 %s53, 1
    %p57 = scmp.eq.s32.totalorder %s19, 1
    %p58 = scmp.ne.s32.totalorder %s53, %s55
    %p59 = scmp.eq.s32.totalorder %s19, 0
    %p60 = por %p58, %p59
    %p61 = scmp.ne.s32.totalorder %s53, %s55
    %p62 = scmp.eq.s32.totalorder %s24, 1
    %p63 = por %p61, %p62
    %p64 = scmp.ne.s32.totalorder %s55, %s56
    %p65 = scmp.eq.s32.totalorder %s24, 0
    %p66 = por %p64, %p65
    %p67 = scmp.ne.s32.totalorder %s55, %s56
    %p68 = scmp.eq.s32.totalorder %s25, 1
    %p69 = por %p67, %p68
    %p71 = scmp.ne.s32.totalorder %s56, %s70
    %p72 = scmp.eq.s32.totalorder %s25, 0
    %p73 = por %p71, %p72
    %s75 = sadd.s32 %s74, 1
    %p78 = scmp.eq.s32.totalorder %s19, 1
    %p79 = scmp.ne.s32.totalorder %s74, %s76
    %p80 = scmp.eq.s32.totalorder %s19, 0
    %p81 = por %p79, %p80
    %p82 = scmp.ne.s32.totalorder %s74, %s76
    %p83 = scmp.eq.s32.totalorder %s24, 1
    %p84 = por %p82, %p83
    %p85 = scmp.ne.s32.totalorder %s76, %s77
    %p86 = scmp.eq.s32.totalorder %s24, 0
    %p87 = por %p85, %p86
    %p88 = scmp.ne.s32.totalorder %s76, %s77
    %p89 = scmp.eq.s32.totalorder %s25, 1
    %p90 = por %p88, %p89
    %p92 = scmp.ne.s32.totalorder %s77, %s91
    %p93 = scmp.eq.s32.totalorder %s25, 0
    %p94 = por %p92, %p93
    %s96 = sadd.s32 %s95, 1
    %p99 = scmp.eq.s32.totalorder %s19, 1
    %p100 = scmp.ne.s32.totalorder %s95, %s97
    %p101 = scmp.eq.s32.totalorder %s19, 0
    %p102 = por %p100, %p101
    %p103 = scmp.ne.s32.totalorder %s95, %s97
    %p104 = scmp.eq.s32.totalorder %s24, 1
    %p105 = por %p103, %p104
    %p106 = scmp.ne.s32.totalorder %s97, %s98
    %p107 = scmp.eq.s32.totalorder %s24, 0
    %p108 = por %p106, %p107
    %p109 = scmp.ne.s32.totalorder %s97, %s98
    %p110 = scmp.eq.s32.totalorder %s25, 1
    %p111 = por %p109, %p110
    %p113 = scmp.ne.s32.totalorder %s98, %s112
    %p114 = scmp.eq.s32.totalorder %s25, 0
    %p115 = por %p113, %p114
    %s117 = sadd.s32 %s116, 1
    %p120 = scmp.eq.s32.totalorder %s19, 1
    %p121 = scmp.ne.s32.totalorder %s116, %s118
    %p122 = scmp.eq.s32.totalorder %s19, 0
    %p123 = por %p121, %p122
    %p124 = scmp.ne.s32.totalorder %s116, %s118
    %p125 = scmp.eq.s32.totalorder %s24, 1
    %p126 = por %p124, %p125
    %p127 = scmp.ne.s32.totalorder %s118, %s119
    %p128 = scmp.eq.s32.totalorder %s24, 0
    %p129 = por %p127, %p128
    %p130 = scmp.ne.s32.totalorder %s118, %s119
    %p131 = scmp.eq.s32.totalorder %s25, 1
    %p132 = por %p130, %p131
    %p134 = scmp.ne.s32.totalorder %s119, %s133
    %p135 = scmp.eq.s32.totalorder %s25, 0
    %p136 = por %p134, %p135
    %s138 = sadd.s32 %s137, 1
    %p141 = scmp.eq.s32.totalorder %s19, 1
    %p142 = scmp.ne.s32.totalorder %s137, %s139
    %p143 = scmp.eq.s32.totalorder %s19, 0
    %p144 = por %p142, %p143
    %p145 = scmp.ne.s32.totalorder %s137, %s139
    %p146 = scmp.eq.s32.totalorder %s24, 1
    %p147 = por %p145, %p146
    %p148 = scmp.ne.s32.totalorder %s139, %s140
    %p149 = scmp.eq.s32.totalorder %s24, 0
    %p150 = por %p148, %p149
    %p151 = scmp.ne.s32.totalorder %s139, %s140
    %p152 = scmp.eq.s32.totalorder %s25, 1
    %p153 = por %p151, %p152
    %p155 = scmp.ne.s32.totalorder %s140, %s154
    %p156 = scmp.eq.s32.totalorder %s25, 0
    %p157 = por %p155, %p156
    %s159 = sadd.s32 %s158, 1
    %p162 = scmp.eq.s32.totalorder %s19, 1
    %p163 = scmp.ne.s32.totalorder %s158, %s160
    %p164 = scmp.eq.s32.totalorder %s19, 0
    %p165 = por %p163, %p164
    %p166 = scmp.ne.s32.totalorder %s158, %s160
    %p167 = scmp.eq.s32.totalorder %s24, 1
    %p168 = por %p166, %p167
    %p169 = scmp.ne.s32.totalorder %s160, %s161
    %p170 = scmp.eq.s32.totalorder %s24, 0
    %p171 = por %p169, %p170
    %p172 = scmp.ne.s32.totalorder %s160, %s161
    %p173 = scmp.eq.s32.totalorder %s25, 1
    %p174 = por %p172, %p173
    %p176 = scmp.ne.s32.totalorder %s161, %s175
    %p177 = scmp.eq.s32.totalorder %s25, 0
    %p178 = por %p176, %p177
    %s180 = sadd.s32 %s179, 1
    %p183 = scmp.eq.s32.totalorder %s19, 1
    %p184 = scmp.ne.s32.totalorder %s179, %s181
    %p185 = scmp.eq.s32.totalorder %s19, 0
    %p186 = por %p184, %p185
    %p187 = scmp.ne.s32.totalorder %s179, %s181
    %p188 = scmp.eq.s32.totalorder %s24, 1
    %p189 = por %p187, %p188
    %p190 = scmp.ne.s32.totalorder %s181, %s182
    %p191 = scmp.eq.s32.totalorder %s24, 0
    %p192 = por %p190, %p191
    %p193 = scmp.ne.s32.totalorder %s181, %s182
    %p194 = scmp.eq.s32.totalorder %s25, 1
    %p195 = por %p193, %p194
    %p197 = scmp.ne.s32.totalorder %s182, %s196
    %p198 = scmp.eq.s32.totalorder %s25, 0
    %p199 = por %p197, %p198
    %s201 = sadd.s32 %s200, 1
    %p204 = scmp.eq.s32.totalorder %s19, 1
    %p205 = scmp.ne.s32.totalorder %s200, %s202
    %p206 = scmp.eq.s32.totalorder %s19, 0
    %p207 = por %p205, %p206
    %p208 = scmp.ne.s32.totalorder %s200, %s202
    %p209 = scmp.eq.s32.totalorder %s24, 1
    %p210 = por %p208, %p209
    %p211 = scmp.ne.s32.totalorder %s202, %s203
    %p212 = scmp.eq.s32.totalorder %s24, 0
    %p213 = por %p211, %p212
    %p214 = scmp.ne.s32.totalorder %s202, %s203
    %p215 = scmp.eq.s32.totalorder %s25, 1
    %p216 = por %p214, %p215
    %p218 = scmp.ne.s32.totalorder %s203, %s217
    %p219 = scmp.eq.s32.totalorder %s25, 0
    %p220 = por %p218, %p219
    %s222 = sadd.s32 %s221, 1
    %p225 = scmp.eq.s32.totalorder %s19, 1
    %p226 = scmp.ne.s32.totalorder %s221, %s223
    %p227 = scmp.eq.s32.totalorder %s19, 0
    %p228 = por %p226, %p227
    %p229 = scmp.ne.s32.totalorder %s221, %s223
    %p230 = scmp.eq.s32.totalorder %s24, 1
    %p231 = por %p229, %p230
    %p232 = scmp.ne.s32.totalorder %s223, %s224
    %p233 = scmp.eq.s32.totalorder %s24, 0
    %p234 = por %p232, %p233
    %p235 = scmp.ne.s32.totalorder %s223, %s224
    %p236 = scmp.eq.s32.totalorder %s25, 1
    %p237 = por %p235, %p236
    %p239 = scmp.ne.s32.totalorder %s224, %s238
    %p240 = scmp.eq.s32.totalorder %s25, 0
    %p241 = por %p239, %p240
    %s243 = sadd.s32 %s242, 1
    %p246 = scmp.eq.s32.totalorder %s19, 1
    %p247 = scmp.ne.s32.totalorder %s242, %s244
    %p248 = scmp.eq.s32.totalorder %s19, 0
    %p249 = por %p247, %p248
    %p250 = scmp.ne.s32.totalorder %s242, %s244
    %p251 = scmp.eq.s32.totalorder %s24, 1
    %p252 = por %p250, %p251
    %p253 = scmp.ne.s32.totalorder %s244, %s245
    %p254 = scmp.eq.s32.totalorder %s24, 0
    %p255 = por %p253, %p254
    %p256 = scmp.ne.s32.totalorder %s244, %s245
    %p257 = scmp.eq.s32.totalorder %s25, 1
    %p258 = por %p256, %p257
    %p260 = scmp.ne.s32.totalorder %s245, %s259
    %p261 = scmp.eq.s32.totalorder %s25, 0
    %p262 = por %p260, %p261
    %s264 = sadd.s32 %s263, 1
    %p267 = scmp.eq.s32.totalorder %s19, 1
    %p268 = scmp.ne.s32.totalorder %s263, %s265
    %p269 = scmp.eq.s32.totalorder %s19, 0
    %p270 = por %p268, %p269
    %p271 = scmp.ne.s32.totalorder %s263, %s265
    %p272 = scmp.eq.s32.totalorder %s24, 1
    %p273 = por %p271, %p272
    %p274 = scmp.ne.s32.totalorder %s265, %s266
    %p275 = scmp.eq.s32.totalorder %s24, 0
    %p276 = por %p274, %p275
    %p277 = scmp.ne.s32.totalorder %s265, %s266
    %p278 = scmp.eq.s32.totalorder %s25, 1
    %p279 = por %p277, %p278
    %p281 = scmp.ne.s32.totalorder %s266, %s280
    %p282 = scmp.eq.s32.totalorder %s25, 0
    %p283 = por %p281, %p282
    %s285 = sadd.s32 %s284, 1
    %p288 = scmp.eq.s32.totalorder %s19, 1
    %p289 = scmp.ne.s32.totalorder %s284, %s286
    %p290 = scmp.eq.s32.totalorder %s19, 0
    %p291 = por %p289, %p290
    %p292 = scmp.ne.s32.totalorder %s284, %s286
    %p293 = scmp.eq.s32.totalorder %s24, 1
    %p294 = por %p292, %p293
    %p295 = scmp.ne.s32.totalorder %s286, %s287
    %p296 = scmp.eq.s32.totalorder %s24, 0
    %p297 = por %p295, %p296
    %p298 = scmp.ne.s32.totalorder %s286, %s287
    %p299 = scmp.eq.s32.totalorder %s25, 1
    %p300 = por %p298, %p299
    %p302 = scmp.ne.s32.totalorder %s287, %s301
    %p303 = scmp.eq.s32.totalorder %s25, 0
    %p304 = por %p302, %p303
    %s305 = ssub.s32 %s19, %s26
    %p306 = scmp.eq.s32.totalorder %s305, 0
    %s308 = sadd.s32 %s307, 1
    %s309 = scalar_select %p306, %s307, %s308
    %p312 = pneg %p306
    %p313 = scmp.eq.s32.totalorder %s19, 1
    %p314 = por %p312, %p313
    %p315 = scmp.ne.s32.totalorder %s307, %s310
    %p316 = scmp.eq.s32.totalorder %s19, 0
    %p317 = por %p315, %p316
    %p318 = scmp.ne.s32.totalorder %s307, %s310
    %p319 = scmp.eq.s32.totalorder %s24, 1
    %p320 = por %p318, %p319
    %p321 = scmp.ne.s32.totalorder %s310, %s311
    %p322 = scmp.eq.s32.totalorder %s24, 0
    %p323 = por %p321, %p322
    %p324 = scmp.ne.s32.totalorder %s310, %s311
    %p325 = scmp.eq.s32.totalorder %s25, 1
    %p326 = por %p324, %p325
    %p328 = scmp.ne.s32.totalorder %s311, %s327
    %p329 = scmp.eq.s32.totalorder %s25, 0
    %p330 = por %p328, %p329
    %p331 = scmp.le.s32.totalorder 1, %s19
    %p332 = scmp.lt.s32.totalorder %s19, 3
    %p333 = pnand %p331, %p332
    %p334 = pneg %p333
    // Predicated region
    $region9: #{forward.2} parent=5 // pred_check
      _
    $region10: #{forward.2} parent=5 // pred_check_branch
      %336 = sbr.rel (%p333) target = $region12
    $region11: #{forward.2} parent=5 // pred_region
      %s337 = ssub.s32 %s19, 1
      // Predicated region
      $region13: #{forward.2} parent=11 // pred_check
        %p338 = pneg %p66
      $region14: #{forward.2} parent=11 // pred_check_branch
        %340 = sbr.rel (%p338) target = $region16
      $region15: #{forward.2} parent=11 // pred_region
        _
      $region16: #{forward.2} parent=11 // pred_fallthru
        _
      // Predicated region
      $region17: #{forward.2} parent=11 // pred_check
        %p341 = pneg %p87
      $region18: #{forward.2} parent=11 // pred_check_branch
        %343 = sbr.rel (%p341) target = $region20
      $region19: #{forward.2} parent=11 // pred_region
        _
      $region20: #{forward.2} parent=11 // pred_fallthru
        _
      // Predicated region
      $region21: #{forward.2} parent=11 // pred_check
        %p344 = pneg %p108
      $region22: #{forward.2} parent=11 // pred_check_branch
        %346 = sbr.rel (%p344) target = $region24
      $region23: #{forward.2} parent=11 // pred_region
        _
      $region24: #{forward.2} parent=11 // pred_fallthru
        _
      // Predicated region
      $region25: #{forward.2} parent=11 // pred_check
        %p347 = pneg %p129
      $region26: #{forward.2} parent=11 // pred_check_branch
        %349 = sbr.rel (%p347) target = $region28
      $region27: #{forward.2} parent=11 // pred_region
        _
      $region28: #{forward.2} parent=11 // pred_fallthru
        _
      // Predicated region
      $region29: #{forward.2} parent=11 // pred_check
        %p350 = pneg %p150
      $region30: #{forward.2} parent=11 // pred_check_branch
        %352 = sbr.rel (%p350) target = $region32
      $region31: #{forward.2} parent=11 // pred_region
        _
      $region32: #{forward.2} parent=11 // pred_fallthru
        _
      // Predicated region
      $region33: #{forward.2} parent=11 // pred_check
        %p353 = pneg %p171
      $region34: #{forward.2} parent=11 // pred_check_branch
        %355 = sbr.rel (%p353) target = $region36
      $region35: #{forward.2} parent=11 // pred_region
        _
      $region36: #{forward.2} parent=11 // pred_fallthru
        _
      // Predicated region
      $region37: #{forward.2} parent=11 // pred_check
        %p356 = pneg %p192
      $region38: #{forward.2} parent=11 // pred_check_branch
        %358 = sbr.rel (%p356) target = $region40
      $region39: #{forward.2} parent=11 // pred_region
        _
      $region40: #{forward.2} parent=11 // pred_fallthru
        _
      // Predicated region
      $region41: #{forward.2} parent=11 // pred_check
        %p359 = pneg %p213
      $region42: #{forward.2} parent=11 // pred_check_branch
        %361 = sbr.rel (%p359) target = $region44
      $region43: #{forward.2} parent=11 // pred_region
        _
      $region44: #{forward.2} parent=11 // pred_fallthru
        _
      // Predicated region
      $region45: #{forward.2} parent=11 // pred_check
        %p362 = pneg %p234
      $region46: #{forward.2} parent=11 // pred_check_branch
        %364 = sbr.rel (%p362) target = $region48
      $region47: #{forward.2} parent=11 // pred_region
        _
      $region48: #{forward.2} parent=11 // pred_fallthru
        _
      // Predicated region
      $region49: #{forward.2} parent=11 // pred_check
        %p365 = pneg %p255
      $region50: #{forward.2} parent=11 // pred_check_branch
        %367 = sbr.rel (%p365) target = $region52
      $region51: #{forward.2} parent=11 // pred_region
        _
      $region52: #{forward.2} parent=11 // pred_fallthru
        _
      // Predicated region
      $region53: #{forward.2} parent=11 // pred_check
        %p368 = pneg %p276
      $region54: #{forward.2} parent=11 // pred_check_branch
        %370 = sbr.rel (%p368) target = $region56
      $region55: #{forward.2} parent=11 // pred_region
        _
      $region56: #{forward.2} parent=11 // pred_fallthru
        _
      // Predicated region
      $region57: #{forward.2} parent=11 // pred_check
        %p371 = pneg %p297
      $region58: #{forward.2} parent=11 // pred_check_branch
        %373 = sbr.rel (%p371) target = $region60
      $region59: #{forward.2} parent=11 // pred_region
        _
      $region60: #{forward.2} parent=11 // pred_fallthru
        _
    $region12: #{forward.2} parent=5 // pred_fallthru
      _
    %p374 = scmp.lt.s32.totalorder %s19, 2
    // Predicated region
    $region61: #{forward.2} parent=5 // pred_check
      %p375 = pneg %p374
    $region62: #{forward.2} parent=5 // pred_check_branch
      %377 = sbr.rel (%p375) target = $region64
    $region63: #{forward.2} parent=5 // pred_region
      // Predicated region
      $region65: #{forward.2} parent=63 // pred_check
        %p378 = pneg %p39
      $region66: #{forward.2} parent=63 // pred_check_branch
        %380 = sbr.rel (%p378) target = $region68
      $region67: #{forward.2} parent=63 // pred_region
        %p381 = scmp.lt.s32.totalorder %s19, 1
        %s382 = scalar_select %p381, %s19, 1
        %s383 = smul.addr %s382, 32
        %s384 = smul.addr %s383, 8
        %s385 = scalar_lea.vmem %s12, %s384
      $region68: #{forward.2} parent=63 // pred_fallthru
        _
    $region64: #{forward.2} parent=5 // pred_fallthru
      _
    %p386 = scmp.le.s32.totalorder 1, %s19
    %p387 = scmp.lt.s32.totalorder %s19, 3
    %p388 = pnand %p386, %p387
    %p389 = pneg %p388
    // Predicated region
    $region69: #{forward.2} parent=5 // pred_check
      _
    $region70: #{forward.2} parent=5 // pred_check_branch
      %391 = sbr.rel (%p388) target = $region72
    $region71: #{forward.2} parent=5 // pred_region
      #allocation4 [shape = 'u8[131072]{0}', space=vmem, size = 0x20000, dematerialized = true, scoped, tag = 'FusionAdapter Buffer %fusion.1 = f32[2,256,128]{2,1,0:T(8,128)} fusion(%param_12.1), kind=kLoop, calls=%fused_computation.2.clone, metadata={op_name="jit(forward)/reshape" stack_frame_id=9}']
      %s392 = ssub.s32 %s19, 1
      %p393 = scmp.lt.s32.totalorder %s24, 1
      %s394 = scalar_select %p393, %s24, 1
      %s395 = smul.addr %s394, 32
      %s396 = smul.addr %s395, 8
      %s397 = scalar_lea.vmem %s12, %s396
      %p398 = pneg %p45
      %p399 = pneg %p42
      %p400 = pneg %p66
      %p401 = pneg %p63
      %p402 = pneg %p87
      %p403 = pneg %p84
      %p404 = pneg %p108
      %p405 = pneg %p105
      %p406 = pneg %p129
      %p407 = pneg %p126
      %p408 = pneg %p150
      %p409 = pneg %p147
      %p410 = pneg %p171
      %p411 = pneg %p168
      %p412 = pneg %p192
      %p413 = pneg %p189
      %p414 = pneg %p213
      %p415 = pneg %p210
      %p416 = pneg %p234
      %p417 = pneg %p231
      %p418 = pneg %p255
      %p419 = pneg %p252
      %p420 = pneg %p276
      %p421 = pneg %p273
      %p422 = pneg %p297
      %p423 = pneg %p294
      %p424 = pneg %p323
      %p425 = pneg %p320
      %p426 = scmp.lt.s32.totalorder %s24, 1
      %s427 = scalar_select %p426, %s24, 1
      %s428 = smul.addr %s427, 8
      %s429 = scalar_lea.vmem %s13, %s428
      %p430 = scmp.lt.s32.totalorder %s24, 1
      %s431 = scalar_select %p430, %s24, 1
      %s432 = smul.addr %s431, 32
      %s433 = smul.addr %s432, 8
      %s434 = scalar_lea.vmem %s12, %s433
      %p435 = scmp.lt.s32.totalorder %s24, 1
      %s436 = scalar_select %p435, %s24, 1
      %s437 = smul.addr %s436, 8
      %s438 = scalar_lea.vmem %s13, %s437
      %v439 = vld [vmem:[%s434] sm:$0xff]
      %441 = vst [vmem:[#allocation4] sm:$0xff] %v439
      %s442 = scalar_lea.vmem %s434, 8
      %v443 = vld [vmem:[%s442] sm:$0xff]
      %s444 = scalar_lea.vmem [#allocation4], 8
      %446 = vst [vmem:[%s444] sm:$0xff] %v443
      %s447 = scalar_lea.vmem %s434, 16
      %v448 = vld [vmem:[%s447] sm:$0xff]
      %s449 = scalar_lea.vmem [#allocation4], 16
      %451 = vst [vmem:[%s449] sm:$0xff] %v448
      %s452 = scalar_lea.vmem %s434, 24
      %v453 = vld [vmem:[%s452] sm:$0xff]
      %s454 = scalar_lea.vmem [#allocation4], 24
      %456 = vst [vmem:[%s454] sm:$0xff] %v453
      %s457 = scalar_lea.vmem %s434, 32
      %v458 = vld [vmem:[%s457] sm:$0xff]
      %s459 = scalar_lea.vmem [#allocation4], 32
      %461 = vst [vmem:[%s459] sm:$0xff] %v458
      %s462 = scalar_lea.vmem %s434, 40
      %v463 = vld [vmem:[%s462] sm:$0xff]
      %s464 = scalar_lea.vmem [#allocation4], 40
      %466 = vst [vmem:[%s464] sm:$0xff] %v463
      %s467 = scalar_lea.vmem %s434, 48
      %v468 = vld [vmem:[%s467] sm:$0xff]
      %s469 = scalar_lea.vmem [#allocation4], 48
      %471 = vst [vmem:[%s469] sm:$0xff] %v468
      %s472 = scalar_lea.vmem %s434, 56
      %v473 = vld [vmem:[%s472] sm:$0xff]
      %s474 = scalar_lea.vmem [#allocation4], 56
      %476 = vst [vmem:[%s474] sm:$0xff] %v473
      %s477 = scalar_lea.vmem %s434, 64
      %v478 = vld [vmem:[%s477] sm:$0xff]
      %s479 = scalar_lea.vmem [#allocation4], 64
      %481 = vst [vmem:[%s479] sm:$0xff] %v478
      %s482 = scalar_lea.vmem %s434, 72
      %v483 = vld [vmem:[%s482] sm:$0xff]
      %s484 = scalar_lea.vmem [#allocation4], 72
      %486 = vst [vmem:[%s484] sm:$0xff] %v483
      %s487 = scalar_lea.vmem %s434, 80
      %v488 = vld [vmem:[%s487] sm:$0xff]
      %s489 = scalar_lea.vmem [#allocation4], 80
      %491 = vst [vmem:[%s489] sm:$0xff] %v488
      %s492 = scalar_lea.vmem %s434, 88
      %v493 = vld [vmem:[%s492] sm:$0xff]
      %s494 = scalar_lea.vmem [#allocation4], 88
      %496 = vst [vmem:[%s494] sm:$0xff] %v493
      %s497 = scalar_lea.vmem %s434, 96
      %v498 = vld [vmem:[%s497] sm:$0xff]
      %s499 = scalar_lea.vmem [#allocation4], 96
      %501 = vst [vmem:[%s499] sm:$0xff] %v498
      %s502 = scalar_lea.vmem %s434, 104
      %v503 = vld [vmem:[%s502] sm:$0xff]
      %s504 = scalar_lea.vmem [#allocation4], 104
      %506 = vst [vmem:[%s504] sm:$0xff] %v503
      %s507 = scalar_lea.vmem %s434, 112
      %v508 = vld [vmem:[%s507] sm:$0xff]
      %s509 = scalar_lea.vmem [#allocation4], 112
      %511 = vst [vmem:[%s509] sm:$0xff] %v508
      %s512 = scalar_lea.vmem %s434, 120
      %v513 = vld [vmem:[%s512] sm:$0xff]
      %s514 = scalar_lea.vmem [#allocation4], 120
      %516 = vst [vmem:[%s514] sm:$0xff] %v513
      %s517 = scalar_lea.vmem %s434, 128
      %v518 = vld [vmem:[%s517] sm:$0xff]
      %s519 = scalar_lea.vmem [#allocation4], 128
      %521 = vst [vmem:[%s519] sm:$0xff] %v518
      %s522 = scalar_lea.vmem %s434, 136
      %v523 = vld [vmem:[%s522] sm:$0xff]
      %s524 = scalar_lea.vmem [#allocation4], 136
      %526 = vst [vmem:[%s524] sm:$0xff] %v523
      %s527 = scalar_lea.vmem %s434, 144
      %v528 = vld [vmem:[%s527] sm:$0xff]
      %s529 = scalar_lea.vmem [#allocation4], 144
      %531 = vst [vmem:[%s529] sm:$0xff] %v528
      %s532 = scalar_lea.vmem %s434, 152
      %v533 = vld [vmem:[%s532] sm:$0xff]
      %s534 = scalar_lea.vmem [#allocation4], 152
      %536 = vst [vmem:[%s534] sm:$0xff] %v533
      %s537 = scalar_lea.vmem %s434, 160
      %v538 = vld [vmem:[%s537] sm:$0xff]
      %s539 = scalar_lea.vmem [#allocation4], 160
      %541 = vst [vmem:[%s539] sm:$0xff] %v538
      %s542 = scalar_lea.vmem %s434, 168
      %v543 = vld [vmem:[%s542] sm:$0xff]
      %s544 = scalar_lea.vmem [#allocation4], 168
      %546 = vst [vmem:[%s544] sm:$0xff] %v543
      %s547 = scalar_lea.vmem %s434, 176
      %v548 = vld [vmem:[%s547] sm:$0xff]
      %s549 = scalar_lea.vmem [#allocation4], 176
      %551 = vst [vmem:[%s549] sm:$0xff] %v548
      %s552 = scalar_lea.vmem %s434, 184
      %v553 = vld [vmem:[%s552] sm:$0xff]
      %s554 = scalar_lea.vmem [#allocation4], 184
      %556 = vst [vmem:[%s554] sm:$0xff] %v553
      %s557 = scalar_lea.vmem %s434, 192
      %v558 = vld [vmem:[%s557] sm:$0xff]
      %s559 = scalar_lea.vmem [#allocation4], 192
      %561 = vst [vmem:[%s559] sm:$0xff] %v558
      %s562 = scalar_lea.vmem %s434, 200
      %v563 = vld [vmem:[%s562] sm:$0xff]
      %s564 = scalar_lea.vmem [#allocation4], 200
      %566 = vst [vmem:[%s564] sm:$0xff] %v563
      %s567 = scalar_lea.vmem %s434, 208
      %v568 = vld [vmem:[%s567] sm:$0xff]
      %s569 = scalar_lea.vmem [#allocation4], 208
      %571 = vst [vmem:[%s569] sm:$0xff] %v568
      %s572 = scalar_lea.vmem %s434, 216
      %v573 = vld [vmem:[%s572] sm:$0xff]
      %s574 = scalar_lea.vmem [#allocation4], 216
      %576 = vst [vmem:[%s574] sm:$0xff] %v573
      %s577 = scalar_lea.vmem %s434, 224
      %v578 = vld [vmem:[%s577] sm:$0xff]
      %s579 = scalar_lea.vmem [#allocation4], 224
      %581 = vst [vmem:[%s579] sm:$0xff] %v578
      %s582 = scalar_lea.vmem %s434, 232
      %v583 = vld [vmem:[%s582] sm:$0xff]
      %s584 = scalar_lea.vmem [#allocation4], 232
      %586 = vst [vmem:[%s584] sm:$0xff] %v583
      %s587 = scalar_lea.vmem %s434, 240
      %v588 = vld [vmem:[%s587] sm:$0xff]
      %s589 = scalar_lea.vmem [#allocation4], 240
      %591 = vst [vmem:[%s589] sm:$0xff] %v588
      %s592 = scalar_lea.vmem %s434, 248
      %v593 = vld [vmem:[%s592] sm:$0xff]
      %s594 = scalar_lea.vmem [#allocation4], 248
      %596 = vst [vmem:[%s594] sm:$0xff] %v593
      %v597 = vld [vmem:[#allocation4] sm:$0xff]
      %v598 = vld [vmem:[#allocation4 + $0x8] sm:$0xff]
      %v599 = vld [vmem:[#allocation4 + $0x10] sm:$0xff]
      %v600 = vld [vmem:[#allocation4 + $0x18] sm:$0xff]
      %v601 = vld [vmem:[#allocation4 + $0x20] sm:$0xff]
      %v602 = vld [vmem:[#allocation4 + $0x28] sm:$0xff]
      %v603 = vld [vmem:[#allocation4 + $0x30] sm:$0xff]
      %v604 = vld [vmem:[%s0] sm:$0xff]
      %v605 = vld [vmem:[%s0 + $0x8] sm:$0xff]
      %v606 = vld [vmem:[%s0 + $0x10] sm:$0xff]
      %v607 = vld [vmem:[%s0 + $0x18] sm:$0xff]
      %v608 = vld [vmem:[%s0 + $0x20] sm:$0xff]
      %v609 = vld [vmem:[%s0 + $0x28] sm:$0xff]
      %v610 = vld [vmem:[%s0 + $0x30] sm:$0xff]
      %v611 = vld [vmem:[%s0 + $0x38] sm:$0xff]
      %v612 = vld [vmem:[%s0 + $0x40] sm:$0xff]
      %v613 = vld [vmem:[%s0 + $0x48] sm:$0xff]
      %v614 = vld [vmem:[%s0 + $0x50] sm:$0xff]
      %v615 = vld [vmem:[%s0 + $0x58] sm:$0xff]
      %v616 = vld [vmem:[%s0 + $0x60] sm:$0xff]
      %v617 = vld [vmem:[%s0 + $0x68] sm:$0xff]
      %v618 = vld [vmem:[%s0 + $0x70] sm:$0xff]
      %v619 = vld [vmem:[%s0 + $0x78] sm:$0xff]
      %v620 = vld [vmem:[%s0 + $0x80] sm:$0xff]
      %v621 = vld [vmem:[%s0 + $0x88] sm:$0xff]
      %v622 = vld [vmem:[%s0 + $0x90] sm:$0xff]
      %v623 = vld [vmem:[%s0 + $0x98] sm:$0xff]
      %v624 = vld [vmem:[%s0 + $0xa0] sm:$0xff]
      %v625 = vld [vmem:[%s0 + $0xa8] sm:$0xff]
      %v626 = vld [vmem:[%s0 + $0xb0] sm:$0xff]
      %v627 = vld [vmem:[%s0 + $0xb8] sm:$0xff]
      %v628 = vld [vmem:[%s0 + $0xc0] sm:$0xff]
      %v629 = vld [vmem:[%s0 + $0xc8] sm:$0xff]
      %v630 = vld [vmem:[%s0 + $0xd0] sm:$0xff]
      %v631 = vld [vmem:[%s0 + $0xd8] sm:$0xff]
      %v632 = vld [vmem:[%s0 + $0xe0] sm:$0xff]
      %v633 = vld [vmem:[%s0 + $0xe8] sm:$0xff]
      %v634 = vld [vmem:[%s0 + $0xf0] sm:$0xff]
      %v635 = vld [vmem:[%s0 + $0xf8] sm:$0xff]
      %v636 = vld [vmem:[#allocation4 + $0x40] sm:$0xff]
      %v637 = vld [vmem:[#allocation4 + $0x48] sm:$0xff]
      %v638 = vld [vmem:[#allocation4 + $0x50] sm:$0xff]
      %v639 = vld [vmem:[#allocation4 + $0x58] sm:$0xff]
      %v640 = vld [vmem:[#allocation4 + $0x60] sm:$0xff]
      %v641 = vld [vmem:[#allocation4 + $0x68] sm:$0xff]
      %v642 = vld [vmem:[#allocation4 + $0x70] sm:$0xff]
      %s643 = scalar_lea.vmem %s0, 256
      %v644 = vld [vmem:[%s643] sm:$0xff]
      %v645 = vld [vmem:[%s643 + $0x8] sm:$0xff]
      %v646 = vld [vmem:[%s643 + $0x10] sm:$0xff]
      %v647 = vld [vmem:[%s643 + $0x18] sm:$0xff]
      %v648 = vld [vmem:[%s643 + $0x20] sm:$0xff]
      %v649 = vld [vmem:[%s643 + $0x28] sm:$0xff]
      %v650 = vld [vmem:[%s643 + $0x30] sm:$0xff]
      %v651 = vld [vmem:[%s643 + $0x38] sm:$0xff]
      %v652 = vld [vmem:[%s643 + $0x40] sm:$0xff]
      %v653 = vld [vmem:[%s643 + $0x48] sm:$0xff]
      %v654 = vld [vmem:[%s643 + $0x50] sm:$0xff]
      %v655 = vld [vmem:[%s643 + $0x58] sm:$0xff]
      %v656 = vld [vmem:[%s643 + $0x60] sm:$0xff]
      %v657 = vld [vmem:[%s643 + $0x68] sm:$0xff]
      %v658 = vld [vmem:[%s643 + $0x70] sm:$0xff]
      %v659 = vld [vmem:[%s643 + $0x78] sm:$0xff]
      %v660 = vld [vmem:[%s643 + $0x80] sm:$0xff]
      %v661 = vld [vmem:[%s643 + $0x88] sm:$0xff]
      %v662 = vld [vmem:[%s643 + $0x90] sm:$0xff]
      %v663 = vld [vmem:[%s643 + $0x98] sm:$0xff]
      %v664 = vld [vmem:[%s643 + $0xa0] sm:$0xff]
      %v665 = vld [vmem:[%s643 + $0xa8] sm:$0xff]
      %v666 = vld [vmem:[%s643 + $0xb0] sm:$0xff]
      %v667 = vld [vmem:[%s643 + $0xb8] sm:$0xff]
      %v668 = vld [vmem:[%s643 + $0xc0] sm:$0xff]
      %v669 = vld [vmem:[%s643 + $0xc8] sm:$0xff]
      %v670 = vld [vmem:[%s643 + $0xd0] sm:$0xff]
      %v671 = vld [vmem:[%s643 + $0xd8] sm:$0xff]
      %v672 = vld [vmem:[%s643 + $0xe0] sm:$0xff]
      %v673 = vld [vmem:[%s643 + $0xe8] sm:$0xff]
      %v674 = vld [vmem:[%s643 + $0xf0] sm:$0xff]
      %v675 = vld [vmem:[%s643 + $0xf8] sm:$0xff]
      %676 = vmatprep.subr.mxu0 %v645
      %677 = vmatpush1.msra.mxu0 %v644
      %678 = vmatprep.subr.mxu0 %v647
      %679 = vmatpush1.msra.mxu0 %v646
      %680 = vmatprep.subr.mxu0 %v649
      %681 = vmatpush1.msra.mxu0 %v648
      %682 = vmatprep.subr.mxu0 %v651
      %683 = vmatpush1.msra.mxu0 %v650
      %684 = vmatprep.subr.mxu0 %v653
      %685 = vmatpush1.msra.mxu0 %v652
      %686 = vmatprep.subr.mxu0 %v655
      %687 = vmatpush1.msra.mxu0 %v654
      %688 = vmatprep.subr.mxu0 %v657
      %689 = vmatpush1.msra.mxu0 %v656
      %690 = vmatprep.subr.mxu0 %v659
      %691 = vmatpush1.msra.mxu0 %v658
      %692 = vmatprep.subr.mxu0 %v661
      %693 = vmatpush1.msra.mxu0 %v660
      %694 = vmatprep.subr.mxu0 %v663
      %695 = vmatpush1.msra.mxu0 %v662
      %696 = vmatprep.subr.mxu0 %v665
      %697 = vmatpush1.msra.mxu0 %v664
      %698 = vmatprep.subr.mxu0 %v667
      %699 = vmatpush1.msra.mxu0 %v666
      %700 = vmatprep.subr.mxu0 %v669
      %701 = vmatpush1.msra.mxu0 %v668
      %702 = vmatprep.subr.mxu0 %v671
      %703 = vmatpush1.msra.mxu0 %v670
      %704 = vmatprep.subr.mxu0 %v673
      %705 = vmatpush1.msra.mxu0 %v672
      %706 = vmatprep.subr.mxu0 %v675
      %707 = vmatpush1.msra.mxu0 %v674
      %708 = vmatprep.subr.mxu0 0.0
      %709 = vmatpush1.msra.mxu0 0.0
      %710 = vmatprep.subr.mxu0 0.0
      %711 = vmatpush1.msra.mxu0 0.0
      %712 = vmatprep.subr.mxu0 0.0
      %713 = vmatpush1.msra.mxu0 0.0
      %714 = vmatprep.subr.mxu0 0.0
      %715 = vmatpush1.msra.mxu0 0.0
      %716 = vmatprep.subr.mxu0 0.0
      %717 = vmatpush1.msra.mxu0 0.0
      %718 = vmatprep.subr.mxu0 0.0
      %719 = vmatpush1.msra.mxu0 0.0
      %720 = vmatprep.subr.mxu0 0.0
      %721 = vmatpush1.msra.mxu0 0.0
      %722 = vmatprep.subr.mxu0 0.0
      %723 = vmatpush1.msra.mxu0 0.0
      %724 = vmatprep.subr.mxu0 0.0
      %725 = vmatpush1.msra.mxu0 0.0
      %726 = vmatprep.subr.mxu0 0.0
      %727 = vmatpush1.msra.mxu0 0.0
      %728 = vmatprep.subr.mxu0 0.0
      %729 = vmatpush1.msra.mxu0 0.0
      %730 = vmatprep.subr.mxu0 0.0
      %731 = vmatpush1.msra.mxu0 0.0
      %732 = vmatprep.subr.mxu0 0.0
      %733 = vmatpush1.msra.mxu0 0.0
      %734 = vmatprep.subr.mxu0 0.0
      %735 = vmatpush1.msra.mxu0 0.0
      %736 = vmatprep.subr.mxu0 0.0
      %737 = vmatpush1.msra.mxu0 0.0
      %738 = vmatprep.subr.mxu0 0.0
      %739 = vmatpush1.msra.mxu0 0.0
      %740 = vmatprep.mubr.f32.mxu0 0.0
      %741 = vmatmul.mubr.f32.gmra.mrb[0].mxu0 %v636
      %v742 = vpop.f32.mrb[0].mxu0
      %v743 = vadd.f32 0.0, %v742
      %v744 = vpop.f32.mrb[0].mxu0
      %v745 = vadd.f32 0.0, %v744
      %746 = vmatprep.mubr.f32.mxu0 0.0
      %747 = vmatmul.mubr.f32.gmra.mrb[0].mxu0 %v637
      %v748 = vpop.f32.mrb[0].mxu0
      %v749 = vadd.f32 0.0, %v748
      %v750 = vpop.f32.mrb[0].mxu0
      %v751 = vadd.f32 0.0, %v750
      %752 = vmatprep.mubr.f32.mxu0 0.0
      %753 = vmatmul.mubr.f32.gmra.mrb[0].mxu0 %v638
      %v754 = vpop.f32.mrb[0].mxu0
      %v755 = vadd.f32 0.0, %v754
      %v756 = vpop.f32.mrb[0].mxu0
      %v757 = vadd.f32 0.0, %v756
      %758 = vmatprep.mubr.f32.mxu0 0.0
      %759 = vmatmul.mubr.f32.gmra.mrb[0].mxu0 %v639
      %v760 = vpop.f32.mrb[0].mxu0
      %v761 = vadd.f32 0.0, %v760
      %v762 = vpop.f32.mrb[0].mxu0
      %v763 = vadd.f32 0.0, %v762
      %764 = vmatprep.mubr.f32.mxu0 0.0
      %765 = vmatmul.mubr.f32.gmra.mrb[0].mxu0 %v640
      %v766 = vpop.f32.mrb[0].mxu0
      %v767 = vadd.f32 0.0, %v766
      %v768 = vpop.f32.mrb[0].mxu0
      %v769 = vadd.f32 0.0, %v768
      %770 = vmatprep.mubr.f32.mxu0 0.0
      %771 = vmatmul.mubr.f32.gmra.mrb[0].mxu0 %v641
      %v772 = vpop.f32.mrb[0].mxu0
      %v773 = vadd.f32 0.0, %v772
      %v774 = vpop.f32.mrb[0].mxu0
      %v775 = vadd.f32 0.0, %v774
      %776 = vmatprep.mubr.f32.mxu0 0.0
      %777 = vmatmul.mubr.f32.gmra.mrb[0].mxu0 %v642
      %v778 = vpop.f32.mrb[0].mxu0
      %v779 = vadd.f32 0.0, %v778
      %v780 = vpop.f32.mrb[0].mxu0
      %v781 = vadd.f32 0.0, %v780
      %782 = vdwg.mxu0
      %783 = vmatprep.subr.mxu0 %v605
      %784 = vmatpush1.msra.mxu0 %v604
      %785 = vmatprep.subr.mxu0 %v607
      %786 = vmatpush1.msra.mxu0 %v606
      %787 = vmatprep.subr.mxu0 %v609
      %788 = vmatpush1.msra.mxu0 %v608
      %789 = vmatprep.subr.mxu0 %v611
      %790 = vmatpush1.msra.mxu0 %v610
      %791 = vmatprep.subr.mxu0 %v613
      %792 = vmatpush1.msra.mxu0 %v612
      %793 = vmatprep.subr.mxu0 %v615
      %794 = vmatpush1.msra.mxu0 %v614
      %795 = vmatprep.subr.mxu0 %v617
      %796 = vmatpush1.msra.mxu0 %v616
      %797 = vmatprep.subr.mxu0 %v619
      %798 = vmatpush1.msra.mxu0 %v618
      %799 = vmatprep.subr.mxu0 %v621
      %800 = vmatpush1.msra.mxu0 %v620
      %801 = vmatprep.subr.mxu0 %v623
      %802 = vmatpush1.msra.mxu0 %v622
      %803 = vmatprep.subr.mxu0 %v625
      %804 = vmatpush1.msra.mxu0 %v624
      %805 = vmatprep.subr.mxu0 %v627
      %806 = vmatpush1.msra.mxu0 %v626
      %807 = vmatprep.subr.mxu0 %v629
      %808 = vmatpush1.msra.mxu0 %v628
      %809 = vmatprep.subr.mxu0 %v631
      %810 = vmatpush1.msra.mxu0 %v630
      %811 = vmatprep.subr.mxu0 %v633
      %812 = vmatpush1.msra.mxu0 %v632
      %813 = vmatprep.subr.mxu0 %v635
      %814 = vmatpush1.msra.mxu0 %v634
      %815 = vmatprep.subr.mxu0 0.0
      %816 = vmatpush1.msra.mxu0 0.0
      %817 = vmatprep.subr.mxu0 0.0
      %818 = vmatpush1.msra.mxu0 0.0
      %819 = vmatprep.subr.mxu0 0.0
      %820 = vmatpush1.msra.mxu0 0.0
      %821 = vmatprep.subr.mxu0 0.0
      %822 = vmatpush1.msra.mxu0 0.0
      %823 = vmatprep.subr.mxu0 0.0
      %824 = vmatpush1.msra.mxu0 0.0
      %825 = vmatprep.subr.mxu0 0.0
      %826 = vmatpush1.msra.mxu0 0.0
      %827 = vmatprep.subr.mxu0 0.0
      %828 = vmatpush1.msra.mxu0 0.0
      %829 = vmatprep.subr.mxu0 0.0
      %830 = vmatpush1.msra.mxu0 0.0
      %831 = vmatprep.subr.mxu0 0.0
      %832 = vmatpush1.msra.mxu0 0.0
      %833 = vmatprep.subr.mxu0 0.0
      %834 = vmatpush1.msra.mxu0 0.0
      %835 = vmatprep.subr.mxu0 0.0
      %836 = vmatpush1.msra.mxu0 0.0
      %837 = vmatprep.subr.mxu0 0.0
      %838 = vmatpush1.msra.mxu0 0.0
      %839 = vmatprep.subr.mxu0 0.0
      %840 = vmatpush1.msra.mxu0 0.0
      %841 = vmatprep.subr.mxu0 0.0
      %842 = vmatpush1.msra.mxu0 0.0
      %843 = vmatprep.subr.mxu0 0.0
      %844 = vmatpush1.msra.mxu0 0.0
      %845 = vmatprep.subr.mxu0 0.0
      %846 = vmatpush1.msra.mxu0 0.0
      %847 = vmatprep.mubr.f32.mxu0 0.0
      %848 = vmatmul.mubr.f32.gmra.mrb[0].mxu0 %v597
      %v849 = vpop.f32.mrb[0].mxu0
      %v850 = vadd.f32 %v743, %v849
      %v851 = vpop.f32.mrb[0].mxu0
      %v852 = vadd.f32 %v745, %v851
      %853 = vmatprep.mubr.f32.mxu0 0.0
      %854 = vmatmul.mubr.f32.gmra.mrb[0].mxu0 %v598
      %v855 = vpop.f32.mrb[0].mxu0
      %v856 = vadd.f32 %v749, %v855
      %v857 = vpop.f32.mrb[0].mxu0
      %v858 = vadd.f32 %v751, %v857
      %859 = vmatprep.mubr.f32.mxu0 0.0
      %860 = vmatmul.mubr.f32.gmra.mrb[0].mxu0 %v599
      %v861 = vpop.f32.mrb[0].mxu0
      %v862 = vadd.f32 %v755, %v861
      %v863 = vpop.f32.mrb[0].mxu0
      %v864 = vadd.f32 %v757, %v863
      %865 = vmatprep.mubr.f32.mxu0 0.0
      %866 = vmatmul.mubr.f32.gmra.mrb[0].mxu0 %v600
      %v867 = vpop.f32.mrb[0].mxu0
      %v868 = vadd.f32 %v761, %v867
      %v869 = vpop.f32.mrb[0].mxu0
      %v870 = vadd.f32 %v763, %v869
      %871 = vmatprep.mubr.f32.mxu0 0.0
      %872 = vmatmul.mubr.f32.gmra.mrb[0].mxu0 %v601
      %v873 = vpop.f32.mrb[0].mxu0
      %v874 = vadd.f32 %v767, %v873
      %v875 = vpop.f32.mrb[0].mxu0
      %v876 = vadd.f32 %v769, %v875
      %877 = vmatprep.mubr.f32.mxu0 0.0
      %878 = vmatmul.mubr.f32.gmra.mrb[0].mxu0 %v602
      %v879 = vpop.f32.mrb[0].mxu0
      %v880 = vadd.f32 %v773, %v879
      %v881 = vpop.f32.mrb[0].mxu0
      %v882 = vadd.f32 %v775, %v881
      %883 = vmatprep.mubr.f32.mxu0 0.0
      %884 = vmatmul.mubr.f32.gmra.mrb[0].mxu0 %v603
      %v885 = vpop.f32.mrb[0].mxu0
      %v886 = vadd.f32 %v779, %v885
      %v887 = vpop.f32.mrb[0].mxu0
      %v888 = vadd.f32 %v781, %v887
      %889 = vdwg.mxu0
      %v890 = vld [vmem:[#allocation4 + $0x80] sm:$0xff]
      %v891 = vld [vmem:[#allocation4 + $0x88] sm:$0xff]
      %v892 = vld [vmem:[#allocation4 + $0x90] sm:$0xff]
      %v893 = vld [vmem:[#allocation4 + $0x98] sm:$0xff]
      %v894 = vld [vmem:[#allocation4 + $0xa0] sm:$0xff]
      %v895 = vld [vmem:[#allocation4 + $0xa8] sm:$0xff]
      %v896 = vld [vmem:[#allocation4 + $0xb0] sm:$0xff]
      %s897 = scalar_lea.vmem %s0, 512
      %v898 = vld [vmem:[%s897] sm:$0xff]
      %v899 = vld [vmem:[%s897 + $0x8] sm:$0xff]
      %v900 = vld [vmem:[%s897 + $0x10] sm:$0xff]
      %v901 = vld [vmem:[%s897 + $0x18] sm:$0xff]
      %v902 = vld [vmem:[%s897 + $0x20] sm:$0xff]
      %v903 = vld [vmem:[%s897 + $0x28] sm:$0xff]
      %v904 = vld [vmem:[%s897 + $0x30] sm:$0xff]
      %v905 = vld [vmem:[%s897 + $0x38] sm:$0xff]
      %v906 = vld [vmem:[%s897 + $0x40] sm:$0xff]
      %v907 = vld [vmem:[%s897 + $0x48] sm:$0xff]
      %v908 = vld [vmem:[%s897 + $0x50] sm:$0xff]
      %v909 = vld [vmem:[%s897 + $0x58] sm:$0xff]
      %v910 = vld [vmem:[%s897 + $0x60] sm:$0xff]
      %v911 = vld [vmem:[%s897 + $0x68] sm:$0xff]
      %v912 = vld [vmem:[%s897 + $0x70] sm:$0xff]
      %v913 = vld [vmem:[%s897 + $0x78] sm:$0xff]
      %v914 = vld [vmem:[%s897 + $0x80] sm:$0xff]
      %v915 = vld [vmem:[%s897 + $0x88] sm:$0xff]
      %v916 = vld [vmem:[%s897 + $0x90] sm:$0xff]
      %v917 = vld [vmem:[%s897 + $0x98] sm:$0xff]
      %v918 = vld [vmem:[%s897 + $0xa0] sm:$0xff]
      %v919 = vld [vmem:[%s897 + $0xa8] sm:$0xff]
      %v920 = vld [vmem:[%s897 + $0xb0] sm:$0xff]
      %v921 = vld [vmem:[%s897 + $0xb8] sm:$0xff]
      %v922 = vld [vmem:[%s897 + $0xc0] sm:$0xff]
      %v923 = vld [vmem:[%s897 + $0xc8] sm:$0xff]
      %v924 = vld [vmem:[%s897 + $0xd0] sm:$0xff]
      %v925 = vld [vmem:[%s897 + $0xd8] sm:$0xff]
      %v926 = vld [vmem:[%s897 + $0xe0] sm:$0xff]
      %v927 = vld [vmem:[%s897 + $0xe8] sm:$0xff]
      %v928 = vld [vmem:[%s897 + $0xf0] sm:$0xff]
      %v929 = vld [vmem:[%s897 + $0xf8] sm:$0xff]
      %930 = vmatprep.subr.mxu0 %v899
      %931 = vmatpush1.msra.mxu0 %v898
      %932 = vmatprep.subr.mxu0 %v901
      %933 = vmatpush1.msra.mxu0 %v900
      %934 = vmatprep.subr.mxu0 %v903
      %935 = vmatpush1.msra.mxu0 %v902
      %936 = vmatprep.subr.mxu0 %v905
      %937 = vmatpush1.msra.mxu0 %v904
      %938 = vmatprep.subr.mxu0 %v907
      %939 = vmatpush1.msra.mxu0 %v906
      %940 = vmatprep.subr.mxu0 %v909
      %941 = vmatpush1.msra.mxu0 %v908
      %942 = vmatprep.subr.mxu0 %v911
      %943 = vmatpush1.msra.mxu0 %v910
      %944 = vmatprep.subr.mxu0 %v913
      %945 = vmatpush1.msra.mxu0 %v912
      %946 = vmatprep.subr.mxu0 %v915
      %947 = vmatpush1.msra.mxu0 %v914
      %948 = vmatprep.subr.mxu0 %v917
      %949 = vmatpush1.msra.mxu0 %v916
      %950 = vmatprep.subr.mxu0 %v919
      %951 = vmatpush1.msra.mxu0 %v918
      %952 = vmatprep.subr.mxu0 %v921
      %953 = vmatpush1.msra.mxu0 %v920
      %954 = vmatprep.subr.mxu0 %v923
      %955 = vmatpush1.msra.mxu0 %v922
      %956 = vmatprep.subr.mxu0 %v925
      %957 = vmatpush1.msra.mxu0 %v924
      %958 = vmatprep.subr.mxu0 %v927
      %959 = vmatpush1.msra.mxu0 %v926
      %960 = vmatprep.subr.mxu0 %v929
      %961 = vmatpush1.msra.mxu0 %v928
      %962 = vmatprep.subr.mxu0 0.0
      %963 = vmatpush1.msra.mxu0 0.0
      %964 = vmatprep.subr.mxu0 0.0
      %965 = vmatpush1.msra.mxu0 0.0
      %966 = vmatprep.subr.mxu0 0.0
      %967 = vmatpush1.msra.mxu0 0.0
      %968 = vmatprep.subr.mxu0 0.0
      %969 = vmatpush1.msra.mxu0 0.0
      %970 = vmatprep.subr.mxu0 0.0
      %971 = vmatpush1.msra.mxu0 0.0
      %972 = vmatprep.subr.mxu0 0.0
      %973 = vmatpush1.msra.mxu0 0.0
      %974 = vmatprep.subr.mxu0 0.0
      %975 = vmatpush1.msra.mxu0 0.0
      %976 = vmatprep.subr.mxu0 0.0
      %977 = vmatpush1.msra.mxu0 0.0
      %978 = vmatprep.subr.mxu0 0.0
      %979 = vmatpush1.msra.mxu0 0.0
      %980 = vmatprep.subr.mxu0 0.0
      %981 = vmatpush1.msra.mxu0 0.0
      %982 = vmatprep.subr.mxu0 0.0
      %983 = vmatpush1.msra.mxu0 0.0
      %984 = vmatprep.subr.mxu0 0.0
      %985 = vmatpush1.msra.mxu0 0.0
      %986 = vmatprep.subr.mxu0 0.0
      %987 = vmatpush1.msra.mxu0 0.0
      %988 = vmatprep.subr.mxu0 0.0
      %989 = vmatpush1.msra.mxu0 0.0
      %990 = vmatprep.subr.mxu0 0.0
      %991 = vmatpush1.msra.mxu0 0.0
      %992 = vmatprep.subr.mxu0 0.0
      %993 = vmatpush1.msra.mxu0 0.0
      %994 = vmatprep.mubr.f32.mxu0 0.0
      %995 = vmatmul.mubr.f32.gmra.mrb[0].mxu0 %v890
      %v996 = vpop.f32.mrb[0].mxu0
      %v997 = vadd.f32 0.0, %v996
      %v998 = vpop.f32.mrb[0].mxu0
      %v999 = vadd.f32 0.0, %v998
      %1000 = vmatprep.mubr.f32.mxu0 0.0
      %1001 = vmatmul.mubr.f32.gmra.mrb[0].mxu0 %v891
      %v1002 = vpop.f32.mrb[0].mxu0
      %v1003 = vadd.f32 0.0, %v1002
      %v1004 = vpop.f32.mrb[0].mxu0
      %v1005 = vadd.f32 0.0, %v1004
      %1006 = vmatprep.mubr.f32.mxu0 0.0
      %1007 = vmatmul.mubr.f32.gmra.mrb[0].mxu0 %v892
      %v1008 = vpop.f32.mrb[0].mxu0
      %v1009 = vadd.f32 0.0, %v1008
      %v1010 = vpop.f32.mrb[0].mxu0
      %v1011 = vadd.f32 0.0, %v1010
      %1012 = vmatprep.mubr.f32.mxu0 0.0
      %1013 = vmatmul.mubr.f32.gmra.mrb[0].mxu0 %v893
      %v1014 = vpop.f32.mrb[0].mxu0
      %v1015 = vadd.f32 0.0, %v1014
      %v1016 = vpop.f32.mrb[0].mxu0
      %v1017 = vadd.f32 0.0, %v1016
      %1018 = vmatprep.mubr.f32.mxu0 0.0
      %1019 = vmatmul.mubr.f32.gmra.mrb[0].mxu0 %v894
      %v1020 = vpop.f32.mrb[0].mxu0
      %v1021 = vadd.f32 0.0, %v1020
      %v1022 = vpop.f32.mrb[0].mxu0
      %v1023 = vadd.f32 0.0, %v1022
      %1024 = vmatprep.mubr.f32.mxu0 0.0
      %1025 = vmatmul.mubr.f32.gmra.mrb[0].mxu0 %v895
      %v1026 = vpop.f32.mrb[0].mxu0
      %v1027 = vadd.f32 0.0, %v1026
      %v1028 = vpop.f32.mrb[0].mxu0
      %v1029 = vadd.f32 0.0, %v1028
      %1030 = vmatprep.mubr.f32.mxu0 0.0
      %1031 = vmatmul.mubr.f32.gmra.mrb[0].mxu0 %v896
      %v1032 = vpop.f32.mrb[0].mxu0
      %v1033 = vadd.f32 0.0, %v1032
      %v1034 = vpop.f32.mrb[0].mxu0
      %v1035 = vadd.f32 0.0, %v1034
      %1036 = vdwg.mxu0
      %v1037 = vadd.f32 %v850, %v997
      %v1038 = vadd.f32 %v852, %v999
      %v1039 = vadd.f32 %v856, %v1003
      %v1040 = vadd.f32 %v858, %v1005
      %v1041 = vadd.f32 %v862, %v1009
      %v1042 = vadd.f32 %v864, %v1011
      %v1043 = vadd.f32 %v868, %v1015
      %v1044 = vadd.f32 %v870, %v1017
      %v1045 = vadd.f32 %v874, %v1021
      %v1046 = vadd.f32 %v876, %v1023
      %v1047 = vadd.f32 %v880, %v1027
      %v1048 = vadd.f32 %v882, %v1029
      %v1049 = vadd.f32 %v886, %v1033
      %v1050 = vadd.f32 %v888, %v1035
      %v1051 = vld [vmem:[#allocation4 + $0xc0] sm:$0xff]
      %v1052 = vld [vmem:[#allocation4 + $0xc8] sm:$0xff]
      %v1053 = vld [vmem:[#allocation4 + $0xd0] sm:$0xff]
      %v1054 = vld [vmem:[#allocation4 + $0xd8] sm:$0xff]
      %v1055 = vld [vmem:[#allocation4 + $0xe0] sm:$0xff]
      %v1056 = vld [vmem:[#allocation4 + $0xe8] sm:$0xff]
      %v1057 = vld [vmem:[#allocation4 + $0xf0] sm:$0xff]
      %s1058 = scalar_lea.vmem %s0, 768
      %v1059 = vld [vmem:[%s1058] sm:$0xff]
      %v1060 = vld [vmem:[%s1058 + $0x8] sm:$0xff]
      %v1061 = vld [vmem:[%s1058 + $0x10] sm:$0xff]
      %v1062 = vld [vmem:[%s1058 + $0x18] sm:$0xff]
      %v1063 = vld [vmem:[%s1058 + $0x20] sm:$0xff]
      %v1064 = vld [vmem:[%s1058 + $0x28] sm:$0xff]
      %v1065 = vld [vmem:[%s1058 + $0x30] sm:$0xff]
      %v1066 = vld [vmem:[%s1058 + $0x38] sm:$0xff]
      %v1067 = vld [vmem:[%s1058 + $0x40] sm:$0xff]
      %v1068 = vld [vmem:[%s1058 + $0x48] sm:$0xff]
      %v1069 = vld [vmem:[%s1058 + $0x50] sm:$0xff]
      %v1070 = vld [vmem:[%s1058 + $0x58] sm:$0xff]
      %v1071 = vld [vmem:[%s1058 + $0x60] sm:$0xff]
      %v1072 = vld [vmem:[%s1058 + $0x68] sm:$0xff]
      %v1073 = vld [vmem:[%s1058 + $0x70] sm:$0xff]
      %v1074 = vld [vmem:[%s1058 + $0x78] sm:$0xff]
      %v1075 = vld [vmem:[%s1058 + $0x80] sm:$0xff]
      %v1076 = vld [vmem:[%s1058 + $0x88] sm:$0xff]
      %v1077 = vld [vmem:[%s1058 + $0x90] sm:$0xff]
      %v1078 = vld [vmem:[%s1058 + $0x98] sm:$0xff]
      %v1079 = vld [vmem:[%s1058 + $0xa0] sm:$0xff]
      %v1080 = vld [vmem:[%s1058 + $0xa8] sm:$0xff]
      %v1081 = vld [vmem:[%s1058 + $0xb0] sm:$0xff]
      %v1082 = vld [vmem:[%s1058 + $0xb8] sm:$0xff]
      %v1083 = vld [vmem:[%s1058 + $0xc0] sm:$0xff]
      %v1084 = vld [vmem:[%s1058 + $0xc8] sm:$0xff]
      %v1085 = vld [vmem:[%s1058 + $0xd0] sm:$0xff]
      %v1086 = vld [vmem:[%s1058 + $0xd8] sm:$0xff]
      %v1087 = vld [vmem:[%s1058 + $0xe0] sm:$0xff]
      %v1088 = vld [vmem:[%s1058 + $0xe8] sm:$0xff]
      %v1089 = vld [vmem:[%s1058 + $0xf0] sm:$0xff]
      %v1090 = vld [vmem:[%s1058 + $0xf8] sm:$0xff]
      %1091 = vmatprep.subr.mxu0 %v1060
      %1092 = vmatpush1.msra.mxu0 %v1059
      %1093 = vmatprep.subr.mxu0 %v1062
      %1094 = vmatpush1.msra.mxu0 %v1061
      %1095 = vmatprep.subr.mxu0 %v1064
      %1096 = vmatpush1.msra.mxu0 %v1063
      %1097 = vmatprep.subr.mxu0 %v1066
      %1098 = vmatpush1.msra.mxu0 %v1065
      %1099 = vmatprep.subr.mxu0 %v1068
      %1100 = vmatpush1.msra.mxu0 %v1067
      %1101 = vmatprep.subr.mxu0 %v1070
      %1102 = vmatpush1.msra.mxu0 %v1069
      %1103 = vmatprep.subr.mxu0 %v1072
      %1104 = vmatpush1.msra.mxu0 %v1071
      %1105 = vmatprep.subr.mxu0 %v1074
      %1106 = vmatpush1.msra.mxu0 %v1073
      %1107 = vmatprep.subr.mxu0 %v1076
      %1108 = vmatpush1.msra.mxu0 %v1075
      %1109 = vmatprep.subr.mxu0 %v1078
      %1110 = vmatpush1.msra.mxu0 %v1077
      %1111 = vmatprep.subr.mxu0 %v1080
      %1112 = vmatpush1.msra.mxu0 %v1079
      %1113 = vmatprep.subr.mxu0 %v1082
      %1114 = vmatpush1.msra.mxu0 %v1081
      %1115 = vmatprep.subr.mxu0 %v1084
      %1116 = vmatpush1.msra.mxu0 %v1083
      %1117 = vmatprep.subr.mxu0 %v1086
      %1118 = vmatpush1.msra.mxu0 %v1085
      %1119 = vmatprep.subr.mxu0 %v1088
      %1120 = vmatpush1.msra.mxu0 %v1087
      %1121 = vmatprep.subr.mxu0 %v1090
      %1122 = vmatpush1.msra.mxu0 %v1089
      %1123 = vmatprep.subr.mxu0 0.0
      %1124 = vmatpush1.msra.mxu0 0.0
      %1125 = vmatprep.subr.mxu0 0.0
      %1126 = vmatpush1.msra.mxu0 0.0
      %1127 = vmatprep.subr.mxu0 0.0
      %1128 = vmatpush1.msra.mxu0 0.0
      %1129 = vmatprep.subr.mxu0 0.0
      %1130 = vmatpush1.msra.mxu0 0.0
      %1131 = vmatprep.subr.mxu0 0.0
      %1132 = vmatpush1.msra.mxu0 0.0
      %1133 = vmatprep.subr.mxu0 0.0
      %1134 = vmatpush1.msra.mxu0 0.0
      %1135 = vmatprep.subr.mxu0 0.0
      %1136 = vmatpush1.msra.mxu0 0.0
      %1137 = vmatprep.subr.mxu0 0.0
      %1138 = vmatpush1.msra.mxu0 0.0
      %1139 = vmatprep.subr.mxu0 0.0
      %1140 = vmatpush1.msra.mxu0 0.0
      %1141 = vmatprep.subr.mxu0 0.0
      %1142 = vmatpush1.msra.mxu0 0.0
      %1143 = vmatprep.subr.mxu0 0.0
      %1144 = vmatpush1.msra.mxu0 0.0
      %1145 = vmatprep.subr.mxu0 0.0
      %1146 = vmatpush1.msra.mxu0 0.0
      %1147 = vmatprep.subr.mxu0 0.0
      %1148 = vmatpush1.msra.mxu0 0.0
      %1149 = vmatprep.subr.mxu0 0.0
      %1150 = vmatpush1.msra.mxu0 0.0
      %1151 = vmatprep.subr.mxu0 0.0
      %1152 = vmatpush1.msra.mxu0 0.0
      %1153 = vmatprep.subr.mxu0 0.0
      %1154 = vmatpush1.msra.mxu0 0.0
      %1155 = vmatprep.mubr.f32.mxu0 0.0
      %1156 = vmatmul.mubr.f32.gmra.mrb[0].mxu0 %v1051
      %v1157 = vpop.f32.mrb[0].mxu0
      %v1158 = vadd.f32 0.0, %v1157
      %v1159 = vpop.f32.mrb[0].mxu0
      %v1160 = vadd.f32 0.0, %v1159
      %1161 = vmatprep.mubr.f32.mxu0 0.0
      %1162 = vmatmul.mubr.f32.gmra.mrb[0].mxu0 %v1052
      %v1163 = vpop.f32.mrb[0].mxu0
      %v1164 = vadd.f32 0.0, %v1163
      %v1165 = vpop.f32.mrb[0].mxu0
      %v1166 = vadd.f32 0.0, %v1165
      %1167 = vmatprep.mubr.f32.mxu0 0.0
      %1168 = vmatmul.mubr.f32.gmra.mrb[0].mxu0 %v1053
      %v1169 = vpop.f32.mrb[0].mxu0
      %v1170 = vadd.f32 0.0, %v1169
      %v1171 = vpop.f32.mrb[0].mxu0
      %v1172 = vadd.f32 0.0, %v1171
      %1173 = vmatprep.mubr.f32.mxu0 0.0
      %1174 = vmatmul.mubr.f32.gmra.mrb[0].mxu0 %v1054
      %v1175 = vpop.f32.mrb[0].mxu0
      %v1176 = vadd.f32 0.0, %v1175
      %v1177 = vpop.f32.mrb[0].mxu0
      %v1178 = vadd.f32 0.0, %v1177
      %1179 = vmatprep.mubr.f32.mxu0 0.0
      %1180 = vmatmul.mubr.f32.gmra.mrb[0].mxu0 %v1055
      %v1181 = vpop.f32.mrb[0].mxu0
      %v1182 = vadd.f32 0.0, %v1181
      %v1183 = vpop.f32.mrb[0].mxu0
      %v1184 = vadd.f32 0.0, %v1183
      %1185 = vmatprep.mubr.f32.mxu0 0.0
      %1186 = vmatmul.mubr.f32.gmra.mrb[0].mxu0 %v1056
      %v1187 = vpop.f32.mrb[0].mxu0
      %v1188 = vadd.f32 0.0, %v1187
      %v1189 = vpop.f32.mrb[0].mxu0
      %v1190 = vadd.f32 0.0, %v1189
      %1191 = vmatprep.mubr.f32.mxu0 0.0
      %1192 = vmatmul.mubr.f32.gmra.mrb[0].mxu0 %v1057
      %v1193 = vpop.f32.mrb[0].mxu0
      %v1194 = vadd.f32 0.0, %v1193
      %v1195 = vpop.f32.mrb[0].mxu0
      %v1196 = vadd.f32 0.0, %v1195
      %1197 = vdwg.mxu0
      %v1198 = vadd.f32 %v1037, %v1158
      %v1199 = vadd.f32 %v1038, %v1160
      %v1200 = vadd.f32 %v1039, %v1164
      %v1201 = vadd.f32 %v1040, %v1166
      %v1202 = vadd.f32 %v1041, %v1170
      %v1203 = vadd.f32 %v1042, %v1172
      %v1204 = vadd.f32 %v1043, %v1176
      %v1205 = vadd.f32 %v1044, %v1178
      %v1206 = vadd.f32 %v1045, %v1182
      %v1207 = vadd.f32 %v1046, %v1184
      %v1208 = vadd.f32 %v1047, %v1188
      %v1209 = vadd.f32 %v1048, %v1190
      %v1210 = vadd.f32 %v1049, %v1194
      %v1211 = vadd.f32 %v1050, %v1196
      %v1212 = vld [vmem:[#allocation4 + $0x8] sm:$0xff]
      %v1213 = vld [vmem:[#allocation4 + $0x10] sm:$0xff]
      %v1214 = vld [vmem:[#allocation4 + $0x18] sm:$0xff]
      %v1215 = vld [vmem:[#allocation4 + $0x20] sm:$0xff]
      %v1216 = vld [vmem:[#allocation4 + $0x28] sm:$0xff]
      %v1217 = vld [vmem:[#allocation4 + $0x30] sm:$0xff]
      %v1218 = vld [vmem:[#allocation4 + $0x38] sm:$0xff]
      %s1219 = scalar_lea.vmem %s0, 1024
      %v1220 = vld [vmem:[%s1219] sm:$0xff]
      %v1221 = vld [vmem:[%s1219 + $0x8] sm:$0xff]
      %v1222 = vld [vmem:[%s1219 + $0x10] sm:$0xff]
      %v1223 = vld [vmem:[%s1219 + $0x18] sm:$0xff]
      %v1224 = vld [vmem:[%s1219 + $0x20] sm:$0xff]
      %v1225 = vld [vmem:[%s1219 + $0x28] sm:$0xff]
      %v1226 = vld [vmem:[%s1219 + $0x30] sm:$0xff]
      %v1227 = vld [vmem:[%s1219 + $0x38] sm:$0xff]
      %v1228 = vld [vmem:[%s1219 + $0x40] sm:$0xff]
      %v1229 = vld [vmem:[%s1219 + $0x48] sm:$0xff]
      %v1230 = vld [vmem:[%s1219 + $0x50] sm:$0xff]
      %v1231 = vld [vmem:[%s1219 + $0x58] sm:$0xff]
      %v1232 = vld [vmem:[%s1219 + $0x60] sm:$0xff]
      %v1233 = vld [vmem:[%s1219 + $0x68] sm:$0xff]
      %v1234 = vld [vmem:[%s1219 + $0x70] sm:$0xff]
      %v1235 = vld [vmem:[%s1219 + $0x78] sm:$0xff]
      %v1236 = vld [vmem:[%s1219 + $0x80] sm:$0xff]
      %v1237 = vld [vmem:[%s1219 + $0x88] sm:$0xff]
      %v1238 = vld [vmem:[%s1219 + $0x90] sm:$0xff]
      %v1239 = vld [vmem:[%s1219 + $0x98] sm:$0xff]
      %v1240 = vld [vmem:[%s1219 + $0xa0] sm:$0xff]
      %v1241 = vld [vmem:[%s1219 + $0xa8] sm:$0xff]
      %v1242 = vld [vmem:[%s1219 + $0xb0] sm:$0xff]
      %v1243 = vld [vmem:[%s1219 + $0xb8] sm:$0xff]
      %v1244 = vld [vmem:[%s1219 + $0xc0] sm:$0xff]
      %v1245 = vld [vmem:[%s1219 + $0xc8] sm:$0xff]
      %v1246 = vld [vmem:[%s1219 + $0xd0] sm:$0xff]
      %v1247 = vld [vmem:[%s1219 + $0xd8] sm:$0xff]
      %v1248 = vld [vmem:[%s1219 + $0xe0] sm:$0xff]
      %v1249 = vld [vmem:[%s1219 + $0xe8] sm:$0xff]
      %v1250 = vld [vmem:[%s1219 + $0xf0] sm:$0xff]
      %v1251 = vld [vmem:[%s1219 + $0xf8] sm:$0xff]
      %1252 = vmatprep.subr.mxu0 %v1221
      %1253 = vmatpush1.msra.mxu0 %v1220
      %1254 = vmatprep.subr.mxu0 %v1223
      %1255 = vmatpush1.msra.mxu0 %v1222
      %1256 = vmatprep.subr.mxu0 %v1225
      %1257 = vmatpush1.msra.mxu0 %v1224
      %1258 = vmatprep.subr.mxu0 %v1227
      %1259 = vmatpush1.msra.mxu0 %v1226
      %1260 = vmatprep.subr.mxu0 %v1229
      %1261 = vmatpush1.msra.mxu0 %v1228
      %1262 = vmatprep.subr.mxu0 %v1231
      %1263 = vmatpush1.msra.mxu0 %v1230
      %1264 = vmatprep.subr.mxu0 %v1233
      %1265 = vmatpush1.msra.mxu0 %v1232
      %1266 = vmatprep.subr.mxu0 %v1235
      %1267 = vmatpush1.msra.mxu0 %v1234
      %1268 = vmatprep.subr.mxu0 %v1237
      %1269 = vmatpush1.msra.mxu0 %v1236
      %1270 = vmatprep.subr.mxu0 %v1239
      %1271 = vmatpush1.msra.mxu0 %v1238
      %1272 = vmatprep.subr.mxu0 %v1241
      %1273 = vmatpush1.msra.mxu0 %v1240
      %1274 = vmatprep.subr.mxu0 %v1243
      %1275 = vmatpush1.msra.mxu0 %v1242
      %1276 = vmatprep.subr.mxu0 %v1245
      %1277 = vmatpush1.msra.mxu0 %v1244
      %1278 = vmatprep.subr.mxu0 %v1247
      %1279 = vmatpush1.msra.mxu0 %v1246
      %1280 = vmatprep.subr.mxu0 %v1249
      %1281 = vmatpush1.msra.mxu0 %v1248
      %1282 = vmatprep.subr.mxu0 %v1251
      %1283 = vmatpush1.msra.mxu0 %v1250
      %1284 = vmatprep.subr.mxu0 0.0
      %1285 = vmatpush1.msra.mxu0 0.0
      %1286 = vmatprep.subr.mxu0 0.0
      %1287 = vmatpush1.msra.mxu0 0.0
      %1288 = vmatprep.subr.mxu0 0.0
      %1289 = vmatpush1.msra.mxu0 0.0
      %1290 = vmatprep.subr.mxu0 0.0
      %1291 = vmatpush1.msra.mxu0 0.0
      %1292 = vmatprep.subr.mxu0 0.0
      %1293 = vmatpush1.msra.mxu0 0.0
      %1294 = vmatprep.subr.mxu0 0.0
      %1295 = vmatpush1.msra.mxu0 0.0
      %1296 = vmatprep.subr.mxu0 0.0
      %1297 = vmatpush1.msra.mxu0 0.0
      %1298 = vmatprep.subr.mxu0 0.0
      %1299 = vmatpush1.msra.mxu0 0.0
      %1300 = vmatprep.subr.mxu0 0.0
      %1301 = vmatpush1.msra.mxu0 0.0
      %1302 = vmatprep.subr.mxu0 0.0
      %1303 = vmatpush1.msra.mxu0 0.0
      %1304 = vmatprep.subr.mxu0 0.0
      %1305 = vmatpush1.msra.mxu0 0.0
      %1306 = vmatprep.subr.mxu0 0.0
      %1307 = vmatpush1.msra.mxu0 0.0
      %1308 = vmatprep.subr.mxu0 0.0
      %1309 = vmatpush1.msra.mxu0 0.0
      %1310 = vmatprep.subr.mxu0 0.0
      %1311 = vmatpush1.msra.mxu0 0.0
      %1312 = vmatprep.subr.mxu0 0.0
      %1313 = vmatpush1.msra.mxu0 0.0
      %1314 = vmatprep.subr.mxu0 0.0
      %1315 = vmatpush1.msra.mxu0 0.0
      %1316 = vmatprep.mubr.f32.mxu0 0.0
      %1317 = vmatmul.mubr.f32.gmra.mrb[0].mxu0 %v1212
      %v1318 = vpop.f32.mrb[0].mxu0
      %v1319 = vadd.f32 0.0, %v1318
      %v1320 = vpop.f32.mrb[0].mxu0
      %v1321 = vadd.f32 0.0, %v1320
      %1322 = vmatprep.mubr.f32.mxu0 0.0
      %1323 = vmatmul.mubr.f32.gmra.mrb[0].mxu0 %v1213
      %v1324 = vpop.f32.mrb[0].mxu0
      %v1325 = vadd.f32 0.0, %v1324
      %v1326 = vpop.f32.mrb[0].mxu0
      %v1327 = vadd.f32 0.0, %v1326
      %1328 = vmatprep.mubr.f32.mxu0 0.0
      %1329 = vmatmul.mubr.f32.gmra.mrb[0].mxu0 %v1214
      %v1330 = vpop.f32.mrb[0].mxu0
      %v1331 = vadd.f32 0.0, %v1330
      %v1332 = vpop.f32.mrb[0].mxu0
      %v1333 = vadd.f32 0.0, %v1332
      %1334 = vmatprep.mubr.f32.mxu0 0.0
      %1335 = vmatmul.mubr.f32.gmra.mrb[0].mxu0 %v1215
      %v1336 = vpop.f32.mrb[0].mxu0
      %v1337 = vadd.f32 0.0, %v1336
      %v1338 = vpop.f32.mrb[0].mxu0
      %v1339 = vadd.f32 0.0, %v1338
      %1340 = vmatprep.mubr.f32.mxu0 0.0
      %1341 = vmatmul.mubr.f32.gmra.mrb[0].mxu0 %v1216
      %v1342 = vpop.f32.mrb[0].mxu0
      %v1343 = vadd.f32 0.0, %v1342
      %v1344 = vpop.f32.mrb[0].mxu0
      %v1345 = vadd.f32 0.0, %v1344
      %1346 = vmatprep.mubr.f32.mxu0 0.0
      %1347 = vmatmul.mubr.f32.gmra.mrb[0].mxu0 %v1217
      %v1348 = vpop.f32.mrb[0].mxu0
      %v1349 = vadd.f32 0.0, %v1348
      %v1350 = vpop.f32.mrb[0].mxu0
      %v1351 = vadd.f32 0.0, %v1350
      %1352 = vmatprep.mubr.f32.mxu0 0.0
      %1353 = vmatmul.mubr.f32.gmra.mrb[0].mxu0 %v1218
      %v1354 = vpop.f32.mrb[0].mxu0
      %v1355 = vadd.f32 0.0, %v1354
      %v1356 = vpop.f32.mrb[0].mxu0
      %v1357 = vadd.f32 0.0, %v1356
      %1358 = vdwg.mxu0
      %v1359 = vadd.f32 %v1198, %v1319
      %v1360 = vadd.f32 %v1199, %v1321
      %v1361 = vadd.f32 %v1200, %v1325
      %v1362 = vadd.f32 %v1201, %v1327
      %v1363 = vadd.f32 %v1202, %v1331
      %v1364 = vadd.f32 %v1203, %v1333
      %v1365 = vadd.f32 %v1204, %v1337
      %v1366 = vadd.f32 %v1205, %v1339
      %v1367 = vadd.f32 %v1206, %v1343
      %v1368 = vadd.f32 %v1207, %v1345
      %v1369 = vadd.f32 %v1208, %v1349
      %v1370 = vadd.f32 %v1209, %v1351
      %v1371 = vadd.f32 %v1210, %v1355
      %v1372 = vadd.f32 %v1211, %v1357
      %v1373 = vld [vmem:[%s1] sm:$0x3]
      %v1375 = vlaneseq
      %v1376 = vshrl.u32 %v1375, 7
      %v1377 = vsub.s32 0, %v1376
      %v1378 = vrot.slane %v1373, %v1377
      %v1379 = vlaneseq
      %v1380 = vshrl.u32 %v1379, 7
      %v1381 = vsub.s32 1, %v1380
      %v1382 = vrot.slane %v1373, %v1381
      %v1385 = vadd.f32 %v1359, %v1378
      %v1386 = vadd.f32 %v1360, %v1382
      %v1387 = vadd.f32 %v1361, %v1378
      %v1388 = vadd.f32 %v1362, %v1382
      %v1389 = vadd.f32 %v1363, %v1378
      %v1390 = vadd.f32 %v1364, %v1382
      %v1391 = vadd.f32 %v1365, %v1378
      %v1392 = vadd.f32 %v1366, %v1382
      %v1393 = vadd.f32 %v1367, %v1378
      %v1394 = vadd.f32 %v1368, %v1382
      %v1395 = vadd.f32 %v1369, %v1378
      %v1396 = vadd.f32 %v1370, %v1382
      %v1397 = vadd.f32 %v1371, %v1378
      %v1398 = vadd.f32 %v1372, %v1382
      %v1399 = vtanh.pop %v1385
      %v1400 = vtanh.pop %v1386
      %v1401 = vtanh.pop %v1387
      %v1402 = vtanh.pop %v1388
      %v1403 = vtanh.pop %v1389
      %v1404 = vtanh.pop %v1390
      %v1405 = vtanh.pop %v1391
      %v1406 = vtanh.pop %v1392
      %v1407 = vtanh.pop %v1393
      %v1408 = vtanh.pop %v1394
      %v1409 = vtanh.pop %v1395
      %v1410 = vtanh.pop %v1396
      %v1411 = vtanh.pop %v1397
      %v1412 = vtanh.pop %v1398
      %1413 = vst [vmem:[#allocation2] sm:$0xff] %v1399
      %vm1414 = vcmask 785408
      %1415 = vst.msk [vmem:[#allocation2 + $0x8] sm:$0xff] %vm1414, %v1400
      %1416 = vst [vmem:[#allocation2 + $0x10] sm:$0xff] %v1401
      %1417 = vst.msk [vmem:[#allocation2 + $0x18] sm:$0xff] %vm1414, %v1402
      %1418 = vst [vmem:[#allocation2 + $0x20] sm:$0xff] %v1403
      %1419 = vst.msk [vmem:[#allocation2 + $0x28] sm:$0xff] %vm1414, %v1404
      %1420 = vst [vmem:[#allocation2 + $0x30] sm:$0xff] %v1405
      %1421 = vst.msk [vmem:[#allocation2 + $0x38] sm:$0xff] %vm1414, %v1406
      %1422 = vst [vmem:[#allocation2 + $0x40] sm:$0xff] %v1407
      %1423 = vst.msk [vmem:[#allocation2 + $0x48] sm:$0xff] %vm1414, %v1408
      %1424 = vst [vmem:[#allocation2 + $0x50] sm:$0xff] %v1409
      %1425 = vst.msk [vmem:[#allocation2 + $0x58] sm:$0xff] %vm1414, %v1410
      %1426 = vst [vmem:[#allocation2 + $0x60] sm:$0xff] %v1411
      %1427 = vst.msk [vmem:[#allocation2 + $0x68] sm:$0xff] %vm1414, %v1412
      %v1428 = vld [vmem:[#allocation4 + $0x80] sm:$0xff]
      %v1429 = vld [vmem:[#allocation4 + $0x88] sm:$0xff]
      %v1430 = vld [vmem:[#allocation4 + $0x90] sm:$0xff]
      %v1431 = vld [vmem:[#allocation4 + $0x98] sm:$0xff]
      %v1432 = vld [vmem:[#allocation4 + $0xa0] sm:$0xff]
      %v1433 = vld [vmem:[#allocation4 + $0xa8] sm:$0xff]
      %v1434 = vld [vmem:[#allocation4 + $0xb0] sm:$0xff]
      %v1435 = vld [vmem:[%s0] sm:$0xff]
      %v1436 = vld [vmem:[%s0 + $0x8] sm:$0xff]
      %v1437 = vld [vmem:[%s0 + $0x10] sm:$0xff]
      %v1438 = vld [vmem:[%s0 + $0x18] sm:$0xff]
      %v1439 = vld [vmem:[%s0 + $0x20] sm:$0xff]
      %v1440 = vld [vmem:[%s0 + $0x28] sm:$0xff]
      %v1441 = vld [vmem:[%s0 + $0x30] sm:$0xff]
      %v1442 = vld [vmem:[%s0 + $0x38] sm:$0xff]
      %v1443 = vld [vmem:[%s0 + $0x40] sm:$0xff]
      %v1444 = vld [vmem:[%s0 + $0x48] sm:$0xff]
      %v1445 = vld [vmem:[%s0 + $0x50] sm:$0xff]
      %v1446 = vld [vmem:[%s0 + $0x58] sm:$0xff]
      %v1447 = vld [vmem:[%s0 + $0x60] sm:$0xff]
      %v1448 = vld [vmem:[%s0 + $0x68] sm:$0xff]
      %v1449 = vld [vmem:[%s0 + $0x70] sm:$0xff]
      %v1450 = vld [vmem:[%s0 + $0x78] sm:$0xff]
      %v1451 = vld [vmem:[%s0 + $0x80] sm:$0xff]
      %v1452 = vld [vmem:[%s0 + $0x88] sm:$0xff]
      %v1453 = vld [vmem:[%s0 + $0x90] sm:$0xff]
      %v1454 = vld [vmem:[%s0 + $0x98] sm:$0xff]
      %v1455 = vld [vmem:[%s0 + $0xa0] sm:$0xff]
      %v1456 = vld [vmem:[%s0 + $0xa8] sm:$0xff]
      %v1457 = vld [vmem:[%s0 + $0xb0] sm:$0xff]
      %v1458 = vld [vmem:[%s0 + $0xb8] sm:$0xff]
      %v1459 = vld [vmem:[%s0 + $0xc0] sm:$0xff]
      %v1460 = vld [vmem:[%s0 + $0xc8] sm:$0xff]
      %v1461 = vld [vmem:[%s0 + $0xd0] sm:$0xff]
      %v1462 = vld [vmem:[%s0 + $0xd8] sm:$0xff]
      %v1463 = vld [vmem:[%s0 + $0xe0] sm:$0xff]
      %v1464 = vld [vmem:[%s0 + $0xe8] sm:$0xff]
      %v1465 = vld [vmem:[%s0 + $0xf0] sm:$0xff]
      %v1466 = vld [vmem:[%s0 + $0xf8] sm:$0xff]
      %v1467 = vld [vmem:[#allocation4 + $0xc0] sm:$0xff]
      %v1468 = vld [vmem:[#allocation4 + $0xc8] sm:$0xff]
      %v1469 = vld [vmem:[#allocation4 + $0xd0] sm:$0xff]
      %v1470 = vld [vmem:[#allocation4 + $0xd8] sm:$0xff]
      %v1471 = vld [vmem:[#allocation4 + $0xe0] sm:$0xff]
      %v1472 = vld [vmem:[#allocation4 + $0xe8] sm:$0xff]
      %v1473 = vld [vmem:[#allocation4 + $0xf0] sm:$0xff]
      %v1474 = vld [vmem:[%s643] sm:$0xff]
      %v1475 = vld [vmem:[%s643 + $0x8] sm:$0xff]
      %v1476 = vld [vmem:[%s643 + $0x10] sm:$0xff]
      %v1477 = vld [vmem:[%s643 + $0x18] sm:$0xff]
      %v1478 = vld [vmem:[%s643 + $0x20] sm:$0xff]
      %v1479 = vld [vmem:[%s643 + $0x28] sm:$0xff]
      %v1480 = vld [vmem:[%s643 + $0x30] sm:$0xff]
      %v1481 = vld [vmem:[%s643 + $0x38] sm:$0xff]
      %v1482 = vld [vmem:[%s643 + $0x40] sm:$0xff]
      %v1483 = vld [vmem:[%s643 + $0x48] sm:$0xff]
      %v1484 = vld [vmem:[%s643 + $0x50] sm:$0xff]
      %v1485 = vld [vmem:[%s643 + $0x58] sm:$0xff]
      %v1486 = vld [vmem:[%s643 + $0x60] sm:$0xff]
      %v1487 = vld [vmem:[%s643 + $0x68] sm:$0xff]
      %v1488 = vld [vmem:[%s643 + $0x70] sm:$0xff]
      %v1489 = vld [vmem:[%s643 + $0x78] sm:$0xff]
      %v1490 = vld [vmem:[%s643 + $0x80] sm:$0xff]
      %v1491 = vld [vmem:[%s643 + $0x88] sm:$0xff]
      %v1492 = vld [vmem:[%s643 + $0x90] sm:$0xff]
      %v1493 = vld [vmem:[%s643 + $0x98] sm:$0xff]
      %v1494 = vld [vmem:[%s643 + $0xa0] sm:$0xff]
      %v1495 = vld [vmem:[%s643 + $0xa8] sm:$0xff]
      %v1496 = vld [vmem:[%s643 + $0xb0] sm:$0xff]
      %v1497 = vld [vmem:[%s643 + $0xb8] sm:$0xff]
      %v1498 = vld [vmem:[%s643 + $0xc0] sm:$0xff]
      %v1499 = vld [vmem:[%s643 + $0xc8] sm:$0xff]
      %v1500 = vld [vmem:[%s643 + $0xd0] sm:$0xff]
      %v1501 = vld [vmem:[%s643 + $0xd8] sm:$0xff]
      %v1502 = vld [vmem:[%s643 + $0xe0] sm:$0xff]
      %v1503 = vld [vmem:[%s643 + $0xe8] sm:$0xff]
      %v1504 = vld [vmem:[%s643 + $0xf0] sm:$0xff]
      %v1505 = vld [vmem:[%s643 + $0xf8] sm:$0xff]
      %1506 = vmatprep.subr.mxu0 %v1475
      %1507 = vmatpush1.msra.mxu0 %v1474
      %1508 = vmatprep.subr.mxu0 %v1477
      %1509 = vmatpush1.msra.mxu0 %v1476
      %1510 = vmatprep.subr.mxu0 %v1479
      %1511 = vmatpush1.msra.mxu0 %v1478
      %1512 = vmatprep.subr.mxu0 %v1481
      %1513 = vmatpush1.msra.mxu0 %v1480
      %1514 = vmatprep.subr.mxu0 %v1483
      %1515 = vmatpush1.msra.mxu0 %v1482
      %1516 = vmatprep.subr.mxu0 %v1485
      %1517 = vmatpush1.msra.mxu0 %v1484
      %1518 = vmatprep.subr.mxu0 %v1487
      %1519 = vmatpush1.msra.mxu0 %v1486
      %1520 = vmatprep.subr.mxu0 %v1489
      %1521 = vmatpush1.msra.mxu0 %v1488
      %1522 = vmatprep.subr.mxu0 %v1491
      %1523 = vmatpush1.msra.mxu0 %v1490
      %1524 = vmatprep.subr.mxu0 %v1493
      %1525 = vmatpush1.msra.mxu0 %v1492
      %1526 = vmatprep.subr.mxu0 %v1495
      %1527 = vmatpush1.msra.mxu0 %v1494
      %1528 = vmatprep.subr.mxu0 %v1497
      %1529 = vmatpush1.msra.mxu0 %v1496
      %1530 = vmatprep.subr.mxu0 %v1499
      %1531 = vmatpush1.msra.mxu0 %v1498
      %1532 = vmatprep.subr.mxu0 %v1501
      %1533 = vmatpush1.msra.mxu0 %v1500
      %1534 = vmatprep.subr.mxu0 %v1503
      %1535 = vmatpush1.msra.mxu0 %v1502
      %1536 = vmatprep.subr.mxu0 %v1505
      %1537 = vmatpush1.msra.mxu0 %v1504
      %1538 = vmatprep.subr.mxu0 0.0
      %1539 = vmatpush1.msra.mxu0 0.0
      %1540 = vmatprep.subr.mxu0 0.0
      %1541 = vmatpush1.msra.mxu0 0.0
      %1542 = vmatprep.subr.mxu0 0.0
      %1543 = vmatpush1.msra.mxu0 0.0
      %1544 = vmatprep.subr.mxu0 0.0
      %1545 = vmatpush1.msra.mxu0 0.0
      %1546 = vmatprep.subr.mxu0 0.0
      %1547 = vmatpush1.msra.mxu0 0.0
      %1548 = vmatprep.subr.mxu0 0.0
      %1549 = vmatpush1.msra.mxu0 0.0
      %1550 = vmatprep.subr.mxu0 0.0
      %1551 = vmatpush1.msra.mxu0 0.0
      %1552 = vmatprep.subr.mxu0 0.0
      %1553 = vmatpush1.msra.mxu0 0.0
      %1554 = vmatprep.subr.mxu0 0.0
      %1555 = vmatpush1.msra.mxu0 0.0
      %1556 = vmatprep.subr.mxu0 0.0
      %1557 = vmatpush1.msra.mxu0 0.0
      %1558 = vmatprep.subr.mxu0 0.0
      %1559 = vmatpush1.msra.mxu0 0.0
      %1560 = vmatprep.subr.mxu0 0.0
      %1561 = vmatpush1.msra.mxu0 0.0
      %1562 = vmatprep.subr.mxu0 0.0
      %1563 = vmatpush1.msra.mxu0 0.0
      %1564 = vmatprep.subr.mxu0 0.0
      %1565 = vmatpush1.msra.mxu0 0.0
      %1566 = vmatprep.subr.mxu0 0.0
      %1567 = vmatpush1.msra.mxu0 0.0
      %1568 = vmatprep.subr.mxu0 0.0
      %1569 = vmatpush1.msra.mxu0 0.0
      %1570 = vmatprep.mubr.f32.mxu0 0.0
      %1571 = vmatmul.mubr.f32.gmra.mrb[0].mxu0 %v1467
      %v1572 = vpop.f32.mrb[0].mxu0
      %v1573 = vadd.f32 0.0, %v1572
      %v1574 = vpop.f32.mrb[0].mxu0
      %v1575 = vadd.f32 0.0, %v1574
      %1576 = vmatprep.mubr.f32.mxu0 0.0
      %1577 = vmatmul.mubr.f32.gmra.mrb[0].mxu0 %v1468
      %v1578 = vpop.f32.mrb[0].mxu0
      %v1579 = vadd.f32 0.0, %v1578
      %v1580 = vpop.f32.mrb[0].mxu0
      %v1581 = vadd.f32 0.0, %v1580
      %1582 = vmatprep.mubr.f32.mxu0 0.0
      %1583 = vmatmul.mubr.f32.gmra.mrb[0].mxu0 %v1469
      %v1584 = vpop.f32.mrb[0].mxu0
      %v1585 = vadd.f32 0.0, %v1584
      %v1586 = vpop.f32.mrb[0].mxu0
      %v1587 = vadd.f32 0.0, %v1586
      %1588 = vmatprep.mubr.f32.mxu0 0.0
      %1589 = vmatmul.mubr.f32.gmra.mrb[0].mxu0 %v1470
      %v1590 = vpop.f32.mrb[0].mxu0
      %v1591 = vadd.f32 0.0, %v1590
      %v1592 = vpop.f32.mrb[0].mxu0
      %v1593 = vadd.f32 0.0, %v1592
      %1594 = vmatprep.mubr.f32.mxu0 0.0
      %1595 = vmatmul.mubr.f32.gmra.mrb[0].mxu0 %v1471
      %v1596 = vpop.f32.mrb[0].mxu0
      %v1597 = vadd.f32 0.0, %v1596
      %v1598 = vpop.f32.mrb[0].mxu0
      %v1599 = vadd.f32 0.0, %v1598
      %1600 = vmatprep.mubr.f32.mxu0 0.0
      %1601 = vmatmul.mubr.f32.gmra.mrb[0].mxu0 %v1472
      %v1602 = vpop.f32.mrb[0].mxu0
      %v1603 = vadd.f32 0.0, %v1602
      %v1604 = vpop.f32.mrb[0].mxu0
      %v1605 = vadd.f32 0.0, %v1604
      %1606 = vmatprep.mubr.f32.mxu0 0.0
      %1607 = vmatmul.mubr.f32.gmra.mrb[0].mxu0 %v1473
      %v1608 = vpop.f32.mrb[0].mxu0
      %v1609 = vadd.f32 0.0, %v1608
      %v1610 = vpop.f32.mrb[0].mxu0
      %v1611 = vadd.f32 0.0, %v1610
      %1612 = vdwg.mxu0
      %1613 = vmatprep.subr.mxu0 %v1436
      %1614 = vmatpush1.msra.mxu0 %v1435
      %1615 = vmatprep.subr.mxu0 %v1438
      %1616 = vmatpush1.msra.mxu0 %v1437
      %1617 = vmatprep.subr.mxu0 %v1440
      %1618 = vmatpush1.msra.mxu0 %v1439
      %1619 = vmatprep.subr.mxu0 %v1442
      %1620 = vmatpush1.msra.mxu0 %v1441
      %1621 = vmatprep.subr.mxu0 %v1444
      %1622 = vmatpush1.msra.mxu0 %v1443
      %1623 = vmatprep.subr.mxu0 %v1446
      %1624 = vmatpush1.msra.mxu0 %v1445
      %1625 = vmatprep.subr.mxu0 %v1448
      %1626 = vmatpush1.msra.mxu0 %v1447
      %1627 = vmatprep.subr.mxu0 %v1450
      %1628 = vmatpush1.msra.mxu0 %v1449
      %1629 = vmatprep.subr.mxu0 %v1452
      %1630 = vmatpush1.msra.mxu0 %v1451
      %1631 = vmatprep.subr.mxu0 %v1454
      %1632 = vmatpush1.msra.mxu0 %v1453
      %1633 = vmatprep.subr.mxu0 %v1456
      %1634 = vmatpush1.msra.mxu0 %v1455
      %1635 = vmatprep.subr.mxu0 %v1458
      %1636 = vmatpush1.msra.mxu0 %v1457
      %1637 = vmatprep.subr.mxu0 %v1460
      %1638 = vmatpush1.msra.mxu0 %v1459
      %1639 = vmatprep.subr.mxu0 %v1462
      %1640 = vmatpush1.msra.mxu0 %v1461
      %1641 = vmatprep.subr.mxu0 %v1464
      %1642 = vmatpush1.msra.mxu0 %v1463
      %1643 = vmatprep.subr.mxu0 %v1466
      %1644 = vmatpush1.msra.mxu0 %v1465
      %1645 = vmatprep.subr.mxu0 0.0
      %1646 = vmatpush1.msra.mxu0 0.0
      %1647 = vmatprep.subr.mxu0 0.0
      %1648 = vmatpush1.msra.mxu0 0.0
      %1649 = vmatprep.subr.mxu0 0.0
      %1650 = vmatpush1.msra.mxu0 0.0
      %1651 = vmatprep.subr.mxu0 0.0
      %1652 = vmatpush1.msra.mxu0 0.0
      %1653 = vmatprep.subr.mxu0 0.0
      %1654 = vmatpush1.msra.mxu0 0.0
      %1655 = vmatprep.subr.mxu0 0.0
      %1656 = vmatpush1.msra.mxu0 0.0
      %1657 = vmatprep.subr.mxu0 0.0
      %1658 = vmatpush1.msra.mxu0 0.0
      %1659 = vmatprep.subr.mxu0 0.0
      %1660 = vmatpush1.msra.mxu0 0.0
      %1661 = vmatprep.subr.mxu0 0.0
      %1662 = vmatpush1.msra.mxu0 0.0
      %1663 = vmatprep.subr.mxu0 0.0
      %1664 = vmatpush1.msra.mxu0 0.0
      %1665 = vmatprep.subr.mxu0 0.0
      %1666 = vmatpush1.msra.mxu0 0.0
      %1667 = vmatprep.subr.mxu0 0.0
      %1668 = vmatpush1.msra.mxu0 0.0
      %1669 = vmatprep.subr.mxu0 0.0
      %1670 = vmatpush1.msra.mxu0 0.0
      %1671 = vmatprep.subr.mxu0 0.0
      %1672 = vmatpush1.msra.mxu0 0.0
      %1673 = vmatprep.subr.mxu0 0.0
      %1674 = vmatpush1.msra.mxu0 0.0
      %1675 = vmatprep.subr.mxu0 0.0
      %1676 = vmatpush1.msra.mxu0 0.0
      %1677 = vmatprep.mubr.f32.mxu0 0.0
      %1678 = vmatmul.mubr.f32.gmra.mrb[0].mxu0 %v1428
      %v1679 = vpop.f32.mrb[0].mxu0
      %v1680 = vadd.f32 %v1573, %v1679
      %v1681 = vpop.f32.mrb[0].mxu0
      %v1682 = vadd.f32 %v1575, %v1681
      %1683 = vmatprep.mubr.f32.mxu0 0.0
      %1684 = vmatmul.mubr.f32.gmra.mrb[0].mxu0 %v1429
      %v1685 = vpop.f32.mrb[0].mxu0
      %v1686 = vadd.f32 %v1579, %v1685
      %v1687 = vpop.f32.mrb[0].mxu0
      %v1688 = vadd.f32 %v1581, %v1687
      %1689 = vmatprep.mubr.f32.mxu0 0.0
      %1690 = vmatmul.mubr.f32.gmra.mrb[0].mxu0 %v1430
      %v1691 = vpop.f32.mrb[0].mxu0
      %v1692 = vadd.f32 %v1585, %v1691
      %v1693 = vpop.f32.mrb[0].mxu0
      %v1694 = vadd.f32 %v1587, %v1693
      %1695 = vmatprep.mubr.f32.mxu0 0.0
      %1696 = vmatmul.mubr.f32.gmra.mrb[0].mxu0 %v1431
      %v1697 = vpop.f32.mrb[0].mxu0
      %v1698 = vadd.f32 %v1591, %v1697
      %v1699 = vpop.f32.mrb[0].mxu0
      %v1700 = vadd.f32 %v1593, %v1699
      %1701 = vmatprep.mubr.f32.mxu0 0.0
      %1702 = vmatmul.mubr.f32.gmra.mrb[0].mxu0 %v1432
      %v1703 = vpop.f32.mrb[0].mxu0
      %v1704 = vadd.f32 %v1597, %v1703
      %v1705 = vpop.f32.mrb[0].mxu0
      %v1706 = vadd.f32 %v1599, %v1705
      %1707 = vmatprep.mubr.f32.mxu0 0.0
      %1708 = vmatmul.mubr.f32.gmra.mrb[0].mxu0 %v1433
      %v1709 = vpop.f32.mrb[0].mxu0
      %v1710 = vadd.f32 %v1603, %v1709
      %v1711 = vpop.f32.mrb[0].mxu0
      %v1712 = vadd.f32 %v1605, %v1711
      %1713 = vmatprep.mubr.f32.mxu0 0.0
      %1714 = vmatmul.mubr.f32.gmra.mrb[0].mxu0 %v1434
      %v1715 = vpop.f32.mrb[0].mxu0
      %v1716 = vadd.f32 %v1609, %v1715
      %v1717 = vpop.f32.mrb[0].mxu0
      %v1718 = vadd.f32 %v1611, %v1717
      %1719 = vdwg.mxu0
      %v1720 = vld [vmem:[#allocation4 + $0x8] sm:$0xff]
      %v1721 = vld [vmem:[#allocation4 + $0x10] sm:$0xff]
      %v1722 = vld [vmem:[#allocation4 + $0x18] sm:$0xff]
      %v1723 = vld [vmem:[#allocation4 + $0x20] sm:$0xff]
      %v1724 = vld [vmem:[#allocation4 + $0x28] sm:$0xff]
      %v1725 = vld [vmem:[#allocation4 + $0x30] sm:$0xff]
      %v1726 = vld [vmem:[#allocation4 + $0x38] sm:$0xff]
      %v1727 = vld [vmem:[%s897] sm:$0xff]
      %v1728 = vld [vmem:[%s897 + $0x8] sm:$0xff]
      %v1729 = vld [vmem:[%s897 + $0x10] sm:$0xff]
      %v1730 = vld [vmem:[%s897 + $0x18] sm:$0xff]
      %v1731 = vld [vmem:[%s897 + $0x20] sm:$0xff]
      %v1732 = vld [vmem:[%s897 + $0x28] sm:$0xff]
      %v1733 = vld [vmem:[%s897 + $0x30] sm:$0xff]
      %v1734 = vld [vmem:[%s897 + $0x38] sm:$0xff]
      %v1735 = vld [vmem:[%s897 + $0x40] sm:$0xff]
      %v1736 = vld [vmem:[%s897 + $0x48] sm:$0xff]
      %v1737 = vld [vmem:[%s897 + $0x50] sm:$0xff]
      %v1738 = vld [vmem:[%s897 + $0x58] sm:$0xff]
      %v1739 = vld [vmem:[%s897 + $0x60] sm:$0xff]
      %v1740 = vld [vmem:[%s897 + $0x68] sm:$0xff]
      %v1741 = vld [vmem:[%s897 + $0x70] sm:$0xff]
      %v1742 = vld [vmem:[%s897 + $0x78] sm:$0xff]
      %v1743 = vld [vmem:[%s897 + $0x80] sm:$0xff]
      %v1744 = vld [vmem:[%s897 + $0x88] sm:$0xff]
      %v1745 = vld [vmem:[%s897 + $0x90] sm:$0xff]
      %v1746 = vld [vmem:[%s897 + $0x98] sm:$0xff]
      %v1747 = vld [vmem:[%s897 + $0xa0] sm:$0xff]
      %v1748 = vld [vmem:[%s897 + $0xa8] sm:$0xff]
      %v1749 = vld [vmem:[%s897 + $0xb0] sm:$0xff]
      %v1750 = vld [vmem:[%s897 + $0xb8] sm:$0xff]
      %v1751 = vld [vmem:[%s897 + $0xc0] sm:$0xff]
      %v1752 = vld [vmem:[%s897 + $0xc8] sm:$0xff]
      %v1753 = vld [vmem:[%s897 + $0xd0] sm:$0xff]
      %v1754 = vld [vmem:[%s897 + $0xd8] sm:$0xff]
      %v1755 = vld [vmem:[%s897 + $0xe0] sm:$0xff]
      %v1756 = vld [vmem:[%s897 + $0xe8] sm:$0xff]
      %v1757 = vld [vmem:[%s897 + $0xf0] sm:$0xff]
      %v1758 = vld [vmem:[%s897 + $0xf8] sm:$0xff]
      %1759 = vmatprep.subr.mxu0 %v1728
      %1760 = vmatpush1.msra.mxu0 %v1727
      %1761 = vmatprep.subr.mxu0 %v1730
      %1762 = vmatpush1.msra.mxu0 %v1729
      %1763 = vmatprep.subr.mxu0 %v1732
      %1764 = vmatpush1.msra.mxu0 %v1731
      %1765 = vmatprep.subr.mxu0 %v1734
      %1766 = vmatpush1.msra.mxu0 %v1733
      %1767 = vmatprep.subr.mxu0 %v1736
      %1768 = vmatpush1.msra.mxu0 %v1735
      %1769 = vmatprep.subr.mxu0 %v1738
      %1770 = vmatpush1.msra.mxu0 %v1737
      %1771 = vmatprep.subr.mxu0 %v1740
      %1772 = vmatpush1.msra.mxu0 %v1739
      %1773 = vmatprep.subr.mxu0 %v1742
      %1774 = vmatpush1.msra.mxu0 %v1741
      %1775 = vmatprep.subr.mxu0 %v1744
      %1776 = vmatpush1.msra.mxu0 %v1743
      %1777 = vmatprep.subr.mxu0 %v1746
      %1778 = vmatpush1.msra.mxu0 %v1745
      %1779 = vmatprep.subr.mxu0 %v1748
      %1780 = vmatpush1.msra.mxu0 %v1747
      %1781 = vmatprep.subr.mxu0 %v1750
      %1782 = vmatpush1.msra.mxu0 %v1749
      %1783 = vmatprep.subr.mxu0 %v1752
      %1784 = vmatpush1.msra.mxu0 %v1751
      %1785 = vmatprep.subr.mxu0 %v1754
      %1786 = vmatpush1.msra.mxu0 %v1753
      %1787 = vmatprep.subr.mxu0 %v1756
      %1788 = vmatpush1.msra.mxu0 %v1755
      %1789 = vmatprep.subr.mxu0 %v1758
      %1790 = vmatpush1.msra.mxu0 %v1757
      %1791 = vmatprep.subr.mxu0 0.0
      %1792 = vmatpush1.msra.mxu0 0.0
      %1793 = vmatprep.subr.mxu0 0.0
      %1794 = vmatpush1.msra.mxu0 0.0
      %1795 = vmatprep.subr.mxu0 0.0
      %1796 = vmatpush1.msra.mxu0 0.0
      %1797 = vmatprep.subr.mxu0 0.0
      %1798 = vmatpush1.msra.mxu0 0.0
      %1799 = vmatprep.subr.mxu0 0.0
      %1800 = vmatpush1.msra.mxu0 0.0
      %1801 = vmatprep.subr.mxu0 0.0
      %1802 = vmatpush1.msra.mxu0 0.0
      %1803 = vmatprep.subr.mxu0 0.0
      %1804 = vmatpush1.msra.mxu0 0.0
      %1805 = vmatprep.subr.mxu0 0.0
      %1806 = vmatpush1.msra.mxu0 0.0
      %1807 = vmatprep.subr.mxu0 0.0
      %1808 = vmatpush1.msra.mxu0 0.0
      %1809 = vmatprep.subr.mxu0 0.0
      %1810 = vmatpush1.msra.mxu0 0.0
      %1811 = vmatprep.subr.mxu0 0.0
      %1812 = vmatpush1.msra.mxu0 0.0
      %1813 = vmatprep.subr.mxu0 0.0
      %1814 = vmatpush1.msra.mxu0 0.0
      %1815 = vmatprep.subr.mxu0 0.0
      %1816 = vmatpush1.msra.mxu0 0.0
      %1817 = vmatprep.subr.mxu0 0.0
      %1818 = vmatpush1.msra.mxu0 0.0
      %1819 = vmatprep.subr.mxu0 0.0
      %1820 = vmatpush1.msra.mxu0 0.0
      %1821 = vmatprep.subr.mxu0 0.0
      %1822 = vmatpush1.msra.mxu0 0.0
      %1823 = vmatprep.mubr.f32.mxu0 0.0
      %1824 = vmatmul.mubr.f32.gmra.mrb[0].mxu0 %v1720
      %v1825 = vpop.f32.mrb[0].mxu0
      %v1826 = vadd.f32 0.0, %v1825
      %v1827 = vpop.f32.mrb[0].mxu0
      %v1828 = vadd.f32 0.0, %v1827
      %1829 = vmatprep.mubr.f32.mxu0 0.0
      %1830 = vmatmul.mubr.f32.gmra.mrb[0].mxu0 %v1721
      %v1831 = vpop.f32.mrb[0].mxu0
      %v1832 = vadd.f32 0.0, %v1831
      %v1833 = vpop.f32.mrb[0].mxu0
      %v1834 = vadd.f32 0.0, %v1833
      %1835 = vmatprep.mubr.f32.mxu0 0.0
      %1836 = vmatmul.mubr.f32.gmra.mrb[0].mxu0 %v1722
      %v1837 = vpop.f32.mrb[0].mxu0
      %v1838 = vadd.f32 0.0, %v1837
      %v1839 = vpop.f32.mrb[0].mxu0
      %v1840 = vadd.f32 0.0, %v1839
      %1841 = vmatprep.mubr.f32.mxu0 0.0
      %1842 = vmatmul.mubr.f32.gmra.mrb[0].mxu0 %v1723
      %v1843 = vpop.f32.mrb[0].mxu0
      %v1844 = vadd.f32 0.0, %v1843
      %v1845 = vpop.f32.mrb[0].mxu0
      %v1846 = vadd.f32 0.0, %v1845
      %1847 = vmatprep.mubr.f32.mxu0 0.0
      %1848 = vmatmul.mubr.f32.gmra.mrb[0].mxu0 %v1724
      %v1849 = vpop.f32.mrb[0].mxu0
      %v1850 = vadd.f32 0.0, %v1849
      %v1851 = vpop.f32.mrb[0].mxu0
      %v1852 = vadd.f32 0.0, %v1851
      %1853 = vmatprep.mubr.f32.mxu0 0.0
      %1854 = vmatmul.mubr.f32.gmra.mrb[0].mxu0 %v1725
      %v1855 = vpop.f32.mrb[0].mxu0
      %v1856 = vadd.f32 0.0, %v1855
      %v1857 = vpop.f32.mrb[0].mxu0
      %v1858 = vadd.f32 0.0, %v1857
      %1859 = vmatprep.mubr.f32.mxu0 0.0
      %1860 = vmatmul.mubr.f32.gmra.mrb[0].mxu0 %v1726
      %v1861 = vpop.f32.mrb[0].mxu0
      %v1862 = vadd.f32 0.0, %v1861
      %v1863 = vpop.f32.mrb[0].mxu0
      %v1864 = vadd.f32 0.0, %v1863
      %1865 = vdwg.mxu0
      %v1866 = vadd.f32 %v1680, %v1826
      %v1867 = vadd.f32 %v1682, %v1828
      %v1868 = vadd.f32 %v1686, %v1832
      %v1869 = vadd.f32 %v1688, %v1834
      %v1870 = vadd.f32 %v1692, %v1838
      %v1871 = vadd.f32 %v1694, %v1840
      %v1872 = vadd.f32 %v1698, %v1844
      %v1873 = vadd.f32 %v1700, %v1846
      %v1874 = vadd.f32 %v1704, %v1850
      %v1875 = vadd.f32 %v1706, %v1852
      %v1876 = vadd.f32 %v1710, %v1856
      %v1877 = vadd.f32 %v1712, %v1858
      %v1878 = vadd.f32 %v1716, %v1862
      %v1879 = vadd.f32 %v1718, %v1864
      %v1880 = vld [vmem:[#allocation4 + $0x48] sm:$0xff]
      %v1881 = vld [vmem:[#allocation4 + $0x50] sm:$0xff]
      %v1882 = vld [vmem:[#allocation4 + $0x58] sm:$0xff]
      %v1883 = vld [vmem:[#allocation4 + $0x60] sm:$0xff]
      %v1884 = vld [vmem:[#allocation4 + $0x68] sm:$0xff]
      %v1885 = vld [vmem:[#allocation4 + $0x70] sm:$0xff]
      %v1886 = vld [vmem:[#allocation4 + $0x78] sm:$0xff]
      %v1887 = vld [vmem:[%s1058] sm:$0xff]
      %v1888 = vld [vmem:[%s1058 + $0x8] sm:$0xff]
      %v1889 = vld [vmem:[%s1058 + $0x10] sm:$0xff]
      %v1890 = vld [vmem:[%s1058 + $0x18] sm:$0xff]
      %v1891 = vld [vmem:[%s1058 + $0x20] sm:$0xff]
      %v1892 = vld [vmem:[%s1058 + $0x28] sm:$0xff]
      %v1893 = vld [vmem:[%s1058 + $0x30] sm:$0xff]
      %v1894 = vld [vmem:[%s1058 + $0x38] sm:$0xff]
      %v1895 = vld [vmem:[%s1058 + $0x40] sm:$0xff]
      %v1896 = vld [vmem:[%s1058 + $0x48] sm:$0xff]
      %v1897 = vld [vmem:[%s1058 + $0x50] sm:$0xff]
      %v1898 = vld [vmem:[%s1058 + $0x58] sm:$0xff]
      %v1899 = vld [vmem:[%s1058 + $0x60] sm:$0xff]
      %v1900 = vld [vmem:[%s1058 + $0x68] sm:$0xff]
      %v1901 = vld [vmem:[%s1058 + $0x70] sm:$0xff]
      %v1902 = vld [vmem:[%s1058 + $0x78] sm:$0xff]
      %v1903 = vld [vmem:[%s1058 + $0x80] sm:$0xff]
      %v1904 = vld [vmem:[%s1058 + $0x88] sm:$0xff]
      %v1905 = vld [vmem:[%s1058 + $0x90] sm:$0xff]
      %v1906 = vld [vmem:[%s1058 + $0x98] sm:$0xff]
      %v1907 = vld [vmem:[%s1058 + $0xa0] sm:$0xff]
      %v1908 = vld [vmem:[%s1058 + $0xa8] sm:$0xff]
      %v1909 = vld [vmem:[%s1058 + $0xb0] sm:$0xff]
      %v1910 = vld [vmem:[%s1058 + $0xb8] sm:$0xff]
      %v1911 = vld [vmem:[%s1058 + $0xc0] sm:$0xff]
      %v1912 = vld [vmem:[%s1058 + $0xc8] sm:$0xff]
      %v1913 = vld [vmem:[%s1058 + $0xd0] sm:$0xff]
      %v1914 = vld [vmem:[%s1058 + $0xd8] sm:$0xff]
      %v1915 = vld [vmem:[%s1058 + $0xe0] sm:$0xff]
      %v1916 = vld [vmem:[%s1058 + $0xe8] sm:$0xff]
      %v1917 = vld [vmem:[%s1058 + $0xf0] sm:$0xff]
      %v1918 = vld [vmem:[%s1058 + $0xf8] sm:$0xff]
      %1919 = vmatprep.subr.mxu0 %v1888
      %1920 = vmatpush1.msra.mxu0 %v1887
      %1921 = vmatprep.subr.mxu0 %v1890
      %1922 = vmatpush1.msra.mxu0 %v1889
      %1923 = vmatprep.subr.mxu0 %v1892
      %1924 = vmatpush1.msra.mxu0 %v1891
      %1925 = vmatprep.subr.mxu0 %v1894
      %1926 = vmatpush1.msra.mxu0 %v1893
      %1927 = vmatprep.subr.mxu0 %v1896
      %1928 = vmatpush1.msra.mxu0 %v1895
      %1929 = vmatprep.subr.mxu0 %v1898
      %1930 = vmatpush1.msra.mxu0 %v1897
      %1931 = vmatprep.subr.mxu0 %v1900
      %1932 = vmatpush1.msra.mxu0 %v1899
      %1933 = vmatprep.subr.mxu0 %v1902
      %1934 = vmatpush1.msra.mxu0 %v1901
      %1935 = vmatprep.subr.mxu0 %v1904
      %1936 = vmatpush1.msra.mxu0 %v1903
      %1937 = vmatprep.subr.mxu0 %v1906
      %1938 = vmatpush1.msra.mxu0 %v1905
      %1939 = vmatprep.subr.mxu0 %v1908
      %1940 = vmatpush1.msra.mxu0 %v1907
      %1941 = vmatprep.subr.mxu0 %v1910
      %1942 = vmatpush1.msra.mxu0 %v1909
      %1943 = vmatprep.subr.mxu0 %v1912
      %1944 = vmatpush1.msra.mxu0 %v1911
      %1945 = vmatprep.subr.mxu0 %v1914
      %1946 = vmatpush1.msra.mxu0 %v1913
      %1947 = vmatprep.subr.mxu0 %v1916
      %1948 = vmatpush1.msra.mxu0 %v1915
      %1949 = vmatprep.subr.mxu0 %v1918
      %1950 = vmatpush1.msra.mxu0 %v1917
      %1951 = vmatprep.subr.mxu0 0.0
      %1952 = vmatpush1.msra.mxu0 0.0
      %1953 = vmatprep.subr.mxu0 0.0
      %1954 = vmatpush1.msra.mxu0 0.0
      %1955 = vmatprep.subr.mxu0 0.0
      %1956 = vmatpush1.msra.mxu0 0.0
      %1957 = vmatprep.subr.mxu0 0.0
      %1958 = vmatpush1.msra.mxu0 0.0
      %1959 = vmatprep.subr.mxu0 0.0
      %1960 = vmatpush1.msra.mxu0 0.0
      %1961 = vmatprep.subr.mxu0 0.0
      %1962 = vmatpush1.msra.mxu0 0.0
      %1963 = vmatprep.subr.mxu0 0.0
      %1964 = vmatpush1.msra.mxu0 0.0
      %1965 = vmatprep.subr.mxu0 0.0
      %1966 = vmatpush1.msra.mxu0 0.0
      %1967 = vmatprep.subr.mxu0 0.0
      %1968 = vmatpush1.msra.mxu0 0.0
      %1969 = vmatprep.subr.mxu0 0.0
      %1970 = vmatpush1.msra.mxu0 0.0
      %1971 = vmatprep.subr.mxu0 0.0
      %1972 = vmatpush1.msra.mxu0 0.0
      %1973 = vmatprep.subr.mxu0 0.0
      %1974 = vmatpush1.msra.mxu0 0.0
      %1975 = vmatprep.subr.mxu0 0.0
      %1976 = vmatpush1.msra.mxu0 0.0
      %1977 = vmatprep.subr.mxu0 0.0
      %1978 = vmatpush1.msra.mxu0 0.0
      %1979 = vmatprep.subr.mxu0 0.0
      %1980 = vmatpush1.msra.mxu0 0.0
      %1981 = vmatprep.subr.mxu0 0.0
      %1982 = vmatpush1.msra.mxu0 0.0
      %1983 = vmatprep.mubr.f32.mxu0 0.0
      %1984 = vmatmul.mubr.f32.gmra.mrb[0].mxu0 %v1880
      %v1985 = vpop.f32.mrb[0].mxu0
      %v1986 = vadd.f32 0.0, %v1985
      %v1987 = vpop.f32.mrb[0].mxu0
      %v1988 = vadd.f32 0.0, %v1987
      %1989 = vmatprep.mubr.f32.mxu0 0.0
      %1990 = vmatmul.mubr.f32.gmra.mrb[0].mxu0 %v1881
      %v1991 = vpop.f32.mrb[0].mxu0
      %v1992 = vadd.f32 0.0, %v1991
      %v1993 = vpop.f32.mrb[0].mxu0
      %v1994 = vadd.f32 0.0, %v1993
      %1995 = vmatprep.mubr.f32.mxu0 0.0
      %1996 = vmatmul.mubr.f32.gmra.mrb[0].mxu0 %v1882
      %v1997 = vpop.f32.mrb[0].mxu0
      %v1998 = vadd.f32 0.0, %v1997
      %v1999 = vpop.f32.mrb[0].mxu0
      %v2000 = vadd.f32 0.0, %v1999
      %2001 = vmatprep.mubr.f32.mxu0 0.0
      %2002 = vmatmul.mubr.f32.gmra.mrb[0].mxu0 %v1883
      %v2003 = vpop.f32.mrb[0].mxu0
      %v2004 = vadd.f32 0.0, %v2003
      %v2005 = vpop.f32.mrb[0].mxu0
      %v2006 = vadd.f32 0.0, %v2005
      %2007 = vmatprep.mubr.f32.mxu0 0.0
      %2008 = vmatmul.mubr.f32.gmra.mrb[0].mxu0 %v1884
      %v2009 = vpop.f32.mrb[0].mxu0
      %v2010 = vadd.f32 0.0, %v2009
      %v2011 = vpop.f32.mrb[0].mxu0
      %v2012 = vadd.f32 0.0, %v2011
      %2013 = vmatprep.mubr.f32.mxu0 0.0
      %2014 = vmatmul.mubr.f32.gmra.mrb[0].mxu0 %v1885
      %v2015 = vpop.f32.mrb[0].mxu0
      %v2016 = vadd.f32 0.0, %v2015
      %v2017 = vpop.f32.mrb[0].mxu0
      %v2018 = vadd.f32 0.0, %v2017
      %2019 = vmatprep.mubr.f32.mxu0 0.0
      %2020 = vmatmul.mubr.f32.gmra.mrb[0].mxu0 %v1886
      %v2021 = vpop.f32.mrb[0].mxu0
      %v2022 = vadd.f32 0.0, %v2021
      %v2023 = vpop.f32.mrb[0].mxu0
      %v2024 = vadd.f32 0.0, %v2023
      %2025 = vdwg.mxu0
      %v2026 = vadd.f32 %v1866, %v1986
      %v2027 = vadd.f32 %v1867, %v1988
      %v2028 = vadd.f32 %v1868, %v1992
      %v2029 = vadd.f32 %v1869, %v1994
      %v2030 = vadd.f32 %v1870, %v1998
      %v2031 = vadd.f32 %v1871, %v2000
      %v2032 = vadd.f32 %v1872, %v2004
      %v2033 = vadd.f32 %v1873, %v2006
      %v2034 = vadd.f32 %v1874, %v2010
      %v2035 = vadd.f32 %v1875, %v2012
      %v2036 = vadd.f32 %v1876, %v2016
      %v2037 = vadd.f32 %v1877, %v2018
      %v2038 = vadd.f32 %v1878, %v2022
      %v2039 = vadd.f32 %v1879, %v2024
      %v2040 = vld [vmem:[#allocation4 + $0x88] sm:$0xff]
      %v2041 = vld [vmem:[#allocation4 + $0x90] sm:$0xff]
      %v2042 = vld [vmem:[#allocation4 + $0x98] sm:$0xff]
      %v2043 = vld [vmem:[#allocation4 + $0xa0] sm:$0xff]
      %v2044 = vld [vmem:[#allocation4 + $0xa8] sm:$0xff]
      %v2045 = vld [vmem:[#allocation4 + $0xb0] sm:$0xff]
      %v2046 = vld [vmem:[#allocation4 + $0xb8] sm:$0xff]
      %v2047 = vld [vmem:[%s1219] sm:$0xff]
      %v2048 = vld [vmem:[%s1219 + $0x8] sm:$0xff]
      %v2049 = vld [vmem:[%s1219 + $0x10] sm:$0xff]
      %v2050 = vld [vmem:[%s1219 + $0x18] sm:$0xff]
      %v2051 = vld [vmem:[%s1219 + $0x20] sm:$0xff]
      %v2052 = vld [vmem:[%s1219 + $0x28] sm:$0xff]
      %v2053 = vld [vmem:[%s1219 + $0x30] sm:$0xff]
      %v2054 = vld [vmem:[%s1219 + $0x38] sm:$0xff]
      %v2055 = vld [vmem:[%s1219 + $0x40] sm:$0xff]
      %v2056 = vld [vmem:[%s1219 + $0x48] sm:$0xff]
      %v2057 = vld [vmem:[%s1219 + $0x50] sm:$0xff]
      %v2058 = vld [vmem:[%s1219 + $0x58] sm:$0xff]
      %v2059 = vld [vmem:[%s1219 + $0x60] sm:$0xff]
      %v2060 = vld [vmem:[%s1219 + $0x68] sm:$0xff]
      %v2061 = vld [vmem:[%s1219 + $0x70] sm:$0xff]
      %v2062 = vld [vmem:[%s1219 + $0x78] sm:$0xff]
      %v2063 = vld [vmem:[%s1219 + $0x80] sm:$0xff]
      %v2064 = vld [vmem:[%s1219 + $0x88] sm:$0xff]
      %v2065 = vld [vmem:[%s1219 + $0x90] sm:$0xff]
      %v2066 = vld [vmem:[%s1219 + $0x98] sm:$0xff]
      %v2067 = vld [vmem:[%s1219 + $0xa0] sm:$0xff]
      %v2068 = vld [vmem:[%s1219 + $0xa8] sm:$0xff]
      %v2069 = vld [vmem:[%s1219 + $0xb0] sm:$0xff]
      %v2070 = vld [vmem:[%s1219 + $0xb8] sm:$0xff]
      %v2071 = vld [vmem:[%s1219 + $0xc0] sm:$0xff]
      %v2072 = vld [vmem:[%s1219 + $0xc8] sm:$0xff]
      %v2073 = vld [vmem:[%s1219 + $0xd0] sm:$0xff]
      %v2074 = vld [vmem:[%s1219 + $0xd8] sm:$0xff]
      %v2075 = vld [vmem:[%s1219 + $0xe0] sm:$0xff]
      %v2076 = vld [vmem:[%s1219 + $0xe8] sm:$0xff]
      %v2077 = vld [vmem:[%s1219 + $0xf0] sm:$0xff]
      %v2078 = vld [vmem:[%s1219 + $0xf8] sm:$0xff]
      %2079 = vmatprep.subr.mxu0 %v2048
      %2080 = vmatpush1.msra.mxu0 %v2047
      %2081 = vmatprep.subr.mxu0 %v2050
      %2082 = vmatpush1.msra.mxu0 %v2049
      %2083 = vmatprep.subr.mxu0 %v2052
      %2084 = vmatpush1.msra.mxu0 %v2051
      %2085 = vmatprep.subr.mxu0 %v2054
      %2086 = vmatpush1.msra.mxu0 %v2053
      %2087 = vmatprep.subr.mxu0 %v2056
      %2088 = vmatpush1.msra.mxu0 %v2055
      %2089 = vmatprep.subr.mxu0 %v2058
      %2090 = vmatpush1.msra.mxu0 %v2057
      %2091 = vmatprep.subr.mxu0 %v2060
      %2092 = vmatpush1.msra.mxu0 %v2059
      %2093 = vmatprep.subr.mxu0 %v2062
      %2094 = vmatpush1.msra.mxu0 %v2061
      %2095 = vmatprep.subr.mxu0 %v2064
      %2096 = vmatpush1.msra.mxu0 %v2063
      %2097 = vmatprep.subr.mxu0 %v2066
      %2098 = vmatpush1.msra.mxu0 %v2065
      %2099 = vmatprep.subr.mxu0 %v2068
      %2100 = vmatpush1.msra.mxu0 %v2067
      %2101 = vmatprep.subr.mxu0 %v2070
      %2102 = vmatpush1.msra.mxu0 %v2069
      %2103 = vmatprep.subr.mxu0 %v2072
      %2104 = vmatpush1.msra.mxu0 %v2071
      %2105 = vmatprep.subr.mxu0 %v2074
      %2106 = vmatpush1.msra.mxu0 %v2073
      %2107 = vmatprep.subr.mxu0 %v2076
      %2108 = vmatpush1.msra.mxu0 %v2075
      %2109 = vmatprep.subr.mxu0 %v2078
      %2110 = vmatpush1.msra.mxu0 %v2077
      %2111 = vmatprep.subr.mxu0 0.0
      %2112 = vmatpush1.msra.mxu0 0.0
      %2113 = vmatprep.subr.mxu0 0.0
      %2114 = vmatpush1.msra.mxu0 0.0
      %2115 = vmatprep.subr.mxu0 0.0
      %2116 = vmatpush1.msra.mxu0 0.0
      %2117 = vmatprep.subr.mxu0 0.0
      %2118 = vmatpush1.msra.mxu0 0.0
      %2119 = vmatprep.subr.mxu0 0.0
      %2120 = vmatpush1.msra.mxu0 0.0
      %2121 = vmatprep.subr.mxu0 0.0
      %2122 = vmatpush1.msra.mxu0 0.0
      %2123 = vmatprep.subr.mxu0 0.0
      %2124 = vmatpush1.msra.mxu0 0.0
      %2125 = vmatprep.subr.mxu0 0.0
      %2126 = vmatpush1.msra.mxu0 0.0
      %2127 = vmatprep.subr.mxu0 0.0
      %2128 = vmatpush1.msra.mxu0 0.0
      %2129 = vmatprep.subr.mxu0 0.0
      %2130 = vmatpush1.msra.mxu0 0.0
      %2131 = vmatprep.subr.mxu0 0.0
      %2132 = vmatpush1.msra.mxu0 0.0
      %2133 = vmatprep.subr.mxu0 0.0
      %2134 = vmatpush1.msra.mxu0 0.0
      %2135 = vmatprep.subr.mxu0 0.0
      %2136 = vmatpush1.msra.mxu0 0.0
      %2137 = vmatprep.subr.mxu0 0.0
      %2138 = vmatpush1.msra.mxu0 0.0
      %2139 = vmatprep.subr.mxu0 0.0
      %2140 = vmatpush1.msra.mxu0 0.0
      %2141 = vmatprep.subr.mxu0 0.0
      %2142 = vmatpush1.msra.mxu0 0.0
      %2143 = vmatprep.mubr.f32.mxu0 0.0
      %2144 = vmatmul.mubr.f32.gmra.mrb[0].mxu0 %v2040
      %v2145 = vpop.f32.mrb[0].mxu0
      %v2146 = vadd.f32 0.0, %v2145
      %v2147 = vpop.f32.mrb[0].mxu0
      %v2148 = vadd.f32 0.0, %v2147
      %2149 = vmatprep.mubr.f32.mxu0 0.0
      %2150 = vmatmul.mubr.f32.gmra.mrb[0].mxu0 %v2041
      %v2151 = vpop.f32.mrb[0].mxu0
      %v2152 = vadd.f32 0.0, %v2151
      %v2153 = vpop.f32.mrb[0].mxu0
      %v2154 = vadd.f32 0.0, %v2153
      %2155 = vmatprep.mubr.f32.mxu0 0.0
      %2156 = vmatmul.mubr.f32.gmra.mrb[0].mxu0 %v2042
      %v2157 = vpop.f32.mrb[0].mxu0
      %v2158 = vadd.f32 0.0, %v2157
      %v2159 = vpop.f32.mrb[0].mxu0
      %v2160 = vadd.f32 0.0, %v2159
      %2161 = vmatprep.mubr.f32.mxu0 0.0
      %2162 = vmatmul.mubr.f32.gmra.mrb[0].mxu0 %v2043
      %v2163 = vpop.f32.mrb[0].mxu0
      %v2164 = vadd.f32 0.0, %v2163
      %v2165 = vpop.f32.mrb[0].mxu0
      %v2166 = vadd.f32 0.0, %v2165
      %2167 = vmatprep.mubr.f32.mxu0 0.0
      %2168 = vmatmul.mubr.f32.gmra.mrb[0].mxu0 %v2044
      %v2169 = vpop.f32.mrb[0].mxu0
      %v2170 = vadd.f32 0.0, %v2169
      %v2171 = vpop.f32.mrb[0].mxu0
      %v2172 = vadd.f32 0.0, %v2171
      %2173 = vmatprep.mubr.f32.mxu0 0.0
      %2174 = vmatmul.mubr.f32.gmra.mrb[0].mxu0 %v2045
      %v2175 = vpop.f32.mrb[0].mxu0
      %v2176 = vadd.f32 0.0, %v2175
      %v2177 = vpop.f32.mrb[0].mxu0
      %v2178 = vadd.f32 0.0, %v2177
      %2179 = vmatprep.mubr.f32.mxu0 0.0
      %2180 = vmatmul.mubr.f32.gmra.mrb[0].mxu0 %v2046
      %v2181 = vpop.f32.mrb[0].mxu0
      %v2182 = vadd.f32 0.0, %v2181
      %v2183 = vpop.f32.mrb[0].mxu0
      %v2184 = vadd.f32 0.0, %v2183
      %2185 = vdwg.mxu0
      %v2186 = vadd.f32 %v2026, %v2146
      %v2187 = vadd.f32 %v2027, %v2148
      %v2188 = vadd.f32 %v2028, %v2152
      %v2189 = vadd.f32 %v2029, %v2154
      %v2190 = vadd.f32 %v2030, %v2158
      %v2191 = vadd.f32 %v2031, %v2160
      %v2192 = vadd.f32 %v2032, %v2164
      %v2193 = vadd.f32 %v2033, %v2166
      %v2194 = vadd.f32 %v2034, %v2170
      %v2195 = vadd.f32 %v2035, %v2172
      %v2196 = vadd.f32 %v2036, %v2176
      %v2197 = vadd.f32 %v2037, %v2178
      %v2198 = vadd.f32 %v2038, %v2182
      %v2199 = vadd.f32 %v2039, %v2184
      %v2200 = vld [vmem:[%s1] sm:$0x3]
      %v2202 = vlaneseq
      %v2203 = vshrl.u32 %v2202, 7
      %v2204 = vsub.s32 0, %v2203
      %v2205 = vrot.slane %v2200, %v2204
      %v2206 = vlaneseq
      %v2207 = vshrl.u32 %v2206, 7
      %v2208 = vsub.s32 1, %v2207
      %v2209 = vrot.slane %v2200, %v2208
      %v2212 = vadd.f32 %v2186, %v2205
      %v2213 = vadd.f32 %v2187, %v2209
      %v2214 = vadd.f32 %v2188, %v2205
      %v2215 = vadd.f32 %v2189, %v2209
      %v2216 = vadd.f32 %v2190, %v2205
      %v2217 = vadd.f32 %v2191, %v2209
      %v2218 = vadd.f32 %v2192, %v2205
      %v2219 = vadd.f32 %v2193, %v2209
      %v2220 = vadd.f32 %v2194, %v2205
      %v2221 = vadd.f32 %v2195, %v2209
      %v2222 = vadd.f32 %v2196, %v2205
      %v2223 = vadd.f32 %v2197, %v2209
      %v2224 = vadd.f32 %v2198, %v2205
      %v2225 = vadd.f32 %v2199, %v2209
      %v2226 = vtanh.pop %v2212
      %v2227 = vtanh.pop %v2213
      %v2228 = vtanh.pop %v2214
      %v2229 = vtanh.pop %v2215
      %v2230 = vtanh.pop %v2216
      %v2231 = vtanh.pop %v2217
      %v2232 = vtanh.pop %v2218
      %v2233 = vtanh.pop %v2219
      %v2234 = vtanh.pop %v2220
      %v2235 = vtanh.pop %v2221
      %v2236 = vtanh.pop %v2222
      %v2237 = vtanh.pop %v2223
      %v2238 = vtanh.pop %v2224
      %v2239 = vtanh.pop %v2225
      %2240 = vst [vmem:[#allocation2 + $0x70] sm:$0xff] %v2226
      %2241 = vst.msk [vmem:[#allocation2 + $0x78] sm:$0xff] %vm1414, %v2227
      %2242 = vst [vmem:[#allocation2 + $0x80] sm:$0xff] %v2228
      %2243 = vst.msk [vmem:[#allocation2 + $0x88] sm:$0xff] %vm1414, %v2229
      %2244 = vst [vmem:[#allocation2 + $0x90] sm:$0xff] %v2230
      %2245 = vst.msk [vmem:[#allocation2 + $0x98] sm:$0xff] %vm1414, %v2231
      %2246 = vst [vmem:[#allocation2 + $0xa0] sm:$0xff] %v2232
      %2247 = vst.msk [vmem:[#allocation2 + $0xa8] sm:$0xff] %vm1414, %v2233
      %2248 = vst [vmem:[#allocation2 + $0xb0] sm:$0xff] %v2234
      %2249 = vst.msk [vmem:[#allocation2 + $0xb8] sm:$0xff] %vm1414, %v2235
      %2250 = vst [vmem:[#allocation2 + $0xc0] sm:$0xff] %v2236
      %2251 = vst.msk [vmem:[#allocation2 + $0xc8] sm:$0xff] %vm1414, %v2237
      %2252 = vst [vmem:[#allocation2 + $0xd0] sm:$0xff] %v2238
      %2253 = vst.msk [vmem:[#allocation2 + $0xd8] sm:$0xff] %vm1414, %v2239
      %v2254 = vld [vmem:[#allocation2] sm:$0xff]
      %v2255 = vld [vmem:[#allocation2 + $0x8] sm:$0xff]
      %v2256 = vld [vmem:[#allocation2 + $0x10] sm:$0xff]
      %v2257 = vld [vmem:[#allocation2 + $0x18] sm:$0xff]
      %v2258 = vld [vmem:[#allocation2 + $0x20] sm:$0xff]
      %v2259 = vld [vmem:[#allocation2 + $0x28] sm:$0xff]
      %v2260 = vld [vmem:[#allocation2 + $0x30] sm:$0xff]
      %v2261 = vld [vmem:[#allocation2 + $0x38] sm:$0xff]
      %v2262 = vld [vmem:[#allocation2 + $0x40] sm:$0xff]
      %v2263 = vld [vmem:[#allocation2 + $0x48] sm:$0xff]
      %v2264 = vld [vmem:[%s2] sm:$0xff]
      %v2265 = vld [vmem:[%s2 + $0x8] sm:$0xff]
      %v2266 = vld [vmem:[%s2 + $0x10] sm:$0xff]
      %v2267 = vld [vmem:[%s2 + $0x18] sm:$0xff]
      %v2268 = vld [vmem:[%s2 + $0x20] sm:$0xff]
      %v2269 = vld [vmem:[%s2 + $0x28] sm:$0xff]
      %v2270 = vld [vmem:[%s2 + $0x30] sm:$0xff]
      %v2271 = vld [vmem:[%s2 + $0x38] sm:$0xff]
      %v2272 = vld [vmem:[%s2 + $0x40] sm:$0xff]
      %v2273 = vld [vmem:[%s2 + $0x48] sm:$0xff]
      %v2274 = vld [vmem:[%s2 + $0x50] sm:$0xff]
      %v2275 = vld [vmem:[%s2 + $0x58] sm:$0xff]
      %v2276 = vld [vmem:[%s2 + $0x60] sm:$0xff]
      %v2277 = vld [vmem:[%s2 + $0x68] sm:$0xff]
      %v2278 = vld [vmem:[%s2 + $0x70] sm:$0xff]
      %v2279 = vld [vmem:[%s2 + $0x78] sm:$0xff]
      %v2280 = vld [vmem:[%s2 + $0x80] sm:$0xff]
      %v2281 = vld [vmem:[%s2 + $0x88] sm:$0xff]
      %v2282 = vld [vmem:[%s2 + $0x90] sm:$0xff]
      %v2283 = vld [vmem:[%s2 + $0x98] sm:$0xff]
      %v2284 = vld [vmem:[%s2 + $0xa0] sm:$0xff]
      %v2285 = vld [vmem:[%s2 + $0xa8] sm:$0xff]
      %v2286 = vld [vmem:[%s2 + $0xb0] sm:$0xff]
      %v2287 = vld [vmem:[%s2 + $0xb8] sm:$0xff]
      %v2288 = vld [vmem:[%s2 + $0xc0] sm:$0xff]
      %v2289 = vld [vmem:[%s2 + $0xc8] sm:$0xff]
      %v2290 = vld [vmem:[%s2 + $0xd0] sm:$0xff]
      %v2291 = vld [vmem:[%s2 + $0xd8] sm:$0xff]
      %v2292 = vld [vmem:[%s2 + $0xe0] sm:$0xff]
      %v2293 = vld [vmem:[%s2 + $0xe8] sm:$0xff]
      %v2294 = vld [vmem:[%s2 + $0xf0] sm:$0xff]
      %v2295 = vld [vmem:[%s2 + $0xf8] sm:$0xff]
      %v2296 = vld [vmem:[%s2 + $0x100] sm:$0xff]
      %v2297 = vld [vmem:[%s2 + $0x108] sm:$0xff]
      %v2298 = vld [vmem:[%s2 + $0x110] sm:$0xff]
      %v2299 = vld [vmem:[%s2 + $0x118] sm:$0xff]
      %v2300 = vld [vmem:[%s2 + $0x120] sm:$0xff]
      %v2301 = vld [vmem:[%s2 + $0x128] sm:$0xff]
      %v2302 = vld [vmem:[%s2 + $0x130] sm:$0xff]
      %v2303 = vld [vmem:[%s2 + $0x138] sm:$0xff]
      %v2304 = vld [vmem:[%s2 + $0x140] sm:$0xff]
      %v2305 = vld [vmem:[%s2 + $0x148] sm:$0xff]
      %v2306 = vld [vmem:[%s2 + $0x150] sm:$0xff]
      %v2307 = vld [vmem:[%s2 + $0x158] sm:$0xff]
      %v2308 = vld [vmem:[%s2 + $0x160] sm:$0xff]
      %v2309 = vld [vmem:[%s2 + $0x168] sm:$0xff]
      %v2310 = vld [vmem:[%s2 + $0x170] sm:$0xff]
      %v2311 = vld [vmem:[%s2 + $0x178] sm:$0xff]
      %v2312 = vld [vmem:[%s2 + $0x180] sm:$0xff]
      %v2313 = vld [vmem:[%s2 + $0x188] sm:$0xff]
      %v2314 = vld [vmem:[%s2 + $0x190] sm:$0xff]
      %v2315 = vld [vmem:[%s2 + $0x198] sm:$0xff]
      %v2316 = vld [vmem:[%s2 + $0x1a0] sm:$0xff]
      %v2317 = vld [vmem:[%s2 + $0x1a8] sm:$0xff]
      %v2318 = vld [vmem:[%s2 + $0x1b0] sm:$0xff]
      %v2319 = vld [vmem:[%s2 + $0x1b8] sm:$0xff]
      %v2320 = vld [vmem:[#allocation2 + $0x70] sm:$0xff]
      %v2321 = vld [vmem:[#allocation2 + $0x78] sm:$0xff]
      %v2322 = vld [vmem:[#allocation2 + $0x80] sm:$0xff]
      %v2323 = vld [vmem:[#allocation2 + $0x88] sm:$0xff]
      %v2324 = vld [vmem:[#allocation2 + $0x90] sm:$0xff]
      %v2325 = vld [vmem:[#allocation2 + $0x98] sm:$0xff]
      %v2326 = vld [vmem:[#allocation2 + $0xa0] sm:$0xff]
      %v2327 = vld [vmem:[#allocation2 + $0xa8] sm:$0xff]
      %v2328 = vld [vmem:[#allocation2 + $0xb0] sm:$0xff]
      %v2329 = vld [vmem:[#allocation2 + $0xb8] sm:$0xff]
      %s2330 = scalar_lea.vmem %s2, 448
      %v2331 = vld [vmem:[%s2330] sm:$0xff]
      %v2332 = vld [vmem:[%s2330 + $0x8] sm:$0xff]
      %v2333 = vld [vmem:[%s2330 + $0x10] sm:$0xff]
      %v2334 = vld [vmem:[%s2330 + $0x18] sm:$0xff]
      %v2335 = vld [vmem:[%s2330 + $0x20] sm:$0xff]
      %v2336 = vld [vmem:[%s2330 + $0x28] sm:$0xff]
      %v2337 = vld [vmem:[%s2330 + $0x30] sm:$0xff]
      %v2338 = vld [vmem:[%s2330 + $0x38] sm:$0xff]
      %v2339 = vld [vmem:[%s2330 + $0x40] sm:$0xff]
      %v2340 = vld [vmem:[%s2330 + $0x48] sm:$0xff]
      %v2341 = vld [vmem:[%s2330 + $0x50] sm:$0xff]
      %v2342 = vld [vmem:[%s2330 + $0x58] sm:$0xff]
      %v2343 = vld [vmem:[%s2330 + $0x60] sm:$0xff]
      %v2344 = vld [vmem:[%s2330 + $0x68] sm:$0xff]
      %v2345 = vld [vmem:[%s2330 + $0x70] sm:$0xff]
      %v2346 = vld [vmem:[%s2330 + $0x78] sm:$0xff]
      %v2347 = vld [vmem:[%s2330 + $0x80] sm:$0xff]
      %v2348 = vld [vmem:[%s2330 + $0x88] sm:$0xff]
      %v2349 = vld [vmem:[%s2330 + $0x90] sm:$0xff]
      %v2350 = vld [vmem:[%s2330 + $0x98] sm:$0xff]
      %v2351 = vld [vmem:[%s2330 + $0xa0] sm:$0xff]
      %v2352 = vld [vmem:[%s2330 + $0xa8] sm:$0xff]
      %v2353 = vld [vmem:[%s2330 + $0xb0] sm:$0xff]
      %v2354 = vld [vmem:[%s2330 + $0xb8] sm:$0xff]
      %v2355 = vld [vmem:[%s2330 + $0xc0] sm:$0xff]
      %v2356 = vld [vmem:[%s2330 + $0xc8] sm:$0xff]
      %v2357 = vld [vmem:[%s2330 + $0xd0] sm:$0xff]
      %v2358 = vld [vmem:[%s2330 + $0xd8] sm:$0xff]
      %v2359 = vld [vmem:[%s2330 + $0xe0] sm:$0xff]
      %v2360 = vld [vmem:[%s2330 + $0xe8] sm:$0xff]
      %v2361 = vld [vmem:[%s2330 + $0xf0] sm:$0xff]
      %v2362 = vld [vmem:[%s2330 + $0xf8] sm:$0xff]
      %v2363 = vld [vmem:[%s2330 + $0x100] sm:$0xff]
      %v2364 = vld [vmem:[%s2330 + $0x108] sm:$0xff]
      %v2365 = vld [vmem:[%s2330 + $0x110] sm:$0xff]
      %v2366 = vld [vmem:[%s2330 + $0x118] sm:$0xff]
      %v2367 = vld [vmem:[%s2330 + $0x120] sm:$0xff]
      %v2368 = vld [vmem:[%s2330 + $0x128] sm:$0xff]
      %v2369 = vld [vmem:[%s2330 + $0x130] sm:$0xff]
      %v2370 = vld [vmem:[%s2330 + $0x138] sm:$0xff]
      %v2371 = vld [vmem:[%s2330 + $0x140] sm:$0xff]
      %v2372 = vld [vmem:[%s2330 + $0x148] sm:$0xff]
      %v2373 = vld [vmem:[%s2330 + $0x150] sm:$0xff]
      %v2374 = vld [vmem:[%s2330 + $0x158] sm:$0xff]
      %v2375 = vld [vmem:[%s2330 + $0x160] sm:$0xff]
      %v2376 = vld [vmem:[%s2330 + $0x168] sm:$0xff]
      %v2377 = vld [vmem:[%s2330 + $0x170] sm:$0xff]
      %v2378 = vld [vmem:[%s2330 + $0x178] sm:$0xff]
      %v2379 = vld [vmem:[%s2330 + $0x180] sm:$0xff]
      %v2380 = vld [vmem:[%s2330 + $0x188] sm:$0xff]
      %v2381 = vld [vmem:[%s2330 + $0x190] sm:$0xff]
      %v2382 = vld [vmem:[%s2330 + $0x198] sm:$0xff]
      %v2383 = vld [vmem:[%s2330 + $0x1a0] sm:$0xff]
      %v2384 = vld [vmem:[%s2330 + $0x1a8] sm:$0xff]
      %v2385 = vld [vmem:[%s2330 + $0x1b0] sm:$0xff]
      %v2386 = vld [vmem:[%s2330 + $0x1b8] sm:$0xff]
      %v2388 = vsel %vm1414, %v2321, 0
      %v2391 = vsel %vm1414, %v2323, 0
      %v2394 = vsel %vm1414, %v2325, 0
      %v2397 = vsel %vm1414, %v2327, 0
      %v2400 = vsel %vm1414, %v2329, 0
      %2402 = vmatprep.subr.mxu0 %v2332
      %2403 = vmatpush1.msra.mxu0 %v2331
      %2404 = vmatprep.subr.mxu0 %v2334
      %2405 = vmatpush1.msra.mxu0 %v2333
      %2406 = vmatprep.subr.mxu0 %v2336
      %2407 = vmatpush1.msra.mxu0 %v2335
      %2408 = vmatprep.subr.mxu0 %v2338
      %2409 = vmatpush1.msra.mxu0 %v2337
      %2410 = vmatprep.subr.mxu0 %v2340
      %2411 = vmatpush1.msra.mxu0 %v2339
      %2412 = vmatprep.subr.mxu0 %v2342
      %2413 = vmatpush1.msra.mxu0 %v2341
      %2414 = vmatprep.subr.mxu0 %v2344
      %2415 = vmatpush1.msra.mxu0 %v2343
      %2416 = vmatprep.subr.mxu0 %v2346
      %2417 = vmatpush1.msra.mxu0 %v2345
      %2418 = vmatprep.subr.mxu0 %v2348
      %2419 = vmatpush1.msra.mxu0 %v2347
      %2420 = vmatprep.subr.mxu0 %v2350
      %2421 = vmatpush1.msra.mxu0 %v2349
      %2422 = vmatprep.subr.mxu0 %v2352
      %2423 = vmatpush1.msra.mxu0 %v2351
      %2424 = vmatprep.subr.mxu0 %v2354
      %2425 = vmatpush1.msra.mxu0 %v2353
      %2426 = vmatprep.subr.mxu0 %v2356
      %2427 = vmatpush1.msra.mxu0 %v2355
      %2428 = vmatprep.subr.mxu0 %v2358
      %2429 = vmatpush1.msra.mxu0 %v2357
      %2430 = vmatprep.subr.mxu0 %v2360
      %2431 = vmatpush1.msra.mxu0 %v2359
      %2432 = vmatprep.subr.mxu0 %v2362
      %2433 = vmatpush1.msra.mxu0 %v2361
      %2434 = vmatprep.subr.mxu0 %v2364
      %2435 = vmatpush1.msra.mxu0 %v2363
      %2436 = vmatprep.subr.mxu0 %v2366
      %2437 = vmatpush1.msra.mxu0 %v2365
      %2438 = vmatprep.subr.mxu0 %v2368
      %2439 = vmatpush1.msra.mxu0 %v2367
      %2440 = vmatprep.subr.mxu0 %v2370
      %2441 = vmatpush1.msra.mxu0 %v2369
      %2442 = vmatprep.subr.mxu0 %v2372
      %2443 = vmatpush1.msra.mxu0 %v2371
      %2444 = vmatprep.subr.mxu0 %v2374
      %2445 = vmatpush1.msra.mxu0 %v2373
      %2446 = vmatprep.subr.mxu0 %v2376
      %2447 = vmatpush1.msra.mxu0 %v2375
      %2448 = vmatprep.subr.mxu0 %v2378
      %2449 = vmatpush1.msra.mxu0 %v2377
      %2450 = vmatprep.subr.mxu0 %v2380
      %2451 = vmatpush1.msra.mxu0 %v2379
      %2452 = vmatprep.subr.mxu0 %v2382
      %2453 = vmatpush1.msra.mxu0 %v2381
      %2454 = vmatprep.subr.mxu0 %v2384
      %2455 = vmatpush1.msra.mxu0 %v2383
      %2456 = vmatprep.subr.mxu0 %v2386
      %2457 = vmatpush1.msra.mxu0 %v2385
      %2458 = vmatprep.subr.mxu0 0.0
      %2459 = vmatpush1.msra.mxu0 0.0
      %2460 = vmatprep.subr.mxu0 0.0
      %2461 = vmatpush1.msra.mxu0 0.0
      %2462 = vmatprep.subr.mxu0 0.0
      %2463 = vmatpush1.msra.mxu0 0.0
      %2464 = vmatprep.subr.mxu0 0.0
      %2465 = vmatpush1.msra.mxu0 0.0
      %2466 = vmatprep.mubr.f32.mxu0 %v2388
      %2467 = vmatmul.mubr.f32.gmra.mrb[0].mxu0 %v2320
      %v2468 = vpop.f32.mrb[0].mxu0
      %v2469 = vadd.f32 0.0, %v2468
      %v2470 = vpop.f32.mrb[0].mxu0
      %v2471 = vadd.f32 0.0, %v2470
      %2472 = vmatprep.mubr.f32.mxu0 %v2391
      %2473 = vmatmul.mubr.f32.gmra.mrb[0].mxu0 %v2322
      %v2474 = vpop.f32.mrb[0].mxu0
      %v2475 = vadd.f32 0.0, %v2474
      %v2476 = vpop.f32.mrb[0].mxu0
      %v2477 = vadd.f32 0.0, %v2476
      %2478 = vmatprep.mubr.f32.mxu0 %v2394
      %2479 = vmatmul.mubr.f32.gmra.mrb[0].mxu0 %v2324
      %v2480 = vpop.f32.mrb[0].mxu0
      %v2481 = vadd.f32 0.0, %v2480
      %v2482 = vpop.f32.mrb[0].mxu0
      %v2483 = vadd.f32 0.0, %v2482
      %2484 = vmatprep.mubr.f32.mxu0 %v2397
      %2485 = vmatmul.mubr.f32.gmra.mrb[0].mxu0 %v2326
      %v2486 = vpop.f32.mrb[0].mxu0
      %v2487 = vadd.f32 0.0, %v2486
      %v2488 = vpop.f32.mrb[0].mxu0
      %v2489 = vadd.f32 0.0, %v2488
      %2490 = vmatprep.mubr.f32.mxu0 %v2400
      %2491 = vmatmul.mubr.f32.gmra.mrb[0].mxu0 %v2328
      %v2492 = vpop.f32.mrb[0].mxu0
      %v2493 = vadd.f32 0.0, %v2492
      %v2494 = vpop.f32.mrb[0].mxu0
      %v2495 = vadd.f32 0.0, %v2494
      %2496 = vdwg.mxu0
      %v2498 = vsel %vm1414, %v2255, 0
      %v2501 = vsel %vm1414, %v2257, 0
      %v2504 = vsel %vm1414, %v2259, 0
      %v2507 = vsel %vm1414, %v2261, 0
      %v2510 = vsel %vm1414, %v2263, 0
      %2512 = vmatprep.subr.mxu0 %v2265
      %2513 = vmatpush1.msra.mxu0 %v2264
      %2514 = vmatprep.subr.mxu0 %v2267
      %2515 = vmatpush1.msra.mxu0 %v2266
      %2516 = vmatprep.subr.mxu0 %v2269
      %2517 = vmatpush1.msra.mxu0 %v2268
      %2518 = vmatprep.subr.mxu0 %v2271
      %2519 = vmatpush1.msra.mxu0 %v2270
      %2520 = vmatprep.subr.mxu0 %v2273
      %2521 = vmatpush1.msra.mxu0 %v2272
      %2522 = vmatprep.subr.mxu0 %v2275
      %2523 = vmatpush1.msra.mxu0 %v2274
      %2524 = vmatprep.subr.mxu0 %v2277
      %2525 = vmatpush1.msra.mxu0 %v2276
      %2526 = vmatprep.subr.mxu0 %v2279
      %2527 = vmatpush1.msra.mxu0 %v2278
      %2528 = vmatprep.subr.mxu0 %v2281
      %2529 = vmatpush1.msra.mxu0 %v2280
      %2530 = vmatprep.subr.mxu0 %v2283
      %2531 = vmatpush1.msra.mxu0 %v2282
      %2532 = vmatprep.subr.mxu0 %v2285
      %2533 = vmatpush1.msra.mxu0 %v2284
      %2534 = vmatprep.subr.mxu0 %v2287
      %2535 = vmatpush1.msra.mxu0 %v2286
      %2536 = vmatprep.subr.mxu0 %v2289
      %2537 = vmatpush1.msra.mxu0 %v2288
      %2538 = vmatprep.subr.mxu0 %v2291
      %2539 = vmatpush1.msra.mxu0 %v2290
      %2540 = vmatprep.subr.mxu0 %v2293
      %2541 = vmatpush1.msra.mxu0 %v2292
      %2542 = vmatprep.subr.mxu0 %v2295
      %2543 = vmatpush1.msra.mxu0 %v2294
      %2544 = vmatprep.subr.mxu0 %v2297
      %2545 = vmatpush1.msra.mxu0 %v2296
      %2546 = vmatprep.subr.mxu0 %v2299
      %2547 = vmatpush1.msra.mxu0 %v2298
      %2548 = vmatprep.subr.mxu0 %v2301
      %2549 = vmatpush1.msra.mxu0 %v2300
      %2550 = vmatprep.subr.mxu0 %v2303
      %2551 = vmatpush1.msra.mxu0 %v2302
      %2552 = vmatprep.subr.mxu0 %v2305
      %2553 = vmatpush1.msra.mxu0 %v2304
      %2554 = vmatprep.subr.mxu0 %v2307
      %2555 = vmatpush1.msra.mxu0 %v2306
      %2556 = vmatprep.subr.mxu0 %v2309
      %2557 = vmatpush1.msra.mxu0 %v2308
      %2558 = vmatprep.subr.mxu0 %v2311
      %2559 = vmatpush1.msra.mxu0 %v2310
      %2560 = vmatprep.subr.mxu0 %v2313
      %2561 = vmatpush1.msra.mxu0 %v2312
      %2562 = vmatprep.subr.mxu0 %v2315
      %2563 = vmatpush1.msra.mxu0 %v2314
      %2564 = vmatprep.subr.mxu0 %v2317
      %2565 = vmatpush1.msra.mxu0 %v2316
      %2566 = vmatprep.subr.mxu0 %v2319
      %2567 = vmatpush1.msra.mxu0 %v2318
      %2568 = vmatprep.subr.mxu0 0.0
      %2569 = vmatpush1.msra.mxu0 0.0
      %2570 = vmatprep.subr.mxu0 0.0
      %2571 = vmatpush1.msra.mxu0 0.0
      %2572 = vmatprep.subr.mxu0 0.0
      %2573 = vmatpush1.msra.mxu0 0.0
      %2574 = vmatprep.subr.mxu0 0.0
      %2575 = vmatpush1.msra.mxu0 0.0
      %2576 = vmatprep.mubr.f32.mxu0 %v2498
      %2577 = vmatmul.mubr.f32.gmra.mrb[0].mxu0 %v2254
      %v2578 = vpop.f32.mrb[0].mxu0
      %v2579 = vadd.f32 %v2469, %v2578
      %v2580 = vpop.f32.mrb[0].mxu0
      %v2581 = vadd.f32 %v2471, %v2580
      %2582 = vmatprep.mubr.f32.mxu0 %v2501
      %2583 = vmatmul.mubr.f32.gmra.mrb[0].mxu0 %v2256
      %v2584 = vpop.f32.mrb[0].mxu0
      %v2585 = vadd.f32 %v2475, %v2584
      %v2586 = vpop.f32.mrb[0].mxu0
      %v2587 = vadd.f32 %v2477, %v2586
      %2588 = vmatprep.mubr.f32.mxu0 %v2504
      %2589 = vmatmul.mubr.f32.gmra.mrb[0].mxu0 %v2258
      %v2590 = vpop.f32.mrb[0].mxu0
      %v2591 = vadd.f32 %v2481, %v2590
      %v2592 = vpop.f32.mrb[0].mxu0
      %v2593 = vadd.f32 %v2483, %v2592
      %2594 = vmatprep.mubr.f32.mxu0 %v2507
      %2595 = vmatmul.mubr.f32.gmra.mrb[0].mxu0 %v2260
      %v2596 = vpop.f32.mrb[0].mxu0
      %v2597 = vadd.f32 %v2487, %v2596
      %v2598 = vpop.f32.mrb[0].mxu0
      %v2599 = vadd.f32 %v2489, %v2598
      %2600 = vmatprep.mubr.f32.mxu0 %v2510
      %2601 = vmatmul.mubr.f32.gmra.mrb[0].mxu0 %v2262
      %v2602 = vpop.f32.mrb[0].mxu0
      %v2603 = vadd.f32 %v2493, %v2602
      %v2604 = vpop.f32.mrb[0].mxu0
      %v2605 = vadd.f32 %v2495, %v2604
      %2606 = vdwg.mxu0
      %v2607 = vld [vmem:[#allocation2 + $0x10] sm:$0xff]
      %v2608 = vld [vmem:[#allocation2 + $0x18] sm:$0xff]
      %v2609 = vld [vmem:[#allocation2 + $0x20] sm:$0xff]
      %v2610 = vld [vmem:[#allocation2 + $0x28] sm:$0xff]
      %v2611 = vld [vmem:[#allocation2 + $0x30] sm:$0xff]
      %v2612 = vld [vmem:[#allocation2 + $0x38] sm:$0xff]
      %v2613 = vld [vmem:[#allocation2 + $0x40] sm:$0xff]
      %v2614 = vld [vmem:[#allocation2 + $0x48] sm:$0xff]
      %v2615 = vld [vmem:[#allocation2 + $0x50] sm:$0xff]
      %v2616 = vld [vmem:[#allocation2 + $0x58] sm:$0xff]
      %s2617 = scalar_lea.vmem %s2, 896
      %v2618 = vld [vmem:[%s2617] sm:$0xff]
      %v2619 = vld [vmem:[%s2617 + $0x8] sm:$0xff]
      %v2620 = vld [vmem:[%s2617 + $0x10] sm:$0xff]
      %v2621 = vld [vmem:[%s2617 + $0x18] sm:$0xff]
      %v2622 = vld [vmem:[%s2617 + $0x20] sm:$0xff]
      %v2623 = vld [vmem:[%s2617 + $0x28] sm:$0xff]
      %v2624 = vld [vmem:[%s2617 + $0x30] sm:$0xff]
      %v2625 = vld [vmem:[%s2617 + $0x38] sm:$0xff]
      %v2626 = vld [vmem:[%s2617 + $0x40] sm:$0xff]
      %v2627 = vld [vmem:[%s2617 + $0x48] sm:$0xff]
      %v2628 = vld [vmem:[%s2617 + $0x50] sm:$0xff]
      %v2629 = vld [vmem:[%s2617 + $0x58] sm:$0xff]
      %v2630 = vld [vmem:[%s2617 + $0x60] sm:$0xff]
      %v2631 = vld [vmem:[%s2617 + $0x68] sm:$0xff]
      %v2632 = vld [vmem:[%s2617 + $0x70] sm:$0xff]
      %v2633 = vld [vmem:[%s2617 + $0x78] sm:$0xff]
      %v2634 = vld [vmem:[%s2617 + $0x80] sm:$0xff]
      %v2635 = vld [vmem:[%s2617 + $0x88] sm:$0xff]
      %v2636 = vld [vmem:[%s2617 + $0x90] sm:$0xff]
      %v2637 = vld [vmem:[%s2617 + $0x98] sm:$0xff]
      %v2638 = vld [vmem:[%s2617 + $0xa0] sm:$0xff]
      %v2639 = vld [vmem:[%s2617 + $0xa8] sm:$0xff]
      %v2640 = vld [vmem:[%s2617 + $0xb0] sm:$0xff]
      %v2641 = vld [vmem:[%s2617 + $0xb8] sm:$0xff]
      %v2642 = vld [vmem:[%s2617 + $0xc0] sm:$0xff]
      %v2643 = vld [vmem:[%s2617 + $0xc8] sm:$0xff]
      %v2644 = vld [vmem:[%s2617 + $0xd0] sm:$0xff]
      %v2645 = vld [vmem:[%s2617 + $0xd8] sm:$0xff]
      %v2646 = vld [vmem:[%s2617 + $0xe0] sm:$0xff]
      %v2647 = vld [vmem:[%s2617 + $0xe8] sm:$0xff]
      %v2648 = vld [vmem:[%s2617 + $0xf0] sm:$0xff]
      %v2649 = vld [vmem:[%s2617 + $0xf8] sm:$0xff]
      %v2650 = vld [vmem:[%s2617 + $0x100] sm:$0xff]
      %v2651 = vld [vmem:[%s2617 + $0x108] sm:$0xff]
      %v2652 = vld [vmem:[%s2617 + $0x110] sm:$0xff]
      %v2653 = vld [vmem:[%s2617 + $0x118] sm:$0xff]
      %v2654 = vld [vmem:[%s2617 + $0x120] sm:$0xff]
      %v2655 = vld [vmem:[%s2617 + $0x128] sm:$0xff]
      %v2656 = vld [vmem:[%s2617 + $0x130] sm:$0xff]
      %v2657 = vld [vmem:[%s2617 + $0x138] sm:$0xff]
      %v2658 = vld [vmem:[%s2617 + $0x140] sm:$0xff]
      %v2659 = vld [vmem:[%s2617 + $0x148] sm:$0xff]
      %v2660 = vld [vmem:[%s2617 + $0x150] sm:$0xff]
      %v2661 = vld [vmem:[%s2617 + $0x158] sm:$0xff]
      %v2662 = vld [vmem:[%s2617 + $0x160] sm:$0xff]
      %v2663 = vld [vmem:[%s2617 + $0x168] sm:$0xff]
      %v2664 = vld [vmem:[%s2617 + $0x170] sm:$0xff]
      %v2665 = vld [vmem:[%s2617 + $0x178] sm:$0xff]
      %v2666 = vld [vmem:[%s2617 + $0x180] sm:$0xff]
      %v2667 = vld [vmem:[%s2617 + $0x188] sm:$0xff]
      %v2668 = vld [vmem:[%s2617 + $0x190] sm:$0xff]
      %v2669 = vld [vmem:[%s2617 + $0x198] sm:$0xff]
      %v2670 = vld [vmem:[%s2617 + $0x1a0] sm:$0xff]
      %v2671 = vld [vmem:[%s2617 + $0x1a8] sm:$0xff]
      %v2672 = vld [vmem:[%s2617 + $0x1b0] sm:$0xff]
      %v2673 = vld [vmem:[%s2617 + $0x1b8] sm:$0xff]
      %v2675 = vsel %vm1414, %v2608, 0
      %v2678 = vsel %vm1414, %v2610, 0
      %v2681 = vsel %vm1414, %v2612, 0
      %v2684 = vsel %vm1414, %v2614, 0
      %v2687 = vsel %vm1414, %v2616, 0
      %2689 = vmatprep.subr.mxu0 %v2619
      %2690 = vmatpush1.msra.mxu0 %v2618
      %2691 = vmatprep.subr.mxu0 %v2621
      %2692 = vmatpush1.msra.mxu0 %v2620
      %2693 = vmatprep.subr.mxu0 %v2623
      %2694 = vmatpush1.msra.mxu0 %v2622
      %2695 = vmatprep.subr.mxu0 %v2625
      %2696 = vmatpush1.msra.mxu0 %v2624
      %2697 = vmatprep.subr.mxu0 %v2627
      %2698 = vmatpush1.msra.mxu0 %v2626
      %2699 = vmatprep.subr.mxu0 %v2629
      %2700 = vmatpush1.msra.mxu0 %v2628
      %2701 = vmatprep.subr.mxu0 %v2631
      %2702 = vmatpush1.msra.mxu0 %v2630
      %2703 = vmatprep.subr.mxu0 %v2633
      %2704 = vmatpush1.msra.mxu0 %v2632
      %2705 = vmatprep.subr.mxu0 %v2635
      %2706 = vmatpush1.msra.mxu0 %v2634
      %2707 = vmatprep.subr.mxu0 %v2637
      %2708 = vmatpush1.msra.mxu0 %v2636
      %2709 = vmatprep.subr.mxu0 %v2639
      %2710 = vmatpush1.msra.mxu0 %v2638
      %2711 = vmatprep.subr.mxu0 %v2641
      %2712 = vmatpush1.msra.mxu0 %v2640
      %2713 = vmatprep.subr.mxu0 %v2643
      %2714 = vmatpush1.msra.mxu0 %v2642
      %2715 = vmatprep.subr.mxu0 %v2645
      %2716 = vmatpush1.msra.mxu0 %v2644
      %2717 = vmatprep.subr.mxu0 %v2647
      %2718 = vmatpush1.msra.mxu0 %v2646
      %2719 = vmatprep.subr.mxu0 %v2649
      %2720 = vmatpush1.msra.mxu0 %v2648
      %2721 = vmatprep.subr.mxu0 %v2651
      %2722 = vmatpush1.msra.mxu0 %v2650
      %2723 = vmatprep.subr.mxu0 %v2653
      %2724 = vmatpush1.msra.mxu0 %v2652
      %2725 = vmatprep.subr.mxu0 %v2655
      %2726 = vmatpush1.msra.mxu0 %v2654
      %2727 = vmatprep.subr.mxu0 %v2657
      %2728 = vmatpush1.msra.mxu0 %v2656
      %2729 = vmatprep.subr.mxu0 %v2659
      %2730 = vmatpush1.msra.mxu0 %v2658
      %2731 = vmatprep.subr.mxu0 %v2661
      %2732 = vmatpush1.msra.mxu0 %v2660
      %2733 = vmatprep.subr.mxu0 %v2663
      %2734 = vmatpush1.msra.mxu0 %v2662
      %2735 = vmatprep.subr.mxu0 %v2665
      %2736 = vmatpush1.msra.mxu0 %v2664
      %2737 = vmatprep.subr.mxu0 %v2667
      %2738 = vmatpush1.msra.mxu0 %v2666
      %2739 = vmatprep.subr.mxu0 %v2669
      %2740 = vmatpush1.msra.mxu0 %v2668
      %2741 = vmatprep.subr.mxu0 %v2671
      %2742 = vmatpush1.msra.mxu0 %v2670
      %2743 = vmatprep.subr.mxu0 %v2673
      %2744 = vmatpush1.msra.mxu0 %v2672
      %2745 = vmatprep.subr.mxu0 0.0
      %2746 = vmatpush1.msra.mxu0 0.0
      %2747 = vmatprep.subr.mxu0 0.0
      %2748 = vmatpush1.msra.mxu0 0.0
      %2749 = vmatprep.subr.mxu0 0.0
      %2750 = vmatpush1.msra.mxu0 0.0
      %2751 = vmatprep.subr.mxu0 0.0
      %2752 = vmatpush1.msra.mxu0 0.0
      %2753 = vmatprep.mubr.f32.mxu0 %v2675
      %2754 = vmatmul.mubr.f32.gmra.mrb[0].mxu0 %v2607
      %v2755 = vpop.f32.mrb[0].mxu0
      %v2756 = vadd.f32 0.0, %v2755
      %v2757 = vpop.f32.mrb[0].mxu0
      %v2758 = vadd.f32 0.0, %v2757
      %2759 = vmatprep.mubr.f32.mxu0 %v2678
      %2760 = vmatmul.mubr.f32.gmra.mrb[0].mxu0 %v2609
      %v2761 = vpop.f32.mrb[0].mxu0
      %v2762 = vadd.f32 0.0, %v2761
      %v2763 = vpop.f32.mrb[0].mxu0
      %v2764 = vadd.f32 0.0, %v2763
      %2765 = vmatprep.mubr.f32.mxu0 %v2681
      %2766 = vmatmul.mubr.f32.gmra.mrb[0].mxu0 %v2611
      %v2767 = vpop.f32.mrb[0].mxu0
      %v2768 = vadd.f32 0.0, %v2767
      %v2769 = vpop.f32.mrb[0].mxu0
      %v2770 = vadd.f32 0.0, %v2769
      %2771 = vmatprep.mubr.f32.mxu0 %v2684
      %2772 = vmatmul.mubr.f32.gmra.mrb[0].mxu0 %v2613
      %v2773 = vpop.f32.mrb[0].mxu0
      %v2774 = vadd.f32 0.0, %v2773
      %v2775 = vpop.f32.mrb[0].mxu0
      %v2776 = vadd.f32 0.0, %v2775
      %2777 = vmatprep.mubr.f32.mxu0 %v2687
      %2778 = vmatmul.mubr.f32.gmra.mrb[0].mxu0 %v2615
      %v2779 = vpop.f32.mrb[0].mxu0
      %v2780 = vadd.f32 0.0, %v2779
      %v2781 = vpop.f32.mrb[0].mxu0
      %v2782 = vadd.f32 0.0, %v2781
      %2783 = vdwg.mxu0
      %v2784 = vadd.f32 %v2579, %v2756
      %v2785 = vadd.f32 %v2581, %v2758
      %v2786 = vadd.f32 %v2585, %v2762
      %v2787 = vadd.f32 %v2587, %v2764
      %v2788 = vadd.f32 %v2591, %v2768
      %v2789 = vadd.f32 %v2593, %v2770
      %v2790 = vadd.f32 %v2597, %v2774
      %v2791 = vadd.f32 %v2599, %v2776
      %v2792 = vadd.f32 %v2603, %v2780
      %v2793 = vadd.f32 %v2605, %v2782
      %v2794 = vld [vmem:[#allocation2 + $0x80] sm:$0xff]
      %v2795 = vld [vmem:[#allocation2 + $0x88] sm:$0xff]
      %v2796 = vld [vmem:[#allocation2 + $0x90] sm:$0xff]
      %v2797 = vld [vmem:[#allocation2 + $0x98] sm:$0xff]
      %v2798 = vld [vmem:[#allocation2 + $0xa0] sm:$0xff]
      %v2799 = vld [vmem:[#allocation2 + $0xa8] sm:$0xff]
      %v2800 = vld [vmem:[#allocation2 + $0xb0] sm:$0xff]
      %v2801 = vld [vmem:[#allocation2 + $0xb8] sm:$0xff]
      %v2802 = vld [vmem:[#allocation2 + $0xc0] sm:$0xff]
      %v2803 = vld [vmem:[#allocation2 + $0xc8] sm:$0xff]
      %s2804 = scalar_lea.vmem %s2, 1344
      %v2805 = vld [vmem:[%s2804] sm:$0xff]
      %v2806 = vld [vmem:[%s2804 + $0x8] sm:$0xff]
      %v2807 = vld [vmem:[%s2804 + $0x10] sm:$0xff]
      %v2808 = vld [vmem:[%s2804 + $0x18] sm:$0xff]
      %v2809 = vld [vmem:[%s2804 + $0x20] sm:$0xff]
      %v2810 = vld [vmem:[%s2804 + $0x28] sm:$0xff]
      %v2811 = vld [vmem:[%s2804 + $0x30] sm:$0xff]
      %v2812 = vld [vmem:[%s2804 + $0x38] sm:$0xff]
      %v2813 = vld [vmem:[%s2804 + $0x40] sm:$0xff]
      %v2814 = vld [vmem:[%s2804 + $0x48] sm:$0xff]
      %v2815 = vld [vmem:[%s2804 + $0x50] sm:$0xff]
      %v2816 = vld [vmem:[%s2804 + $0x58] sm:$0xff]
      %v2817 = vld [vmem:[%s2804 + $0x60] sm:$0xff]
      %v2818 = vld [vmem:[%s2804 + $0x68] sm:$0xff]
      %v2819 = vld [vmem:[%s2804 + $0x70] sm:$0xff]
      %v2820 = vld [vmem:[%s2804 + $0x78] sm:$0xff]
      %v2821 = vld [vmem:[%s2804 + $0x80] sm:$0xff]
      %v2822 = vld [vmem:[%s2804 + $0x88] sm:$0xff]
      %v2823 = vld [vmem:[%s2804 + $0x90] sm:$0xff]
      %v2824 = vld [vmem:[%s2804 + $0x98] sm:$0xff]
      %v2825 = vld [vmem:[%s2804 + $0xa0] sm:$0xff]
      %v2826 = vld [vmem:[%s2804 + $0xa8] sm:$0xff]
      %v2827 = vld [vmem:[%s2804 + $0xb0] sm:$0xff]
      %v2828 = vld [vmem:[%s2804 + $0xb8] sm:$0xff]
      %v2829 = vld [vmem:[%s2804 + $0xc0] sm:$0xff]
      %v2830 = vld [vmem:[%s2804 + $0xc8] sm:$0xff]
      %v2831 = vld [vmem:[%s2804 + $0xd0] sm:$0xff]
      %v2832 = vld [vmem:[%s2804 + $0xd8] sm:$0xff]
      %v2833 = vld [vmem:[%s2804 + $0xe0] sm:$0xff]
      %v2834 = vld [vmem:[%s2804 + $0xe8] sm:$0xff]
      %v2835 = vld [vmem:[%s2804 + $0xf0] sm:$0xff]
      %v2836 = vld [vmem:[%s2804 + $0xf8] sm:$0xff]
      %v2837 = vld [vmem:[%s2804 + $0x100] sm:$0xff]
      %v2838 = vld [vmem:[%s2804 + $0x108] sm:$0xff]
      %v2839 = vld [vmem:[%s2804 + $0x110] sm:$0xff]
      %v2840 = vld [vmem:[%s2804 + $0x118] sm:$0xff]
      %v2841 = vld [vmem:[%s2804 + $0x120] sm:$0xff]
      %v2842 = vld [vmem:[%s2804 + $0x128] sm:$0xff]
      %v2843 = vld [vmem:[%s2804 + $0x130] sm:$0xff]
      %v2844 = vld [vmem:[%s2804 + $0x138] sm:$0xff]
      %v2845 = vld [vmem:[%s2804 + $0x140] sm:$0xff]
      %v2846 = vld [vmem:[%s2804 + $0x148] sm:$0xff]
      %v2847 = vld [vmem:[%s2804 + $0x150] sm:$0xff]
      %v2848 = vld [vmem:[%s2804 + $0x158] sm:$0xff]
      %v2849 = vld [vmem:[%s2804 + $0x160] sm:$0xff]
      %v2850 = vld [vmem:[%s2804 + $0x168] sm:$0xff]
      %v2851 = vld [vmem:[%s2804 + $0x170] sm:$0xff]
      %v2852 = vld [vmem:[%s2804 + $0x178] sm:$0xff]
      %v2853 = vld [vmem:[%s2804 + $0x180] sm:$0xff]
      %v2854 = vld [vmem:[%s2804 + $0x188] sm:$0xff]
      %v2855 = vld [vmem:[%s2804 + $0x190] sm:$0xff]
      %v2856 = vld [vmem:[%s2804 + $0x198] sm:$0xff]
      %v2857 = vld [vmem:[%s2804 + $0x1a0] sm:$0xff]
      %v2858 = vld [vmem:[%s2804 + $0x1a8] sm:$0xff]
      %v2859 = vld [vmem:[%s2804 + $0x1b0] sm:$0xff]
      %v2860 = vld [vmem:[%s2804 + $0x1b8] sm:$0xff]
      %v2862 = vsel %vm1414, %v2795, 0
      %v2865 = vsel %vm1414, %v2797, 0
      %v2868 = vsel %vm1414, %v2799, 0
      %v2871 = vsel %vm1414, %v2801, 0
      %v2874 = vsel %vm1414, %v2803, 0
      %2876 = vmatprep.subr.mxu0 %v2806
      %2877 = vmatpush1.msra.mxu0 %v2805
      %2878 = vmatprep.subr.mxu0 %v2808
      %2879 = vmatpush1.msra.mxu0 %v2807
      %2880 = vmatprep.subr.mxu0 %v2810
      %2881 = vmatpush1.msra.mxu0 %v2809
      %2882 = vmatprep.subr.mxu0 %v2812
      %2883 = vmatpush1.msra.mxu0 %v2811
      %2884 = vmatprep.subr.mxu0 %v2814
      %2885 = vmatpush1.msra.mxu0 %v2813
      %2886 = vmatprep.subr.mxu0 %v2816
      %2887 = vmatpush1.msra.mxu0 %v2815
      %2888 = vmatprep.subr.mxu0 %v2818
      %2889 = vmatpush1.msra.mxu0 %v2817
      %2890 = vmatprep.subr.mxu0 %v2820
      %2891 = vmatpush1.msra.mxu0 %v2819
      %2892 = vmatprep.subr.mxu0 %v2822
      %2893 = vmatpush1.msra.mxu0 %v2821
      %2894 = vmatprep.subr.mxu0 %v2824
      %2895 = vmatpush1.msra.mxu0 %v2823
      %2896 = vmatprep.subr.mxu0 %v2826
      %2897 = vmatpush1.msra.mxu0 %v2825
      %2898 = vmatprep.subr.mxu0 %v2828
      %2899 = vmatpush1.msra.mxu0 %v2827
      %2900 = vmatprep.subr.mxu0 %v2830
      %2901 = vmatpush1.msra.mxu0 %v2829
      %2902 = vmatprep.subr.mxu0 %v2832
      %2903 = vmatpush1.msra.mxu0 %v2831
      %2904 = vmatprep.subr.mxu0 %v2834
      %2905 = vmatpush1.msra.mxu0 %v2833
      %2906 = vmatprep.subr.mxu0 %v2836
      %2907 = vmatpush1.msra.mxu0 %v2835
      %2908 = vmatprep.subr.mxu0 %v2838
      %2909 = vmatpush1.msra.mxu0 %v2837
      %2910 = vmatprep.subr.mxu0 %v2840
      %2911 = vmatpush1.msra.mxu0 %v2839
      %2912 = vmatprep.subr.mxu0 %v2842
      %2913 = vmatpush1.msra.mxu0 %v2841
      %2914 = vmatprep.subr.mxu0 %v2844
      %2915 = vmatpush1.msra.mxu0 %v2843
      %2916 = vmatprep.subr.mxu0 %v2846
      %2917 = vmatpush1.msra.mxu0 %v2845
      %2918 = vmatprep.subr.mxu0 %v2848
      %2919 = vmatpush1.msra.mxu0 %v2847
      %2920 = vmatprep.subr.mxu0 %v2850
      %2921 = vmatpush1.msra.mxu0 %v2849
      %2922 = vmatprep.subr.mxu0 %v2852
      %2923 = vmatpush1.msra.mxu0 %v2851
      %2924 = vmatprep.subr.mxu0 %v2854
      %2925 = vmatpush1.msra.mxu0 %v2853
      %2926 = vmatprep.subr.mxu0 %v2856
      %2927 = vmatpush1.msra.mxu0 %v2855
      %2928 = vmatprep.subr.mxu0 %v2858
      %2929 = vmatpush1.msra.mxu0 %v2857
      %2930 = vmatprep.subr.mxu0 %v2860
      %2931 = vmatpush1.msra.mxu0 %v2859
      %2932 = vmatprep.subr.mxu0 0.0
      %2933 = vmatpush1.msra.mxu0 0.0
      %2934 = vmatprep.subr.mxu0 0.0
      %2935 = vmatpush1.msra.mxu0 0.0
      %2936 = vmatprep.subr.mxu0 0.0
      %2937 = vmatpush1.msra.mxu0 0.0
      %2938 = vmatprep.subr.mxu0 0.0
      %2939 = vmatpush1.msra.mxu0 0.0
      %2940 = vmatprep.mubr.f32.mxu0 %v2862
      %2941 = vmatmul.mubr.f32.gmra.mrb[0].mxu0 %v2794
      %v2942 = vpop.f32.mrb[0].mxu0
      %v2943 = vadd.f32 0.0, %v2942
      %v2944 = vpop.f32.mrb[0].mxu0
      %v2945 = vadd.f32 0.0, %v2944
      %2946 = vmatprep.mubr.f32.mxu0 %v2865
      %2947 = vmatmul.mubr.f32.gmra.mrb[0].mxu0 %v2796
      %v2948 = vpop.f32.mrb[0].mxu0
      %v2949 = vadd.f32 0.0, %v2948
      %v2950 = vpop.f32.mrb[0].mxu0
      %v2951 = vadd.f32 0.0, %v2950
      %2952 = vmatprep.mubr.f32.mxu0 %v2868
      %2953 = vmatmul.mubr.f32.gmra.mrb[0].mxu0 %v2798
      %v2954 = vpop.f32.mrb[0].mxu0
      %v2955 = vadd.f32 0.0, %v2954
      %v2956 = vpop.f32.mrb[0].mxu0
      %v2957 = vadd.f32 0.0, %v2956
      %2958 = vmatprep.mubr.f32.mxu0 %v2871
      %2959 = vmatmul.mubr.f32.gmra.mrb[0].mxu0 %v2800
      %v2960 = vpop.f32.mrb[0].mxu0
      %v2961 = vadd.f32 0.0, %v2960
      %v2962 = vpop.f32.mrb[0].mxu0
      %v2963 = vadd.f32 0.0, %v2962
      %2964 = vmatprep.mubr.f32.mxu0 %v2874
      %2965 = vmatmul.mubr.f32.gmra.mrb[0].mxu0 %v2802
      %v2966 = vpop.f32.mrb[0].mxu0
      %v2967 = vadd.f32 0.0, %v2966
      %v2968 = vpop.f32.mrb[0].mxu0
      %v2969 = vadd.f32 0.0, %v2968
      %2970 = vdwg.mxu0
      %v2971 = vadd.f32 %v2784, %v2943
      %v2972 = vadd.f32 %v2785, %v2945
      %v2973 = vadd.f32 %v2786, %v2949
      %v2974 = vadd.f32 %v2787, %v2951
      %v2975 = vadd.f32 %v2788, %v2955
      %v2976 = vadd.f32 %v2789, %v2957
      %v2977 = vadd.f32 %v2790, %v2961
      %v2978 = vadd.f32 %v2791, %v2963
      %v2979 = vadd.f32 %v2792, %v2967
      %v2980 = vadd.f32 %v2793, %v2969
      %v2981 = vld [vmem:[#allocation2 + $0x20] sm:$0xff]
      %v2982 = vld [vmem:[#allocation2 + $0x28] sm:$0xff]
      %v2983 = vld [vmem:[#allocation2 + $0x30] sm:$0xff]
      %v2984 = vld [vmem:[#allocation2 + $0x38] sm:$0xff]
      %v2985 = vld [vmem:[#allocation2 + $0x40] sm:$0xff]
      %v2986 = vld [vmem:[#allocation2 + $0x48] sm:$0xff]
      %v2987 = vld [vmem:[#allocation2 + $0x50] sm:$0xff]
      %v2988 = vld [vmem:[#allocation2 + $0x58] sm:$0xff]
      %v2989 = vld [vmem:[#allocation2 + $0x60] sm:$0xff]
      %v2990 = vld [vmem:[#allocation2 + $0x68] sm:$0xff]
      %s2991 = scalar_lea.vmem %s2, 1792
      %v2992 = vld [vmem:[%s2991] sm:$0xff]
      %v2993 = vld [vmem:[%s2991 + $0x8] sm:$0xff]
      %v2994 = vld [vmem:[%s2991 + $0x10] sm:$0xff]
      %v2995 = vld [vmem:[%s2991 + $0x18] sm:$0xff]
      %v2996 = vld [vmem:[%s2991 + $0x20] sm:$0xff]
      %v2997 = vld [vmem:[%s2991 + $0x28] sm:$0xff]
      %v2998 = vld [vmem:[%s2991 + $0x30] sm:$0xff]
      %v2999 = vld [vmem:[%s2991 + $0x38] sm:$0xff]
      %v3000 = vld [vmem:[%s2991 + $0x40] sm:$0xff]
      %v3001 = vld [vmem:[%s2991 + $0x48] sm:$0xff]
      %v3002 = vld [vmem:[%s2991 + $0x50] sm:$0xff]
      %v3003 = vld [vmem:[%s2991 + $0x58] sm:$0xff]
      %v3004 = vld [vmem:[%s2991 + $0x60] sm:$0xff]
      %v3005 = vld [vmem:[%s2991 + $0x68] sm:$0xff]
      %v3006 = vld [vmem:[%s2991 + $0x70] sm:$0xff]
      %v3007 = vld [vmem:[%s2991 + $0x78] sm:$0xff]
      %v3008 = vld [vmem:[%s2991 + $0x80] sm:$0xff]
      %v3009 = vld [vmem:[%s2991 + $0x88] sm:$0xff]
      %v3010 = vld [vmem:[%s2991 + $0x90] sm:$0xff]
      %v3011 = vld [vmem:[%s2991 + $0x98] sm:$0xff]
      %v3012 = vld [vmem:[%s2991 + $0xa0] sm:$0xff]
      %v3013 = vld [vmem:[%s2991 + $0xa8] sm:$0xff]
      %v3014 = vld [vmem:[%s2991 + $0xb0] sm:$0xff]
      %v3015 = vld [vmem:[%s2991 + $0xb8] sm:$0xff]
      %v3016 = vld [vmem:[%s2991 + $0xc0] sm:$0xff]
      %v3017 = vld [vmem:[%s2991 + $0xc8] sm:$0xff]
      %v3018 = vld [vmem:[%s2991 + $0xd0] sm:$0xff]
      %v3019 = vld [vmem:[%s2991 + $0xd8] sm:$0xff]
      %v3020 = vld [vmem:[%s2991 + $0xe0] sm:$0xff]
      %v3021 = vld [vmem:[%s2991 + $0xe8] sm:$0xff]
      %v3022 = vld [vmem:[%s2991 + $0xf0] sm:$0xff]
      %v3023 = vld [vmem:[%s2991 + $0xf8] sm:$0xff]
      %v3024 = vld [vmem:[%s2991 + $0x100] sm:$0xff]
      %v3025 = vld [vmem:[%s2991 + $0x108] sm:$0xff]
      %v3026 = vld [vmem:[%s2991 + $0x110] sm:$0xff]
      %v3027 = vld [vmem:[%s2991 + $0x118] sm:$0xff]
      %v3028 = vld [vmem:[%s2991 + $0x120] sm:$0xff]
      %v3029 = vld [vmem:[%s2991 + $0x128] sm:$0xff]
      %v3030 = vld [vmem:[%s2991 + $0x130] sm:$0xff]
      %v3031 = vld [vmem:[%s2991 + $0x138] sm:$0xff]
      %v3032 = vld [vmem:[%s2991 + $0x140] sm:$0xff]
      %v3033 = vld [vmem:[%s2991 + $0x148] sm:$0xff]
      %v3034 = vld [vmem:[%s2991 + $0x150] sm:$0xff]
      %v3035 = vld [vmem:[%s2991 + $0x158] sm:$0xff]
      %v3036 = vld [vmem:[%s2991 + $0x160] sm:$0xff]
      %v3037 = vld [vmem:[%s2991 + $0x168] sm:$0xff]
      %v3038 = vld [vmem:[%s2991 + $0x170] sm:$0xff]
      %v3039 = vld [vmem:[%s2991 + $0x178] sm:$0xff]
      %v3040 = vld [vmem:[%s2991 + $0x180] sm:$0xff]
      %v3041 = vld [vmem:[%s2991 + $0x188] sm:$0xff]
      %v3042 = vld [vmem:[%s2991 + $0x190] sm:$0xff]
      %v3043 = vld [vmem:[%s2991 + $0x198] sm:$0xff]
      %v3044 = vld [vmem:[%s2991 + $0x1a0] sm:$0xff]
      %v3045 = vld [vmem:[%s2991 + $0x1a8] sm:$0xff]
      %v3046 = vld [vmem:[%s2991 + $0x1b0] sm:$0xff]
      %v3047 = vld [vmem:[%s2991 + $0x1b8] sm:$0xff]
      %v3049 = vsel %vm1414, %v2982, 0
      %v3052 = vsel %vm1414, %v2984, 0
      %v3055 = vsel %vm1414, %v2986, 0
      %v3058 = vsel %vm1414, %v2988, 0
      %v3061 = vsel %vm1414, %v2990, 0
      %3063 = vmatprep.subr.mxu0 %v2993
      %3064 = vmatpush1.msra.mxu0 %v2992
      %3065 = vmatprep.subr.mxu0 %v2995
      %3066 = vmatpush1.msra.mxu0 %v2994
      %3067 = vmatprep.subr.mxu0 %v2997
      %3068 = vmatpush1.msra.mxu0 %v2996
      %3069 = vmatprep.subr.mxu0 %v2999
      %3070 = vmatpush1.msra.mxu0 %v2998
      %3071 = vmatprep.subr.mxu0 %v3001
      %3072 = vmatpush1.msra.mxu0 %v3000
      %3073 = vmatprep.subr.mxu0 %v3003
      %3074 = vmatpush1.msra.mxu0 %v3002
      %3075 = vmatprep.subr.mxu0 %v3005
      %3076 = vmatpush1.msra.mxu0 %v3004
      %3077 = vmatprep.subr.mxu0 %v3007
      %3078 = vmatpush1.msra.mxu0 %v3006
      %3079 = vmatprep.subr.mxu0 %v3009
      %3080 = vmatpush1.msra.mxu0 %v3008
      %3081 = vmatprep.subr.mxu0 %v3011
      %3082 = vmatpush1.msra.mxu0 %v3010
      %3083 = vmatprep.subr.mxu0 %v3013
      %3084 = vmatpush1.msra.mxu0 %v3012
      %3085 = vmatprep.subr.mxu0 %v3015
      %3086 = vmatpush1.msra.mxu0 %v3014
      %3087 = vmatprep.subr.mxu0 %v3017
      %3088 = vmatpush1.msra.mxu0 %v3016
      %3089 = vmatprep.subr.mxu0 %v3019
      %3090 = vmatpush1.msra.mxu0 %v3018
      %3091 = vmatprep.subr.mxu0 %v3021
      %3092 = vmatpush1.msra.mxu0 %v3020
      %3093 = vmatprep.subr.mxu0 %v3023
      %3094 = vmatpush1.msra.mxu0 %v3022
      %3095 = vmatprep.subr.mxu0 %v3025
      %3096 = vmatpush1.msra.mxu0 %v3024
      %3097 = vmatprep.subr.mxu0 %v3027
      %3098 = vmatpush1.msra.mxu0 %v3026
      %3099 = vmatprep.subr.mxu0 %v3029
      %3100 = vmatpush1.msra.mxu0 %v3028
      %3101 = vmatprep.subr.mxu0 %v3031
      %3102 = vmatpush1.msra.mxu0 %v3030
      %3103 = vmatprep.subr.mxu0 %v3033
      %3104 = vmatpush1.msra.mxu0 %v3032
      %3105 = vmatprep.subr.mxu0 %v3035
      %3106 = vmatpush1.msra.mxu0 %v3034
      %3107 = vmatprep.subr.mxu0 %v3037
      %3108 = vmatpush1.msra.mxu0 %v3036
      %3109 = vmatprep.subr.mxu0 %v3039
      %3110 = vmatpush1.msra.mxu0 %v3038
      %3111 = vmatprep.subr.mxu0 %v3041
      %3112 = vmatpush1.msra.mxu0 %v3040
      %3113 = vmatprep.subr.mxu0 %v3043
      %3114 = vmatpush1.msra.mxu0 %v3042
      %3115 = vmatprep.subr.mxu0 %v3045
      %3116 = vmatpush1.msra.mxu0 %v3044
      %3117 = vmatprep.subr.mxu0 %v3047
      %3118 = vmatpush1.msra.mxu0 %v3046
      %3119 = vmatprep.subr.mxu0 0.0
      %3120 = vmatpush1.msra.mxu0 0.0
      %3121 = vmatprep.subr.mxu0 0.0
      %3122 = vmatpush1.msra.mxu0 0.0
      %3123 = vmatprep.subr.mxu0 0.0
      %3124 = vmatpush1.msra.mxu0 0.0
      %3125 = vmatprep.subr.mxu0 0.0
      %3126 = vmatpush1.msra.mxu0 0.0
      %3127 = vmatprep.mubr.f32.mxu0 %v3049
      %3128 = vmatmul.mubr.f32.gmra.mrb[0].mxu0 %v2981
      %v3129 = vpop.f32.mrb[0].mxu0
      %v3130 = vadd.f32 0.0, %v3129
      %v3131 = vpop.f32.mrb[0].mxu0
      %v3132 = vadd.f32 0.0, %v3131
      %3133 = vmatprep.mubr.f32.mxu0 %v3052
      %3134 = vmatmul.mubr.f32.gmra.mrb[0].mxu0 %v2983
      %v3135 = vpop.f32.mrb[0].mxu0
      %v3136 = vadd.f32 0.0, %v3135
      %v3137 = vpop.f32.mrb[0].mxu0
      %v3138 = vadd.f32 0.0, %v3137
      %3139 = vmatprep.mubr.f32.mxu0 %v3055
      %3140 = vmatmul.mubr.f32.gmra.mrb[0].mxu0 %v2985
      %v3141 = vpop.f32.mrb[0].mxu0
      %v3142 = vadd.f32 0.0, %v3141
      %v3143 = vpop.f32.mrb[0].mxu0
      %v3144 = vadd.f32 0.0, %v3143
      %3145 = vmatprep.mubr.f32.mxu0 %v3058
      %3146 = vmatmul.mubr.f32.gmra.mrb[0].mxu0 %v2987
      %v3147 = vpop.f32.mrb[0].mxu0
      %v3148 = vadd.f32 0.0, %v3147
      %v3149 = vpop.f32.mrb[0].mxu0
      %v3150 = vadd.f32 0.0, %v3149
      %3151 = vmatprep.mubr.f32.mxu0 %v3061
      %3152 = vmatmul.mubr.f32.gmra.mrb[0].mxu0 %v2989
      %v3153 = vpop.f32.mrb[0].mxu0
      %v3154 = vadd.f32 0.0, %v3153
      %v3155 = vpop.f32.mrb[0].mxu0
      %v3156 = vadd.f32 0.0, %v3155
      %3157 = vdwg.mxu0
      %v3158 = vadd.f32 %v2971, %v3130
      %v3159 = vadd.f32 %v2972, %v3132
      %v3160 = vadd.f32 %v2973, %v3136
      %v3161 = vadd.f32 %v2974, %v3138
      %v3162 = vadd.f32 %v2975, %v3142
      %v3163 = vadd.f32 %v2976, %v3144
      %v3164 = vadd.f32 %v2977, %v3148
      %v3165 = vadd.f32 %v2978, %v3150
      %v3166 = vadd.f32 %v2979, %v3154
      %v3167 = vadd.f32 %v2980, %v3156
      %v3168 = vld [vmem:[%s3] sm:$0x3]
      %v3170 = vlaneseq
      %v3171 = vshrl.u32 %v3170, 7
      %v3172 = vsub.s32 0, %v3171
      %v3173 = vrot.slane %v3168, %v3172
      %v3174 = vlaneseq
      %v3175 = vshrl.u32 %v3174, 7
      %v3176 = vsub.s32 1, %v3175
      %v3177 = vrot.slane %v3168, %v3176
      %v3180 = vadd.f32 %v3158, %v3173
      %v3181 = vadd.f32 %v3159, %v3177
      %v3182 = vadd.f32 %v3160, %v3173
      %v3183 = vadd.f32 %v3161, %v3177
      %v3184 = vadd.f32 %v3162, %v3173
      %v3185 = vadd.f32 %v3163, %v3177
      %v3186 = vadd.f32 %v3164, %v3173
      %v3187 = vadd.f32 %v3165, %v3177
      %v3188 = vadd.f32 %v3166, %v3173
      %v3189 = vadd.f32 %v3167, %v3177
      %v3190 = vtanh.pop %v3180
      %v3191 = vtanh.pop %v3181
      %v3192 = vtanh.pop %v3182
      %v3193 = vtanh.pop %v3183
      %v3194 = vtanh.pop %v3184
      %v3195 = vtanh.pop %v3185
      %v3196 = vtanh.pop %v3186
      %v3197 = vtanh.pop %v3187
      %v3198 = vtanh.pop %v3188
      %v3199 = vtanh.pop %v3189
      %3200 = vst [vmem:[#allocation3] sm:$0xff] %v3190
      %vm3201 = vcmask 261120
      %3202 = vst.msk [vmem:[#allocation3 + $0x8] sm:$0xff] %vm3201, %v3191
      %3203 = vst [vmem:[#allocation3 + $0x10] sm:$0xff] %v3192
      %3204 = vst.msk [vmem:[#allocation3 + $0x18] sm:$0xff] %vm3201, %v3193
      %3205 = vst [vmem:[#allocation3 + $0x20] sm:$0xff] %v3194
      %3206 = vst.msk [vmem:[#allocation3 + $0x28] sm:$0xff] %vm3201, %v3195
      %3207 = vst [vmem:[#allocation3 + $0x30] sm:$0xff] %v3196
      %3208 = vst.msk [vmem:[#allocation3 + $0x38] sm:$0xff] %vm3201, %v3197
      %3209 = vst [vmem:[#allocation3 + $0x40] sm:$0xff] %v3198
      %3210 = vst.msk [vmem:[#allocation3 + $0x48] sm:$0xff] %vm3201, %v3199
      %v3211 = vld [vmem:[#allocation3] sm:$0xff]
      %v3212 = vld [vmem:[#allocation3 + $0x8] sm:$0xff]
      %v3213 = vld [vmem:[#allocation3 + $0x10] sm:$0xff]
      %v3214 = vld [vmem:[#allocation3 + $0x18] sm:$0xff]
      %v3215 = vld [vmem:[#allocation3 + $0x20] sm:$0xff]
      %v3216 = vld [vmem:[#allocation3 + $0x28] sm:$0xff]
      %v3217 = vld [vmem:[%s4] sm:$0xff]
      %v3218 = vld [vmem:[%s4 + $0x8] sm:$0xff]
      %v3219 = vld [vmem:[%s4 + $0x10] sm:$0xff]
      %v3220 = vld [vmem:[%s4 + $0x18] sm:$0xff]
      %v3221 = vld [vmem:[%s4 + $0x20] sm:$0xff]
      %v3222 = vld [vmem:[%s4 + $0x28] sm:$0xff]
      %v3223 = vld [vmem:[%s4 + $0x30] sm:$0xff]
      %v3224 = vld [vmem:[%s4 + $0x38] sm:$0xff]
      %v3225 = vld [vmem:[%s4 + $0x40] sm:$0xff]
      %v3226 = vld [vmem:[%s4 + $0x48] sm:$0xff]
      %v3227 = vld [vmem:[%s4 + $0x50] sm:$0xff]
      %v3228 = vld [vmem:[%s4 + $0x58] sm:$0xff]
      %v3229 = vld [vmem:[%s4 + $0x60] sm:$0xff]
      %v3230 = vld [vmem:[%s4 + $0x68] sm:$0xff]
      %v3231 = vld [vmem:[%s4 + $0x70] sm:$0xff]
      %v3232 = vld [vmem:[%s4 + $0x78] sm:$0xff]
      %v3233 = vld [vmem:[%s4 + $0x80] sm:$0xff]
      %v3234 = vld [vmem:[%s4 + $0x88] sm:$0xff]
      %v3235 = vld [vmem:[%s4 + $0x90] sm:$0xff]
      %v3236 = vld [vmem:[%s4 + $0x98] sm:$0xff]
      %v3237 = vld [vmem:[%s4 + $0xa0] sm:$0xff]
      %v3238 = vld [vmem:[%s4 + $0xa8] sm:$0xff]
      %v3239 = vld [vmem:[%s4 + $0xb0] sm:$0xff]
      %v3240 = vld [vmem:[%s4 + $0xb8] sm:$0xff]
      %v3241 = vld [vmem:[%s4 + $0xc0] sm:$0xff]
      %v3242 = vld [vmem:[%s4 + $0xc8] sm:$0xff]
      %v3243 = vld [vmem:[%s4 + $0xd0] sm:$0xff]
      %v3244 = vld [vmem:[%s4 + $0xd8] sm:$0xff]
      %v3245 = vld [vmem:[%s4 + $0xe0] sm:$0xff]
      %v3246 = vld [vmem:[%s4 + $0xe8] sm:$0xff]
      %v3247 = vld [vmem:[%s4 + $0xf0] sm:$0xff]
      %v3248 = vld [vmem:[%s4 + $0xf8] sm:$0xff]
      %v3249 = vld [vmem:[%s4 + $0x100] sm:$0xff]
      %v3250 = vld [vmem:[%s4 + $0x108] sm:$0xff]
      %v3251 = vld [vmem:[%s4 + $0x110] sm:$0xff]
      %v3252 = vld [vmem:[%s4 + $0x118] sm:$0xff]
      %v3253 = vld [vmem:[%s4 + $0x120] sm:$0xff]
      %v3254 = vld [vmem:[%s4 + $0x128] sm:$0xff]
      %v3255 = vld [vmem:[%s4 + $0x130] sm:$0xff]
      %v3256 = vld [vmem:[%s4 + $0x138] sm:$0xff]
      %v3257 = vld [vmem:[#allocation3 + $0x30] sm:$0xff]
      %v3258 = vld [vmem:[#allocation3 + $0x38] sm:$0xff]
      %s3259 = scalar_lea.vmem %s4, 320
      %v3260 = vld [vmem:[%s3259] sm:$0xff]
      %v3261 = vld [vmem:[%s3259 + $0x8] sm:$0xff]
      %v3262 = vld [vmem:[%s3259 + $0x10] sm:$0xff]
      %v3263 = vld [vmem:[%s3259 + $0x18] sm:$0xff]
      %v3264 = vld [vmem:[%s3259 + $0x20] sm:$0xff]
      %v3265 = vld [vmem:[%s3259 + $0x28] sm:$0xff]
      %v3266 = vld [vmem:[%s3259 + $0x30] sm:$0xff]
      %v3267 = vld [vmem:[%s3259 + $0x38] sm:$0xff]
      %v3268 = vld [vmem:[%s3259 + $0x40] sm:$0xff]
      %v3269 = vld [vmem:[%s3259 + $0x48] sm:$0xff]
      %v3270 = vld [vmem:[%s3259 + $0x50] sm:$0xff]
      %v3271 = vld [vmem:[%s3259 + $0x58] sm:$0xff]
      %v3272 = vld [vmem:[%s3259 + $0x60] sm:$0xff]
      %v3273 = vld [vmem:[%s3259 + $0x68] sm:$0xff]
      %v3274 = vld [vmem:[%s3259 + $0x70] sm:$0xff]
      %v3275 = vld [vmem:[%s3259 + $0x78] sm:$0xff]
      %v3276 = vld [vmem:[%s3259 + $0x80] sm:$0xff]
      %v3277 = vld [vmem:[%s3259 + $0x88] sm:$0xff]
      %v3278 = vld [vmem:[%s3259 + $0x90] sm:$0xff]
      %v3279 = vld [vmem:[%s3259 + $0x98] sm:$0xff]
      %v3280 = vld [vmem:[%s3259 + $0xa0] sm:$0xff]
      %v3281 = vld [vmem:[%s3259 + $0xa8] sm:$0xff]
      %v3282 = vld [vmem:[%s3259 + $0xb0] sm:$0xff]
      %v3283 = vld [vmem:[%s3259 + $0xb8] sm:$0xff]
      %v3284 = vld [vmem:[%s3259 + $0xc0] sm:$0xff]
      %v3285 = vld [vmem:[%s3259 + $0xc8] sm:$0xff]
      %v3286 = vld [vmem:[%s3259 + $0xd0] sm:$0xff]
      %v3287 = vld [vmem:[%s3259 + $0xd8] sm:$0xff]
      %v3288 = vld [vmem:[%s3259 + $0xe0] sm:$0xff]
      %v3289 = vld [vmem:[%s3259 + $0xe8] sm:$0xff]
      %v3290 = vld [vmem:[%s3259 + $0xf0] sm:$0xff]
      %v3291 = vld [vmem:[%s3259 + $0xf8] sm:$0xff]
      %v3292 = vld [vmem:[%s3259 + $0x100] sm:$0xff]
      %v3293 = vld [vmem:[%s3259 + $0x108] sm:$0xff]
      %v3294 = vld [vmem:[%s3259 + $0x110] sm:$0xff]
      %v3295 = vld [vmem:[%s3259 + $0x118] sm:$0xff]
      %v3296 = vld [vmem:[%s3259 + $0x120] sm:$0xff]
      %v3297 = vld [vmem:[%s3259 + $0x128] sm:$0xff]
      %v3298 = vld [vmem:[%s3259 + $0x130] sm:$0xff]
      %v3299 = vld [vmem:[%s3259 + $0x138] sm:$0xff]
      %v3301 = vsel %vm3201, %v3214, 0
      %v3304 = vsel %vm3201, %v3216, 0
      %v3307 = vsel %vm3201, %v3258, 0
      %3309 = vmatprep.subr.mxu0 %v3261
      %3310 = vmatpush1.msra.mxu0 %v3260
      %3311 = vmatprep.subr.mxu0 %v3263
      %3312 = vmatpush1.msra.mxu0 %v3262
      %3313 = vmatprep.subr.mxu0 %v3265
      %3314 = vmatpush1.msra.mxu0 %v3264
      %3315 = vmatprep.subr.mxu0 %v3267
      %3316 = vmatpush1.msra.mxu0 %v3266
      %3317 = vmatprep.subr.mxu0 %v3269
      %3318 = vmatpush1.msra.mxu0 %v3268
      %3319 = vmatprep.subr.mxu0 %v3271
      %3320 = vmatpush1.msra.mxu0 %v3270
      %3321 = vmatprep.subr.mxu0 %v3273
      %3322 = vmatpush1.msra.mxu0 %v3272
      %3323 = vmatprep.subr.mxu0 %v3275
      %3324 = vmatpush1.msra.mxu0 %v3274
      %3325 = vmatprep.subr.mxu0 %v3277
      %3326 = vmatpush1.msra.mxu0 %v3276
      %3327 = vmatprep.subr.mxu0 %v3279
      %3328 = vmatpush1.msra.mxu0 %v3278
      %3329 = vmatprep.subr.mxu0 %v3281
      %3330 = vmatpush1.msra.mxu0 %v3280
      %3331 = vmatprep.subr.mxu0 %v3283
      %3332 = vmatpush1.msra.mxu0 %v3282
      %3333 = vmatprep.subr.mxu0 %v3285
      %3334 = vmatpush1.msra.mxu0 %v3284
      %3335 = vmatprep.subr.mxu0 %v3287
      %3336 = vmatpush1.msra.mxu0 %v3286
      %3337 = vmatprep.subr.mxu0 %v3289
      %3338 = vmatpush1.msra.mxu0 %v3288
      %3339 = vmatprep.subr.mxu0 %v3291
      %3340 = vmatpush1.msra.mxu0 %v3290
      %3341 = vmatprep.subr.mxu0 %v3293
      %3342 = vmatpush1.msra.mxu0 %v3292
      %3343 = vmatprep.subr.mxu0 %v3295
      %3344 = vmatpush1.msra.mxu0 %v3294
      %3345 = vmatprep.subr.mxu0 %v3297
      %3346 = vmatpush1.msra.mxu0 %v3296
      %3347 = vmatprep.subr.mxu0 %v3299
      %3348 = vmatpush1.msra.mxu0 %v3298
      %3349 = vmatprep.subr.mxu0 0.0
      %3350 = vmatpush1.msra.mxu0 0.0
      %3351 = vmatprep.subr.mxu0 0.0
      %3352 = vmatpush1.msra.mxu0 0.0
      %3353 = vmatprep.subr.mxu0 0.0
      %3354 = vmatpush1.msra.mxu0 0.0
      %3355 = vmatprep.subr.mxu0 0.0
      %3356 = vmatpush1.msra.mxu0 0.0
      %3357 = vmatprep.subr.mxu0 0.0
      %3358 = vmatpush1.msra.mxu0 0.0
      %3359 = vmatprep.subr.mxu0 0.0
      %3360 = vmatpush1.msra.mxu0 0.0
      %3361 = vmatprep.subr.mxu0 0.0
      %3362 = vmatpush1.msra.mxu0 0.0
      %3363 = vmatprep.subr.mxu0 0.0
      %3364 = vmatpush1.msra.mxu0 0.0
      %3365 = vmatprep.subr.mxu0 0.0
      %3366 = vmatpush1.msra.mxu0 0.0
      %3367 = vmatprep.subr.mxu0 0.0
      %3368 = vmatpush1.msra.mxu0 0.0
      %3369 = vmatprep.subr.mxu0 0.0
      %3370 = vmatpush1.msra.mxu0 0.0
      %3371 = vmatprep.subr.mxu0 0.0
      %3372 = vmatpush1.msra.mxu0 0.0
      %3373 = vmatprep.mubr.f32.mxu0 %v3301
      %3374 = vmatmul.mubr.f32.gmra.mrb[0].mxu0 %v3213
      %v3375 = vpop.f32.mrb[0].mxu0
      %v3376 = vadd.f32 0.0, %v3375
      %v3377 = vpop.f32.mrb[0].mxu0
      %v3378 = vadd.f32 0.0, %v3377
      %3379 = vmatprep.mubr.f32.mxu0 %v3304
      %3380 = vmatmul.mubr.f32.gmra.mrb[0].mxu0 %v3215
      %v3381 = vpop.f32.mrb[0].mxu0
      %v3382 = vadd.f32 0.0, %v3381
      %v3383 = vpop.f32.mrb[0].mxu0
      %v3384 = vadd.f32 0.0, %v3383
      %3385 = vmatprep.mubr.f32.mxu0 %v3307
      %3386 = vmatmul.mubr.f32.gmra.mrb[0].mxu0 %v3257
      %v3387 = vpop.f32.mrb[0].mxu0
      %v3388 = vadd.f32 0.0, %v3387
      %v3389 = vpop.f32.mrb[0].mxu0
      %v3390 = vadd.f32 0.0, %v3389
      %3391 = vdwg.mxu0
      %v3393 = vsel %vm3201, %v3212, 0
      %3395 = vmatprep.subr.mxu0 %v3218
      %3396 = vmatpush1.msra.mxu0 %v3217
      %3397 = vmatprep.subr.mxu0 %v3220
      %3398 = vmatpush1.msra.mxu0 %v3219
      %3399 = vmatprep.subr.mxu0 %v3222
      %3400 = vmatpush1.msra.mxu0 %v3221
      %3401 = vmatprep.subr.mxu0 %v3224
      %3402 = vmatpush1.msra.mxu0 %v3223
      %3403 = vmatprep.subr.mxu0 %v3226
      %3404 = vmatpush1.msra.mxu0 %v3225
      %3405 = vmatprep.subr.mxu0 %v3228
      %3406 = vmatpush1.msra.mxu0 %v3227
      %3407 = vmatprep.subr.mxu0 %v3230
      %3408 = vmatpush1.msra.mxu0 %v3229
      %3409 = vmatprep.subr.mxu0 %v3232
      %3410 = vmatpush1.msra.mxu0 %v3231
      %3411 = vmatprep.subr.mxu0 %v3234
      %3412 = vmatpush1.msra.mxu0 %v3233
      %3413 = vmatprep.subr.mxu0 %v3236
      %3414 = vmatpush1.msra.mxu0 %v3235
      %3415 = vmatprep.subr.mxu0 %v3238
      %3416 = vmatpush1.msra.mxu0 %v3237
      %3417 = vmatprep.subr.mxu0 %v3240
      %3418 = vmatpush1.msra.mxu0 %v3239
      %3419 = vmatprep.subr.mxu0 %v3242
      %3420 = vmatpush1.msra.mxu0 %v3241
      %3421 = vmatprep.subr.mxu0 %v3244
      %3422 = vmatpush1.msra.mxu0 %v3243
      %3423 = vmatprep.subr.mxu0 %v3246
      %3424 = vmatpush1.msra.mxu0 %v3245
      %3425 = vmatprep.subr.mxu0 %v3248
      %3426 = vmatpush1.msra.mxu0 %v3247
      %3427 = vmatprep.subr.mxu0 %v3250
      %3428 = vmatpush1.msra.mxu0 %v3249
      %3429 = vmatprep.subr.mxu0 %v3252
      %3430 = vmatpush1.msra.mxu0 %v3251
      %3431 = vmatprep.subr.mxu0 %v3254
      %3432 = vmatpush1.msra.mxu0 %v3253
      %3433 = vmatprep.subr.mxu0 %v3256
      %3434 = vmatpush1.msra.mxu0 %v3255
      %3435 = vmatprep.subr.mxu0 0.0
      %3436 = vmatpush1.msra.mxu0 0.0
      %3437 = vmatprep.subr.mxu0 0.0
      %3438 = vmatpush1.msra.mxu0 0.0
      %3439 = vmatprep.subr.mxu0 0.0
      %3440 = vmatpush1.msra.mxu0 0.0
      %3441 = vmatprep.subr.mxu0 0.0
      %3442 = vmatpush1.msra.mxu0 0.0
      %3443 = vmatprep.subr.mxu0 0.0
      %3444 = vmatpush1.msra.mxu0 0.0
      %3445 = vmatprep.subr.mxu0 0.0
      %3446 = vmatpush1.msra.mxu0 0.0
      %3447 = vmatprep.subr.mxu0 0.0
      %3448 = vmatpush1.msra.mxu0 0.0
      %3449 = vmatprep.subr.mxu0 0.0
      %3450 = vmatpush1.msra.mxu0 0.0
      %3451 = vmatprep.subr.mxu0 0.0
      %3452 = vmatpush1.msra.mxu0 0.0
      %3453 = vmatprep.subr.mxu0 0.0
      %3454 = vmatpush1.msra.mxu0 0.0
      %3455 = vmatprep.subr.mxu0 0.0
      %3456 = vmatpush1.msra.mxu0 0.0
      %3457 = vmatprep.subr.mxu0 0.0
      %3458 = vmatpush1.msra.mxu0 0.0
      %3459 = vmatprep.mubr.f32.mxu0 %v3393
      %3460 = vmatmul.mubr.f32.gmra.mrb[0].mxu0 %v3211
      %v3461 = vpop.f32.mrb[0].mxu0
      %v3462 = vadd.f32 %v3376, %v3461
      %v3463 = vpop.f32.mrb[0].mxu0
      %v3464 = vadd.f32 %v3378, %v3463
      %3465 = vmatprep.mubr.f32.mxu0 %v3301
      %3466 = vmatmul.mubr.f32.gmra.mrb[0].mxu0 %v3213
      %v3467 = vpop.f32.mrb[0].mxu0
      %v3468 = vadd.f32 %v3382, %v3467
      %v3469 = vpop.f32.mrb[0].mxu0
      %v3470 = vadd.f32 %v3384, %v3469
      %3471 = vmatprep.mubr.f32.mxu0 %v3304
      %3472 = vmatmul.mubr.f32.gmra.mrb[0].mxu0 %v3215
      %v3473 = vpop.f32.mrb[0].mxu0
      %v3474 = vadd.f32 %v3388, %v3473
      %v3475 = vpop.f32.mrb[0].mxu0
      %v3476 = vadd.f32 %v3390, %v3475
      %3477 = vdwg.mxu0
      %v3478 = vld [vmem:[#allocation3 + $0x20] sm:$0xff]
      %v3479 = vld [vmem:[#allocation3 + $0x28] sm:$0xff]
      %v3480 = vld [vmem:[#allocation3 + $0x30] sm:$0xff]
      %v3481 = vld [vmem:[#allocation3 + $0x38] sm:$0xff]
      %v3482 = vld [vmem:[#allocation3 + $0x40] sm:$0xff]
      %v3483 = vld [vmem:[#allocation3 + $0x48] sm:$0xff]
      %s3484 = scalar_lea.vmem %s4, 640
      %v3485 = vld [vmem:[%s3484] sm:$0xff]
      %v3486 = vld [vmem:[%s3484 + $0x8] sm:$0xff]
      %v3487 = vld [vmem:[%s3484 + $0x10] sm:$0xff]
      %v3488 = vld [vmem:[%s3484 + $0x18] sm:$0xff]
      %v3489 = vld [vmem:[%s3484 + $0x20] sm:$0xff]
      %v3490 = vld [vmem:[%s3484 + $0x28] sm:$0xff]
      %v3491 = vld [vmem:[%s3484 + $0x30] sm:$0xff]
      %v3492 = vld [vmem:[%s3484 + $0x38] sm:$0xff]
      %v3493 = vld [vmem:[%s3484 + $0x40] sm:$0xff]
      %v3494 = vld [vmem:[%s3484 + $0x48] sm:$0xff]
      %v3495 = vld [vmem:[%s3484 + $0x50] sm:$0xff]
      %v3496 = vld [vmem:[%s3484 + $0x58] sm:$0xff]
      %v3497 = vld [vmem:[%s3484 + $0x60] sm:$0xff]
      %v3498 = vld [vmem:[%s3484 + $0x68] sm:$0xff]
      %v3499 = vld [vmem:[%s3484 + $0x70] sm:$0xff]
      %v3500 = vld [vmem:[%s3484 + $0x78] sm:$0xff]
      %v3501 = vld [vmem:[%s3484 + $0x80] sm:$0xff]
      %v3502 = vld [vmem:[%s3484 + $0x88] sm:$0xff]
      %v3503 = vld [vmem:[%s3484 + $0x90] sm:$0xff]
      %v3504 = vld [vmem:[%s3484 + $0x98] sm:$0xff]
      %v3505 = vld [vmem:[%s3484 + $0xa0] sm:$0xff]
      %v3506 = vld [vmem:[%s3484 + $0xa8] sm:$0xff]
      %v3507 = vld [vmem:[%s3484 + $0xb0] sm:$0xff]
      %v3508 = vld [vmem:[%s3484 + $0xb8] sm:$0xff]
      %v3509 = vld [vmem:[%s3484 + $0xc0] sm:$0xff]
      %v3510 = vld [vmem:[%s3484 + $0xc8] sm:$0xff]
      %v3511 = vld [vmem:[%s3484 + $0xd0] sm:$0xff]
      %v3512 = vld [vmem:[%s3484 + $0xd8] sm:$0xff]
      %v3513 = vld [vmem:[%s3484 + $0xe0] sm:$0xff]
      %v3514 = vld [vmem:[%s3484 + $0xe8] sm:$0xff]
      %v3515 = vld [vmem:[%s3484 + $0xf0] sm:$0xff]
      %v3516 = vld [vmem:[%s3484 + $0xf8] sm:$0xff]
      %v3517 = vld [vmem:[%s3484 + $0x100] sm:$0xff]
      %v3518 = vld [vmem:[%s3484 + $0x108] sm:$0xff]
      %v3519 = vld [vmem:[%s3484 + $0x110] sm:$0xff]
      %v3520 = vld [vmem:[%s3484 + $0x118] sm:$0xff]
      %v3521 = vld [vmem:[%s3484 + $0x120] sm:$0xff]
      %v3522 = vld [vmem:[%s3484 + $0x128] sm:$0xff]
      %v3523 = vld [vmem:[%s3484 + $0x130] sm:$0xff]
      %v3524 = vld [vmem:[%s3484 + $0x138] sm:$0xff]
      %v3526 = vsel %vm3201, %v3479, 0
      %v3529 = vsel %vm3201, %v3481, 0
      %v3532 = vsel %vm3201, %v3483, 0
      %3534 = vmatprep.subr.mxu0 %v3486
      %3535 = vmatpush1.msra.mxu0 %v3485
      %3536 = vmatprep.subr.mxu0 %v3488
      %3537 = vmatpush1.msra.mxu0 %v3487
      %3538 = vmatprep.subr.mxu0 %v3490
      %3539 = vmatpush1.msra.mxu0 %v3489
      %3540 = vmatprep.subr.mxu0 %v3492
      %3541 = vmatpush1.msra.mxu0 %v3491
      %3542 = vmatprep.subr.mxu0 %v3494
      %3543 = vmatpush1.msra.mxu0 %v3493
      %3544 = vmatprep.subr.mxu0 %v3496
      %3545 = vmatpush1.msra.mxu0 %v3495
      %3546 = vmatprep.subr.mxu0 %v3498
      %3547 = vmatpush1.msra.mxu0 %v3497
      %3548 = vmatprep.subr.mxu0 %v3500
      %3549 = vmatpush1.msra.mxu0 %v3499
      %3550 = vmatprep.subr.mxu0 %v3502
      %3551 = vmatpush1.msra.mxu0 %v3501
      %3552 = vmatprep.subr.mxu0 %v3504
      %3553 = vmatpush1.msra.mxu0 %v3503
      %3554 = vmatprep.subr.mxu0 %v3506
      %3555 = vmatpush1.msra.mxu0 %v3505
      %3556 = vmatprep.subr.mxu0 %v3508
      %3557 = vmatpush1.msra.mxu0 %v3507
      %3558 = vmatprep.subr.mxu0 %v3510
      %3559 = vmatpush1.msra.mxu0 %v3509
      %3560 = vmatprep.subr.mxu0 %v3512
      %3561 = vmatpush1.msra.mxu0 %v3511
      %3562 = vmatprep.subr.mxu0 %v3514
      %3563 = vmatpush1.msra.mxu0 %v3513
      %3564 = vmatprep.subr.mxu0 %v3516
      %3565 = vmatpush1.msra.mxu0 %v3515
      %3566 = vmatprep.subr.mxu0 %v3518
      %3567 = vmatpush1.msra.mxu0 %v3517
      %3568 = vmatprep.subr.mxu0 %v3520
      %3569 = vmatpush1.msra.mxu0 %v3519
      %3570 = vmatprep.subr.mxu0 %v3522
      %3571 = vmatpush1.msra.mxu0 %v3521
      %3572 = vmatprep.subr.mxu0 %v3524
      %3573 = vmatpush1.msra.mxu0 %v3523
      %3574 = vmatprep.subr.mxu0 0.0
      %3575 = vmatpush1.msra.mxu0 0.0
      %3576 = vmatprep.subr.mxu0 0.0
      %3577 = vmatpush1.msra.mxu0 0.0
      %3578 = vmatprep.subr.mxu0 0.0
      %3579 = vmatpush1.msra.mxu0 0.0
      %3580 = vmatprep.subr.mxu0 0.0
      %3581 = vmatpush1.msra.mxu0 0.0
      %3582 = vmatprep.subr.mxu0 0.0
      %3583 = vmatpush1.msra.mxu0 0.0
      %3584 = vmatprep.subr.mxu0 0.0
      %3585 = vmatpush1.msra.mxu0 0.0
      %3586 = vmatprep.subr.mxu0 0.0
      %3587 = vmatpush1.msra.mxu0 0.0
      %3588 = vmatprep.subr.mxu0 0.0
      %3589 = vmatpush1.msra.mxu0 0.0
      %3590 = vmatprep.subr.mxu0 0.0
      %3591 = vmatpush1.msra.mxu0 0.0
      %3592 = vmatprep.subr.mxu0 0.0
      %3593 = vmatpush1.msra.mxu0 0.0
      %3594 = vmatprep.subr.mxu0 0.0
      %3595 = vmatpush1.msra.mxu0 0.0
      %3596 = vmatprep.subr.mxu0 0.0
      %3597 = vmatpush1.msra.mxu0 0.0
      %3598 = vmatprep.mubr.f32.mxu0 %v3526
      %3599 = vmatmul.mubr.f32.gmra.mrb[0].mxu0 %v3478
      %v3600 = vpop.f32.mrb[0].mxu0
      %v3601 = vadd.f32 0.0, %v3600
      %v3602 = vpop.f32.mrb[0].mxu0
      %v3603 = vadd.f32 0.0, %v3602
      %3604 = vmatprep.mubr.f32.mxu0 %v3529
      %3605 = vmatmul.mubr.f32.gmra.mrb[0].mxu0 %v3480
      %v3606 = vpop.f32.mrb[0].mxu0
      %v3607 = vadd.f32 0.0, %v3606
      %v3608 = vpop.f32.mrb[0].mxu0
      %v3609 = vadd.f32 0.0, %v3608
      %3610 = vmatprep.mubr.f32.mxu0 %v3532
      %3611 = vmatmul.mubr.f32.gmra.mrb[0].mxu0 %v3482
      %v3612 = vpop.f32.mrb[0].mxu0
      %v3613 = vadd.f32 0.0, %v3612
      %v3614 = vpop.f32.mrb[0].mxu0
      %v3615 = vadd.f32 0.0, %v3614
      %3616 = vdwg.mxu0
      %v3617 = vadd.f32 %v3462, %v3601
      %v3618 = vadd.f32 %v3464, %v3603
      %v3619 = vadd.f32 %v3468, %v3607
      %v3620 = vadd.f32 %v3470, %v3609
      %v3621 = vadd.f32 %v3474, %v3613
      %v3622 = vadd.f32 %v3476, %v3615
      %v3623 = vld [vmem:[%s5] sm:$0x3]
      %v3625 = vlaneseq
      %v3626 = vshrl.u32 %v3625, 7
      %v3627 = vsub.s32 0, %v3626
      %v3628 = vrot.slane %v3623, %v3627
      %v3629 = vlaneseq
      %v3630 = vshrl.u32 %v3629, 7
      %v3631 = vsub.s32 1, %v3630
      %v3632 = vrot.slane %v3623, %v3631
      %v3635 = vadd.f32 %v3617, %v3628
      %v3636 = vadd.f32 %v3618, %v3632
      %v3637 = vadd.f32 %v3619, %v3628
      %v3638 = vadd.f32 %v3620, %v3632
      %v3639 = vadd.f32 %v3621, %v3628
      %v3640 = vadd.f32 %v3622, %v3632
      %v3641 = vtanh.pop %v3635
      %v3642 = vtanh.pop %v3636
      %v3643 = vtanh.pop %v3637
      %v3644 = vtanh.pop %v3638
      %v3645 = vtanh.pop %v3639
      %v3646 = vtanh.pop %v3640
      %v3647 = vld [vmem:[%s7] sm:$0x1]
      %v3648 = vld [vmem:[%s6] sm:$0xff]
      %v3649 = vld [vmem:[%s6 + $0x8] sm:$0xff]
      %v3650 = vld [vmem:[%s6 + $0x10] sm:$0xff]
      %v3651 = vld [vmem:[%s6 + $0x18] sm:$0xff]
      %v3652 = vld [vmem:[%s6 + $0x20] sm:$0xff]
      %v3653 = vld [vmem:[%s6 + $0x28] sm:$0xff]
      %v3654 = vld [vmem:[%s6 + $0x30] sm:$0xff]
      %v3655 = vld [vmem:[%s6 + $0x38] sm:$0xff]
      %v3656 = vld [vmem:[%s6 + $0x40] sm:$0xff]
      %v3657 = vld [vmem:[%s6 + $0x48] sm:$0xff]
      %v3658 = vld [vmem:[%s6 + $0x50] sm:$0xff]
      %v3659 = vld [vmem:[%s6 + $0x58] sm:$0xff]
      %v3660 = vld [vmem:[%s6 + $0x60] sm:$0xff]
      %v3661 = vld [vmem:[%s6 + $0x68] sm:$0xff]
      %v3662 = vld [vmem:[%s6 + $0x70] sm:$0xff]
      %v3663 = vld [vmem:[%s6 + $0x78] sm:$0xff]
      %v3664 = vld [vmem:[%s6 + $0x80] sm:$0xff]
      %v3665 = vld [vmem:[%s6 + $0x88] sm:$0xff]
      %v3666 = vld [vmem:[%s6 + $0x90] sm:$0xff]
      %v3667 = vld [vmem:[%s6 + $0x98] sm:$0xff]
      %v3668 = vld [vmem:[%s6 + $0xa0] sm:$0xff]
      %v3669 = vld [vmem:[%s6 + $0xa8] sm:$0xff]
      %v3670 = vld [vmem:[%s6 + $0xb0] sm:$0xff]
      %v3671 = vld [vmem:[%s6 + $0xb8] sm:$0xff]
      %vm3672 = vcmask 523264
      %v3674 = vsel %vm3672, %v3642, 0
      %3676 = vmatprep.subr.mxu0 0.0
      %3677 = vmatpush1.msra.mxu0 %v3648
      %3678 = vmatprep.subr.mxu0 0.0
      %3679 = vmatpush1.msra.mxu0 %v3649
      %3680 = vmatprep.subr.mxu0 0.0
      %3681 = vmatpush1.msra.mxu0 %v3650
      %3682 = vmatprep.subr.mxu0 0.0
      %3683 = vmatpush1.msra.mxu0 %v3651
      %3684 = vmatprep.subr.mxu0 0.0
      %3685 = vmatpush1.msra.mxu0 %v3652
      %3686 = vmatprep.subr.mxu0 0.0
      %3687 = vmatpush1.msra.mxu0 %v3653
      %3688 = vmatprep.subr.mxu0 0.0
      %3689 = vmatpush1.msra.mxu0 %v3654
      %3690 = vmatprep.subr.mxu0 0.0
      %3691 = vmatpush1.msra.mxu0 %v3655
      %3692 = vmatprep.subr.mxu0 0.0
      %3693 = vmatpush1.msra.mxu0 %v3656
      %3694 = vmatprep.subr.mxu0 0.0
      %3695 = vmatpush1.msra.mxu0 %v3657
      %3696 = vmatprep.subr.mxu0 0.0
      %3697 = vmatpush1.msra.mxu0 %v3658
      %3698 = vmatprep.subr.mxu0 0.0
      %3699 = vmatpush1.msra.mxu0 %v3659
      %3700 = vmatprep.subr.mxu0 0.0
      %3701 = vmatpush1.msra.mxu0 %v3660
      %3702 = vmatprep.subr.mxu0 0.0
      %3703 = vmatpush1.msra.mxu0 %v3661
      %3704 = vmatprep.subr.mxu0 0.0
      %3705 = vmatpush1.msra.mxu0 %v3662
      %3706 = vmatprep.subr.mxu0 0.0
      %3707 = vmatpush1.msra.mxu0 %v3663
      %3708 = vmatprep.subr.mxu0 0.0
      %3709 = vmatpush1.msra.mxu0 %v3664
      %3710 = vmatprep.subr.mxu0 0.0
      %3711 = vmatpush1.msra.mxu0 %v3665
      %3712 = vmatprep.subr.mxu0 0.0
      %3713 = vmatpush1.msra.mxu0 %v3666
      %3714 = vmatprep.subr.mxu0 0.0
      %3715 = vmatpush1.msra.mxu0 %v3667
      %3716 = vmatprep.subr.mxu0 0.0
      %3717 = vmatpush1.msra.mxu0 %v3668
      %3718 = vmatprep.subr.mxu0 0.0
      %3719 = vmatpush1.msra.mxu0 %v3669
      %3720 = vmatprep.subr.mxu0 0.0
      %3721 = vmatpush1.msra.mxu0 %v3670
      %3722 = vmatprep.subr.mxu0 0.0
      %3723 = vmatpush1.msra.mxu0 %v3671
      %3724 = vmatprep.subr.mxu0 0.0
      %3725 = vmatpush1.msra.mxu0 0.0
      %3726 = vmatprep.subr.mxu0 0.0
      %3727 = vmatpush1.msra.mxu0 0.0
      %3728 = vmatprep.subr.mxu0 0.0
      %3729 = vmatpush1.msra.mxu0 0.0
      %3730 = vmatprep.subr.mxu0 0.0
      %3731 = vmatpush1.msra.mxu0 0.0
      %3732 = vmatprep.subr.mxu0 0.0
      %3733 = vmatpush1.msra.mxu0 0.0
      %3734 = vmatprep.subr.mxu0 0.0
      %3735 = vmatpush1.msra.mxu0 0.0
      %3736 = vmatprep.subr.mxu0 0.0
      %3737 = vmatpush1.msra.mxu0 0.0
      %3738 = vmatprep.subr.mxu0 0.0
      %3739 = vmatpush1.msra.mxu0 0.0
      %3740 = vmatprep.mubr.f32.mxu0 %v3674
      %3741 = vmatmul.mubr.f32.gmra.mrb[0].mxu0 %v3641
      %v3742 = vpop.f32.mrb[0].mxu0
      %v3743 = vadd.f32 0.0, %v3742
      %v3744 = vpop.f32.mrb[0].mxu0
      %3745 = vdwg.mxu0
      %v3747 = vlaneseq
      %v3748 = vshrl.u32 %v3747, 7
      %v3749 = vsub.s32 0, %v3748
      %v3750 = vrot.slane %v3647, %v3749
      %v3752 = vadd.f32 %v3750, %v3743
      %s3753 = scalar_lea.vmem %s6, 192
      %v3754 = vld [vmem:[%s3753] sm:$0xff]
      %v3755 = vld [vmem:[%s3753 + $0x8] sm:$0xff]
      %v3756 = vld [vmem:[%s3753 + $0x10] sm:$0xff]
      %v3757 = vld [vmem:[%s3753 + $0x18] sm:$0xff]
      %v3758 = vld [vmem:[%s3753 + $0x20] sm:$0xff]
      %v3759 = vld [vmem:[%s3753 + $0x28] sm:$0xff]
      %v3760 = vld [vmem:[%s3753 + $0x30] sm:$0xff]
      %v3761 = vld [vmem:[%s3753 + $0x38] sm:$0xff]
      %v3762 = vld [vmem:[%s3753 + $0x40] sm:$0xff]
      %v3763 = vld [vmem:[%s3753 + $0x48] sm:$0xff]
      %v3764 = vld [vmem:[%s3753 + $0x50] sm:$0xff]
      %v3765 = vld [vmem:[%s3753 + $0x58] sm:$0xff]
      %v3766 = vld [vmem:[%s3753 + $0x60] sm:$0xff]
      %v3767 = vld [vmem:[%s3753 + $0x68] sm:$0xff]
      %v3768 = vld [vmem:[%s3753 + $0x70] sm:$0xff]
      %v3769 = vld [vmem:[%s3753 + $0x78] sm:$0xff]
      %v3770 = vld [vmem:[%s3753 + $0x80] sm:$0xff]
      %v3771 = vld [vmem:[%s3753 + $0x88] sm:$0xff]
      %v3772 = vld [vmem:[%s3753 + $0x90] sm:$0xff]
      %v3773 = vld [vmem:[%s3753 + $0x98] sm:$0xff]
      %v3774 = vld [vmem:[%s3753 + $0xa0] sm:$0xff]
      %v3775 = vld [vmem:[%s3753 + $0xa8] sm:$0xff]
      %v3776 = vld [vmem:[%s3753 + $0xb0] sm:$0xff]
      %v3777 = vld [vmem:[%s3753 + $0xb8] sm:$0xff]
      %v3779 = vsel %vm3672, %v3644, 0
      %3781 = vmatprep.subr.mxu0 0.0
      %3782 = vmatpush1.msra.mxu0 %v3754
      %3783 = vmatprep.subr.mxu0 0.0
      %3784 = vmatpush1.msra.mxu0 %v3755
      %3785 = vmatprep.subr.mxu0 0.0
      %3786 = vmatpush1.msra.mxu0 %v3756
      %3787 = vmatprep.subr.mxu0 0.0
      %3788 = vmatpush1.msra.mxu0 %v3757
      %3789 = vmatprep.subr.mxu0 0.0
      %3790 = vmatpush1.msra.mxu0 %v3758
      %3791 = vmatprep.subr.mxu0 0.0
      %3792 = vmatpush1.msra.mxu0 %v3759
      %3793 = vmatprep.subr.mxu0 0.0
      %3794 = vmatpush1.msra.mxu0 %v3760
      %3795 = vmatprep.subr.mxu0 0.0
      %3796 = vmatpush1.msra.mxu0 %v3761
      %3797 = vmatprep.subr.mxu0 0.0
      %3798 = vmatpush1.msra.mxu0 %v3762
      %3799 = vmatprep.subr.mxu0 0.0
      %3800 = vmatpush1.msra.mxu0 %v3763
      %3801 = vmatprep.subr.mxu0 0.0
      %3802 = vmatpush1.msra.mxu0 %v3764
      %3803 = vmatprep.subr.mxu0 0.0
      %3804 = vmatpush1.msra.mxu0 %v3765
      %3805 = vmatprep.subr.mxu0 0.0
      %3806 = vmatpush1.msra.mxu0 %v3766
      %3807 = vmatprep.subr.mxu0 0.0
      %3808 = vmatpush1.msra.mxu0 %v3767
      %3809 = vmatprep.subr.mxu0 0.0
      %3810 = vmatpush1.msra.mxu0 %v3768
      %3811 = vmatprep.subr.mxu0 0.0
      %3812 = vmatpush1.msra.mxu0 %v3769
      %3813 = vmatprep.subr.mxu0 0.0
      %3814 = vmatpush1.msra.mxu0 %v3770
      %3815 = vmatprep.subr.mxu0 0.0
      %3816 = vmatpush1.msra.mxu0 %v3771
      %3817 = vmatprep.subr.mxu0 0.0
      %3818 = vmatpush1.msra.mxu0 %v3772
      %3819 = vmatprep.subr.mxu0 0.0
      %3820 = vmatpush1.msra.mxu0 %v3773
      %3821 = vmatprep.subr.mxu0 0.0
      %3822 = vmatpush1.msra.mxu0 %v3774
      %3823 = vmatprep.subr.mxu0 0.0
      %3824 = vmatpush1.msra.mxu0 %v3775
      %3825 = vmatprep.subr.mxu0 0.0
      %3826 = vmatpush1.msra.mxu0 %v3776
      %3827 = vmatprep.subr.mxu0 0.0
      %3828 = vmatpush1.msra.mxu0 %v3777
      %3829 = vmatprep.subr.mxu0 0.0
      %3830 = vmatpush1.msra.mxu0 0.0
      %3831 = vmatprep.subr.mxu0 0.0
      %3832 = vmatpush1.msra.mxu0 0.0
      %3833 = vmatprep.subr.mxu0 0.0
      %3834 = vmatpush1.msra.mxu0 0.0
      %3835 = vmatprep.subr.mxu0 0.0
      %3836 = vmatpush1.msra.mxu0 0.0
      %3837 = vmatprep.subr.mxu0 0.0
      %3838 = vmatpush1.msra.mxu0 0.0
      %3839 = vmatprep.subr.mxu0 0.0
      %3840 = vmatpush1.msra.mxu0 0.0
      %3841 = vmatprep.subr.mxu0 0.0
      %3842 = vmatpush1.msra.mxu0 0.0
      %3843 = vmatprep.subr.mxu0 0.0
      %3844 = vmatpush1.msra.mxu0 0.0
      %3845 = vmatprep.mubr.f32.mxu0 %v3779
      %3846 = vmatmul.mubr.f32.gmra.mrb[0].mxu0 %v3643
      %v3847 = vpop.f32.mrb[0].mxu0
      %v3848 = vadd.f32 0.0, %v3847
      %v3849 = vpop.f32.mrb[0].mxu0
      %3850 = vdwg.mxu0
      %v3851 = vadd.f32 %v3752, %v3848
      %s3852 = scalar_lea.vmem %s6, 384
      %v3853 = vld [vmem:[%s3852] sm:$0xff]
      %v3854 = vld [vmem:[%s3852 + $0x8] sm:$0xff]
      %v3855 = vld [vmem:[%s3852 + $0x10] sm:$0xff]
      %v3856 = vld [vmem:[%s3852 + $0x18] sm:$0xff]
      %v3857 = vld [vmem:[%s3852 + $0x20] sm:$0xff]
      %v3858 = vld [vmem:[%s3852 + $0x28] sm:$0xff]
      %v3859 = vld [vmem:[%s3852 + $0x30] sm:$0xff]
      %v3860 = vld [vmem:[%s3852 + $0x38] sm:$0xff]
      %v3861 = vld [vmem:[%s3852 + $0x40] sm:$0xff]
      %v3862 = vld [vmem:[%s3852 + $0x48] sm:$0xff]
      %v3863 = vld [vmem:[%s3852 + $0x50] sm:$0xff]
      %v3864 = vld [vmem:[%s3852 + $0x58] sm:$0xff]
      %v3865 = vld [vmem:[%s3852 + $0x60] sm:$0xff]
      %v3866 = vld [vmem:[%s3852 + $0x68] sm:$0xff]
      %v3867 = vld [vmem:[%s3852 + $0x70] sm:$0xff]
      %v3868 = vld [vmem:[%s3852 + $0x78] sm:$0xff]
      %v3869 = vld [vmem:[%s3852 + $0x80] sm:$0xff]
      %v3870 = vld [vmem:[%s3852 + $0x88] sm:$0xff]
      %v3871 = vld [vmem:[%s3852 + $0x90] sm:$0xff]
      %v3872 = vld [vmem:[%s3852 + $0x98] sm:$0xff]
      %v3873 = vld [vmem:[%s3852 + $0xa0] sm:$0xff]
      %v3874 = vld [vmem:[%s3852 + $0xa8] sm:$0xff]
      %v3875 = vld [vmem:[%s3852 + $0xb0] sm:$0xff]
      %v3876 = vld [vmem:[%s3852 + $0xb8] sm:$0xff]
      %v3878 = vsel %vm3672, %v3646, 0
      %3880 = vmatprep.subr.mxu0 0.0
      %3881 = vmatpush1.msra.mxu0 %v3853
      %3882 = vmatprep.subr.mxu0 0.0
      %3883 = vmatpush1.msra.mxu0 %v3854
      %3884 = vmatprep.subr.mxu0 0.0
      %3885 = vmatpush1.msra.mxu0 %v3855
      %3886 = vmatprep.subr.mxu0 0.0
      %3887 = vmatpush1.msra.mxu0 %v3856
      %3888 = vmatprep.subr.mxu0 0.0
      %3889 = vmatpush1.msra.mxu0 %v3857
      %3890 = vmatprep.subr.mxu0 0.0
      %3891 = vmatpush1.msra.mxu0 %v3858
      %3892 = vmatprep.subr.mxu0 0.0
      %3893 = vmatpush1.msra.mxu0 %v3859
      %3894 = vmatprep.subr.mxu0 0.0
      %3895 = vmatpush1.msra.mxu0 %v3860
      %3896 = vmatprep.subr.mxu0 0.0
      %3897 = vmatpush1.msra.mxu0 %v3861
      %3898 = vmatprep.subr.mxu0 0.0
      %3899 = vmatpush1.msra.mxu0 %v3862
      %3900 = vmatprep.subr.mxu0 0.0
      %3901 = vmatpush1.msra.mxu0 %v3863
      %3902 = vmatprep.subr.mxu0 0.0
      %3903 = vmatpush1.msra.mxu0 %v3864
      %3904 = vmatprep.subr.mxu0 0.0
      %3905 = vmatpush1.msra.mxu0 %v3865
      %3906 = vmatprep.subr.mxu0 0.0
      %3907 = vmatpush1.msra.mxu0 %v3866
      %3908 = vmatprep.subr.mxu0 0.0
      %3909 = vmatpush1.msra.mxu0 %v3867
      %3910 = vmatprep.subr.mxu0 0.0
      %3911 = vmatpush1.msra.mxu0 %v3868
      %3912 = vmatprep.subr.mxu0 0.0
      %3913 = vmatpush1.msra.mxu0 %v3869
      %3914 = vmatprep.subr.mxu0 0.0
      %3915 = vmatpush1.msra.mxu0 %v3870
      %3916 = vmatprep.subr.mxu0 0.0
      %3917 = vmatpush1.msra.mxu0 %v3871
      %3918 = vmatprep.subr.mxu0 0.0
      %3919 = vmatpush1.msra.mxu0 %v3872
      %3920 = vmatprep.subr.mxu0 0.0
      %3921 = vmatpush1.msra.mxu0 %v3873
      %3922 = vmatprep.subr.mxu0 0.0
      %3923 = vmatpush1.msra.mxu0 %v3874
      %3924 = vmatprep.subr.mxu0 0.0
      %3925 = vmatpush1.msra.mxu0 %v3875
      %3926 = vmatprep.subr.mxu0 0.0
      %3927 = vmatpush1.msra.mxu0 %v3876
      %3928 = vmatprep.subr.mxu0 0.0
      %3929 = vmatpush1.msra.mxu0 0.0
      %3930 = vmatprep.subr.mxu0 0.0
      %3931 = vmatpush1.msra.mxu0 0.0
      %3932 = vmatprep.subr.mxu0 0.0
      %3933 = vmatpush1.msra.mxu0 0.0
      %3934 = vmatprep.subr.mxu0 0.0
      %3935 = vmatpush1.msra.mxu0 0.0
      %3936 = vmatprep.subr.mxu0 0.0
      %3937 = vmatpush1.msra.mxu0 0.0
      %3938 = vmatprep.subr.mxu0 0.0
      %3939 = vmatpush1.msra.mxu0 0.0
      %3940 = vmatprep.subr.mxu0 0.0
      %3941 = vmatpush1.msra.mxu0 0.0
      %3942 = vmatprep.subr.mxu0 0.0
      %3943 = vmatpush1.msra.mxu0 0.0
      %3944 = vmatprep.mubr.f32.mxu0 %v3878
      %3945 = vmatmul.mubr.f32.gmra.mrb[0].mxu0 %v3645
      %v3946 = vpop.f32.mrb[0].mxu0
      %v3947 = vadd.f32 0.0, %v3946
      %v3948 = vpop.f32.mrb[0].mxu0
      %3949 = vdwg.mxu0
      %v3950 = vadd.f32 %v3851, %v3947
      %v3951 = vtanh.pop %v3950
      %v3952 = vld [vmem:[%s8] sm:$0xff]
      %v3953 = vld [vmem:[%s8 + $0x8] sm:$0xff]
      %v3954 = vld [vmem:[%s8 + $0x10] sm:$0xff]
      %v3955 = vld [vmem:[%s8 + $0x18] sm:$0xff]
      %v3956 = vld [vmem:[%s8 + $0x20] sm:$0xff]
      %v3957 = vld [vmem:[%s8 + $0x28] sm:$0xff]
      %v3958 = vld [vmem:[%s8 + $0x30] sm:$0xff]
      %v3959 = vld [vmem:[%s8 + $0x38] sm:$0xff]
      %v3960 = vld [vmem:[%s8 + $0x40] sm:$0xff]
      %v3961 = vld [vmem:[%s8 + $0x48] sm:$0xff]
      %v3962 = vld [vmem:[%s8 + $0x50] sm:$0xff]
      %v3963 = vld [vmem:[%s8 + $0x58] sm:$0xff]
      %v3964 = vld [vmem:[%s8 + $0x60] sm:$0xff]
      %v3965 = vld [vmem:[%s8 + $0x68] sm:$0xff]
      %v3966 = vld [vmem:[%s8 + $0x70] sm:$0xff]
      %v3967 = vld [vmem:[%s8 + $0x78] sm:$0xff]
      %v3968 = vld [vmem:[%s9] sm:$0x1]
      %v3970 = vlaneseq
      %v3971 = vshrl.u32 %v3970, 7
      %v3972 = vsub.s32 0, %v3971
      %v3973 = vrot.slane %v3968, %v3972
      %3975 = vmatprep.subr.mxu0 0.0
      %3976 = vmatpush1.msra.mxu0 %v3952
      %3977 = vmatprep.subr.mxu0 0.0
      %3978 = vmatpush1.msra.mxu0 %v3953
      %3979 = vmatprep.subr.mxu0 0.0
      %3980 = vmatpush1.msra.mxu0 %v3954
      %3981 = vmatprep.subr.mxu0 0.0
      %3982 = vmatpush1.msra.mxu0 %v3955
      %3983 = vmatprep.subr.mxu0 0.0
      %3984 = vmatpush1.msra.mxu0 %v3956
      %3985 = vmatprep.subr.mxu0 0.0
      %3986 = vmatpush1.msra.mxu0 %v3957
      %3987 = vmatprep.subr.mxu0 0.0
      %3988 = vmatpush1.msra.mxu0 %v3958
      %3989 = vmatprep.subr.mxu0 0.0
      %3990 = vmatpush1.msra.mxu0 %v3959
      %3991 = vmatprep.subr.mxu0 0.0
      %3992 = vmatpush1.msra.mxu0 %v3960
      %3993 = vmatprep.subr.mxu0 0.0
      %3994 = vmatpush1.msra.mxu0 %v3961
      %3995 = vmatprep.subr.mxu0 0.0
      %3996 = vmatpush1.msra.mxu0 %v3962
      %3997 = vmatprep.subr.mxu0 0.0
      %3998 = vmatpush1.msra.mxu0 %v3963
      %3999 = vmatprep.subr.mxu0 0.0
      %4000 = vmatpush1.msra.mxu0 %v3964
      %4001 = vmatprep.subr.mxu0 0.0
      %4002 = vmatpush1.msra.mxu0 %v3965
      %4003 = vmatprep.subr.mxu0 0.0
      %4004 = vmatpush1.msra.mxu0 %v3966
      %4005 = vmatprep.subr.mxu0 0.0
      %4006 = vmatpush1.msra.mxu0 %v3967
      %4007 = vmatprep.subr.mxu0 0.0
      %4008 = vmatpush1.msra.mxu0 0.0
      %4009 = vmatprep.subr.mxu0 0.0
      %4010 = vmatpush1.msra.mxu0 0.0
      %4011 = vmatprep.subr.mxu0 0.0
      %4012 = vmatpush1.msra.mxu0 0.0
      %4013 = vmatprep.subr.mxu0 0.0
      %4014 = vmatpush1.msra.mxu0 0.0
      %4015 = vmatprep.subr.mxu0 0.0
      %4016 = vmatpush1.msra.mxu0 0.0
      %4017 = vmatprep.subr.mxu0 0.0
      %4018 = vmatpush1.msra.mxu0 0.0
      %4019 = vmatprep.subr.mxu0 0.0
      %4020 = vmatpush1.msra.mxu0 0.0
      %4021 = vmatprep.subr.mxu0 0.0
      %4022 = vmatpush1.msra.mxu0 0.0
      %4023 = vmatprep.subr.mxu0 0.0
      %4024 = vmatpush1.msra.mxu0 0.0
      %4025 = vmatprep.subr.mxu0 0.0
      %4026 = vmatpush1.msra.mxu0 0.0
      %4027 = vmatprep.subr.mxu0 0.0
      %4028 = vmatpush1.msra.mxu0 0.0
      %4029 = vmatprep.subr.mxu0 0.0
      %4030 = vmatpush1.msra.mxu0 0.0
      %4031 = vmatprep.subr.mxu0 0.0
      %4032 = vmatpush1.msra.mxu0 0.0
      %4033 = vmatprep.subr.mxu0 0.0
      %4034 = vmatpush1.msra.mxu0 0.0
      %4035 = vmatprep.subr.mxu0 0.0
      %4036 = vmatpush1.msra.mxu0 0.0
      %4037 = vmatprep.subr.mxu0 0.0
      %4038 = vmatpush1.msra.mxu0 0.0
      %4039 = vmatprep.mubr.f32.mxu0 0.0
      %4040 = vmatmul.mubr.f32.gmra.mrb[0].mxu0 %v3951
      %v4041 = vpop.f32.mrb[0].mxu0
      %v4042 = vadd.f32 %v3973, %v4041
      %v4043 = vpop.f32.mrb[0].mxu0
      %4044 = vdwg.mxu0
      %v4045 = vtanh.pop %v4042
      %v4046 = vld [vmem:[%s10] sm:$0xff]
      %v4047 = vld [vmem:[%s10 + $0x8] sm:$0xff]
      %v4048 = vld [vmem:[%s10 + $0x10] sm:$0xff]
      %v4049 = vld [vmem:[%s10 + $0x18] sm:$0xff]
      %v4050 = vld [vmem:[%s10 + $0x20] sm:$0xff]
      %v4051 = vld [vmem:[%s10 + $0x28] sm:$0xff]
      %v4052 = vld [vmem:[%s10 + $0x30] sm:$0xff]
      %v4053 = vld [vmem:[%s10 + $0x38] sm:$0xff]
      %v4054 = vld [vmem:[%s10 + $0x40] sm:$0xff]
      %v4055 = vld [vmem:[%s10 + $0x48] sm:$0xff]
      %v4056 = vld [vmem:[%s10 + $0x50] sm:$0xff]
      %v4057 = vld [vmem:[%s10 + $0x58] sm:$0xff]
      %v4058 = vld [vmem:[%s10 + $0x60] sm:$0xff]
      %v4059 = vld [vmem:[%s10 + $0x68] sm:$0xff]
      %v4060 = vld [vmem:[%s10 + $0x70] sm:$0xff]
      %v4061 = vld [vmem:[%s10 + $0x78] sm:$0xff]
      %v4062 = vld [vmem:[%s11] sm:$0x1]
      %v4064 = vlaneseq
      %v4065 = vshrl.u32 %v4064, 7
      %v4066 = vsub.s32 0, %v4065
      %v4067 = vrot.slane %v4062, %v4066
      %4069 = vmatprep.subr.mxu0 0.0
      %4070 = vmatpush1.msra.mxu0 %v4046
      %4071 = vmatprep.subr.mxu0 0.0
      %4072 = vmatpush1.msra.mxu0 %v4047
      %4073 = vmatprep.subr.mxu0 0.0
      %4074 = vmatpush1.msra.mxu0 %v4048
      %4075 = vmatprep.subr.mxu0 0.0
      %4076 = vmatpush1.msra.mxu0 %v4049
      %4077 = vmatprep.subr.mxu0 0.0
      %4078 = vmatpush1.msra.mxu0 %v4050
      %4079 = vmatprep.subr.mxu0 0.0
      %4080 = vmatpush1.msra.mxu0 %v4051
      %4081 = vmatprep.subr.mxu0 0.0
      %4082 = vmatpush1.msra.mxu0 %v4052
      %4083 = vmatprep.subr.mxu0 0.0
      %4084 = vmatpush1.msra.mxu0 %v4053
      %4085 = vmatprep.subr.mxu0 0.0
      %4086 = vmatpush1.msra.mxu0 %v4054
      %4087 = vmatprep.subr.mxu0 0.0
      %4088 = vmatpush1.msra.mxu0 %v4055
      %4089 = vmatprep.subr.mxu0 0.0
      %4090 = vmatpush1.msra.mxu0 %v4056
      %4091 = vmatprep.subr.mxu0 0.0
      %4092 = vmatpush1.msra.mxu0 %v4057
      %4093 = vmatprep.subr.mxu0 0.0
      %4094 = vmatpush1.msra.mxu0 %v4058
      %4095 = vmatprep.subr.mxu0 0.0
      %4096 = vmatpush1.msra.mxu0 %v4059
      %4097 = vmatprep.subr.mxu0 0.0
      %4098 = vmatpush1.msra.mxu0 %v4060
      %4099 = vmatprep.subr.mxu0 0.0
      %4100 = vmatpush1.msra.mxu0 %v4061
      %4101 = vmatprep.subr.mxu0 0.0
      %4102 = vmatpush1.msra.mxu0 0.0
      %4103 = vmatprep.subr.mxu0 0.0
      %4104 = vmatpush1.msra.mxu0 0.0
      %4105 = vmatprep.subr.mxu0 0.0
      %4106 = vmatpush1.msra.mxu0 0.0
      %4107 = vmatprep.subr.mxu0 0.0
      %4108 = vmatpush1.msra.mxu0 0.0
      %4109 = vmatprep.subr.mxu0 0.0
      %4110 = vmatpush1.msra.mxu0 0.0
      %4111 = vmatprep.subr.mxu0 0.0
      %4112 = vmatpush1.msra.mxu0 0.0
      %4113 = vmatprep.subr.mxu0 0.0
      %4114 = vmatpush1.msra.mxu0 0.0
      %4115 = vmatprep.subr.mxu0 0.0
      %4116 = vmatpush1.msra.mxu0 0.0
      %4117 = vmatprep.subr.mxu0 0.0
      %4118 = vmatpush1.msra.mxu0 0.0
      %4119 = vmatprep.subr.mxu0 0.0
      %4120 = vmatpush1.msra.mxu0 0.0
      %4121 = vmatprep.subr.mxu0 0.0
      %4122 = vmatpush1.msra.mxu0 0.0
      %4123 = vmatprep.subr.mxu0 0.0
      %4124 = vmatpush1.msra.mxu0 0.0
      %4125 = vmatprep.subr.mxu0 0.0
      %4126 = vmatpush1.msra.mxu0 0.0
      %4127 = vmatprep.subr.mxu0 0.0
      %4128 = vmatpush1.msra.mxu0 0.0
      %4129 = vmatprep.subr.mxu0 0.0
      %4130 = vmatpush1.msra.mxu0 0.0
      %4131 = vmatprep.subr.mxu0 0.0
      %4132 = vmatpush1.msra.mxu0 0.0
      %4133 = vmatprep.mubr.f32.mxu0 0.0
      %4134 = vmatmul.mubr.f32.gmra.mrb[0].mxu0 %v4045
      %v4135 = vpop.f32.mrb[0].mxu0
      %v4136 = vadd.f32 %v4067, %v4135
      %v4137 = vpop.f32.mrb[0].mxu0
      %4138 = vdwg.mxu0
      %v4139 = vtanh.pop %v4136
      %4140 = vst [vmem:[%s438] sm:$0xff] %v4139
      %p4141 = scmp.lt.s32.totalorder %s24, 1
      %s4142 = scalar_select %p4141, %s24, 1
      %s4143 = smul.addr %s4142, 8
      %s4144 = scalar_lea.vmem %s13, %s4143
      // Predicated region
      $region73: #{forward.2} parent=71 // pred_check
        %p4145 = pneg %p320
      $region74: #{forward.2} parent=71 // pred_check_branch
        %4147 = sbr.rel (%p4145) target = $region76
      $region75: #{forward.2} parent=71 // pred_region
        _
      $region76: #{forward.2} parent=71 // pred_fallthru
        _
    $region72: #{forward.2} parent=5 // pred_fallthru
      _
    %p4148 = scmp.le.s32.totalorder 2, %s19
    // Predicated region
    $region77: #{forward.2} parent=5 // pred_check
      %p4149 = pneg %p4148
    $region78: #{forward.2} parent=5 // pred_check_branch
      %4151 = sbr.rel (%p4149) target = $region80
    $region79: #{forward.2} parent=5 // pred_region
      %s4152 = ssub.s32 %s19, 2
      // Predicated region
      $region81: #{forward.2} parent=79 // pred_check
        %p4153 = pneg %p326
      $region82: #{forward.2} parent=79 // pred_check_branch
        %4155 = sbr.rel (%p4153) target = $region84
      $region83: #{forward.2} parent=79 // pred_region
        %p4156 = scmp.lt.s32.totalorder %s25, 1
        %s4157 = scalar_select %p4156, %s25, 1
        %s4158 = smul.addr %s4157, 8
        %s4159 = scalar_lea.vmem %s13, %s4158
      $region84: #{forward.2} parent=79 // pred_fallthru
        _
    $region80: #{forward.2} parent=5 // pred_fallthru
      _
  $region6: #{forward.2} parent=0 // loop_footer
    %s23 = sadd.s32 1, %s19
  $region7: #{forward.2} parent=0 // loop_footer_branch
    %18 = sbr.rel target = $region3
  $region8: #{forward.2} parent=0 // loop_exit
    _

</llo_original>
